<compile_context>
chip_gen: v7x
topology: tpu7x:2x2x1
jax: 0.10.0
libtpu: 0.0.40
codegen_flags: <defaults>
</compile_context>

<pallas_src>
import functools

import jax
import jax.numpy as jnp
from jax.experimental import pallas as pl
from jax.experimental.pallas import tpu as pltpu

BN_EPS = 1e-5


def _vmem_limit_bytes() -> int:
    """Generation-aware scoped-VMEM limit with a safe fallback."""
    try:
        cap = int(pltpu.get_tpu_info().vmem_capacity_bytes)
        # v5e/v6e (128 MiB physical) -> 96 MiB, v7x (64 MiB) -> 48 MiB.
        return max(32 * 1024 * 1024, min(3 * cap // 4, 96 * 1024 * 1024))
    except Exception:
        return 32 * 1024 * 1024


def _pick_rows_per_band(h, w, c_max, elt_bytes, vmem_limit):
    """Rows per spatial band; a band is th*w flattened pixels on the lane axis.

    Legal th: divides h AND (th*w is a multiple of 128 OR th == h), so every
    BlockSpec last dim is either lane-aligned or the full axis.  Pick the
    largest legal th whose rough per-step working set fits ~half the budget.
    """
    legal = [th for th in range(1, h + 1)
             if h % th == 0 and ((th * w) % 128 == 0 or th == h)]

    def per_step_bytes(th):
        tsp = th * w
        return 48 * c_max * tsp + 40 * c_max * c_max * elt_bytes

    budget = vmem_limit // 2
    fitting = [th for th in legal if per_step_bytes(th) <= budget]
    # TODO(synk): images where no divisor of H gives a 128-multiple band fall
    # back to whole-image bands; pad W to a lane-friendly size for those.
    return max(fitting) if fitting else min(legal)


# --------------------------- kernels ----------------------------------------

def _conv1x1_stats_kernel(x_ref, w_ref, z_ref, ps_ref, pq_ref, *,
                          compute_dtype):
    # x_ref: (1, Cin, T)   w_ref: (Ch, Cin)
    x = x_ref[0].astype(compute_dtype)
    z = jnp.dot(w_ref[...], x, preferred_element_type=jnp.float32)  # (Ch, T) f32
    z_ref[0] = z.astype(z_ref.dtype)                 # bf16 store AFTER stats
    # lane-dense partial BN statistics (channels on lanes)
    ps_ref[0, 0] = jnp.sum(z, axis=1)[None, :]
    pq_ref[0, 0] = jnp.sum(z * z, axis=1)[None, :]


def _bnrelu_conv3x3_stats_kernel(zc_ref, zp_ref, zn_ref, w_ref, sc_ref, sh_ref,
                                 cm_ref, o_ref, ps_ref, pq_ref, *,
                                 img_w, compute_dtype):
    # zc/zp/zn_ref: (1, Ch, T) current / previous / next row band of z1
    # w_ref: (9, Ch, Ch) tap-major 3x3 weights, cm_ref: (4, T) constant masks
    f32 = jnp.float32
    t = pl.program_id(1)
    n_t = pl.num_programs(1)
    sc = sc_ref[...]
    sh = sh_ref[...]
    cm = cm_ref[...]
    mask_l, mask_r = cm[0:1, :], cm[1:2, :]          # 0 at x==0 / x==W-1
    m_last, m_first = cm[2:3, :], cm[3:4, :]         # 1 on last / first band row

    def bn_relu(v):                                  # elementwise kept in f32
        return jnp.maximum(v.astype(f32) * sc + sh, 0.0)

    cen = bn_relu(zc_ref[0])                         # (Ch, T)
    tsp = cen.shape[1]
    top_valid = (t > 0).astype(f32)
    bot_valid = (t < n_t - 1).astype(f32)
    # Splice the halo row into the (never-read) opposite edge row of the band.
    # Zero padding == zeros AFTER BN+ReLU, so invalid halos are exactly 0.
    comb_top = cen * (1.0 - m_last) + bn_relu(zp_ref[0]) * (m_last * top_valid)
    comb_bot = cen * (1.0 - m_first) + bn_relu(zn_ref[0]) * (m_first * bot_valid)
    planes = {-1: comb_top, 0: cen, 1: comb_bot}

    acc = None
    tap = 0
    for dy in (-1, 0, 1):
        src = planes[dy]
        for dx in (-1, 0, 1):
            k = (-(dy * img_w + dx)) % tsp           # lane p <- src[p + d]
            s = pltpu.roll(src, shift=k, axis=1) if k else src
            if dx == -1:
                s = s * mask_l
            elif dx == 1:
                s = s * mask_r
            c = jnp.dot(w_ref[tap], s.astype(compute_dtype),
                        preferred_element_type=jnp.float32)
            acc = c if acc is None else acc + c
            tap += 1

    o_ref[0] = acc.astype(o_ref.dtype)
    ps_ref[0, 0] = jnp.sum(acc, axis=1)[None, :]
    pq_ref[0, 0] = jnp.sum(acc * acc, axis=1)[None, :]


def _bnrelu_conv1x1_stats_kernel(z_ref, w_ref, sc_ref, sh_ref, o_ref,
                                 ps_ref, pq_ref, *, compute_dtype):
    h = jnp.maximum(z_ref[0].astype(jnp.float32) * sc_ref[...] + sh_ref[...],
                    0.0)
    z = jnp.dot(w_ref[...], h.astype(compute_dtype),
                preferred_element_type=jnp.float32)
    o_ref[0] = z.astype(o_ref.dtype)
    ps_ref[0, 0] = jnp.sum(z, axis=1)[None, :]
    pq_ref[0, 0] = jnp.sum(z * z, axis=1)[None, :]


def _bn_residual_relu_kernel(z_ref, x_ref, sc_ref, sh_ref, o_ref):
    bn = z_ref[0].astype(jnp.float32) * sc_ref[...] + sh_ref[...]
    o_ref[0] = jnp.maximum(bn + x_ref[0], 0.0)


# --------------------------- wrapper -----------------------------------------

def _bn_scale_shift(psum, psq, gamma, beta, count):
    """Reduce lane-dense partial stats -> fused BN scale/shift ([C, 1], f32)."""
    s = jnp.sum(psum, axis=(0, 1, 2))                # [C]
    q = jnp.sum(psq, axis=(0, 1, 2))
    mean = s / count
    var = jnp.maximum(q / count - mean * mean, 0.0)  # biased (train-mode) var
    scale = gamma * jax.lax.rsqrt(var + BN_EPS)
    shift = beta - mean * scale
    return scale[:, None], shift[:, None]


def resblock2d_forward(x_nchw, params, *, compute_dtype=jnp.bfloat16,
                       rows_per_band=None):
    """x_nchw: [B, Cin, H, W] f32 -> {'feats': [B, Cout, H, W]} (train-mode BN)."""
    (w1, w2, w3, g1, b1, g2, b2, g3, b3) = params
    B, Cin, H, W = x_nchw.shape
    Ch = w1.shape[0]
    Cout = w3.shape[0]
    assert Cin == Cout, "residual add needs inp_dim == out_dim (no downsample)"
    HW = H * W
    f32 = jnp.float32
    store_dtype = jnp.dtype(compute_dtype)           # bf16 intermediates default
    es = store_dtype.itemsize

    vmem_limit = _vmem_limit_bytes()
    c_max = max(Cin, Ch, Cout)
    if rows_per_band is None:
        th = _pick_rows_per_band(H, W, c_max, es, vmem_limit)
    else:
        th = int(rows_per_band)
        assert H % th == 0 and ((th * W) % 128 == 0 or th == H), (
            "rows_per_band must divide H and give a lane-aligned band")
    tsp = th * W                                      # flattened pixels per band
    n_t = HW // tsp
    npix = B * HW

    x3 = x_nchw.reshape(B, Cin, HW).astype(f32)       # channel-major, free reshape

    # matmul-ready conv weights (bf16 operands by default)
    w1m = w1.reshape(Ch, Cin).astype(compute_dtype)
    # [O, I, 3, 3] -> [3, 3, O, I] -> [9, O, I]  (tap-major per-tap matmuls)
    w2t = jnp.transpose(w2, (2, 3, 0, 1)).reshape(9, Ch, Ch).astype(compute_dtype)
    w3m = w3.reshape(Cout, Ch).astype(compute_dtype)

    # constant per-band masks, built once in the wrapper (no in-kernel idiv):
    #   0: 0 at x==0   1: 0 at x==W-1   2: 1 on last band row   3: 1 on first
    col = jnp.arange(tsp, dtype=jnp.int32) % W
    row = jnp.arange(tsp, dtype=jnp.int32) // W
    colmask = jnp.stack([(col != 0), (col != W - 1),
                         (row == th - 1), (row == 0)]).astype(f32)   # (4, T)

    cp = pltpu.CompilerParams(dimension_semantics=("parallel", "parallel"),
                              vmem_limit_bytes=vmem_limit)
    grid = (B, n_t)

    # ---- pass 1: z1 = Conv1x1(x); partial BN1 stats -------------------------
    z1, s1, q1 = pl.pallas_call(
        functools.partial(_conv1x1_stats_kernel, compute_dtype=compute_dtype),
        grid=grid,
        in_specs=[
            pl.BlockSpec((1, Cin, tsp), lambda b, t: (b, 0, t)),
            pl.BlockSpec((Ch, Cin), lambda b, t: (0, 0)),
        ],
        out_specs=[
            pl.BlockSpec((1, Ch, tsp), lambda b, t: (b, 0, t)),
            pl.BlockSpec((1, 1, 1, Ch), lambda b, t: (b, t, 0, 0)),
            pl.BlockSpec((1, 1, 1, Ch), lambda b, t: (b, t, 0, 0)),
        ],
        out_shape=[
            jax.ShapeDtypeStruct((B, Ch, HW), store_dtype),
            jax.ShapeDtypeStruct((B, n_t, 1, Ch), f32),
            jax.ShapeDtypeStruct((B, n_t, 1, Ch), f32),
        ],
        compiler_params=cp,
        cost_estimate=pl.CostEstimate(flops=2 * npix * Cin * Ch,
                                      transcendentals=0,
                                      bytes_accessed=npix * (4 * Cin + es * Ch)),
    )(x3, w1m)
    sc1, sh1 = _bn_scale_shift(s1, q1, g1, b1, npix)

    # ---- pass 2: h1 = relu(BN1(z1)); z2 = Conv3x3(h1); partial BN2 stats ----
    # Row-band tiling with a +/-1 row halo taken from the clamped neighbour
    # bands (only their edge row is used; invalid halos at the image border
    # are zeroed in-kernel).
    # TODO(synk): a per-band edge-row side output from pass 1 would cut the
    # 3x neighbour-band reads here to ~1.06x.
    z2, s2, q2 = pl.pallas_call(
        functools.partial(_bnrelu_conv3x3_stats_kernel, img_w=W,
                          compute_dtype=compute_dtype),
        grid=grid,
        in_specs=[
            pl.BlockSpec((1, Ch, tsp), lambda b, t: (b, 0, t)),
            pl.BlockSpec((1, Ch, tsp),
                         lambda b, t: (b, 0, jnp.maximum(t - 1, 0))),
            pl.BlockSpec((1, Ch, tsp),
                         lambda b, t: (b, 0, jnp.minimum(t + 1, n_t - 1))),
            pl.BlockSpec((9, Ch, Ch), lambda b, t: (0, 0, 0)),
            pl.BlockSpec((Ch, 1), lambda b, t: (0, 0)),
            pl.BlockSpec((Ch, 1), lambda b, t: (0, 0)),
            pl.BlockSpec((4, tsp), lambda b, t: (0, 0)),
        ],
        out_specs=[
            pl.BlockSpec((1, Ch, tsp), lambda b, t: (b, 0, t)),
            pl.BlockSpec((1, 1, 1, Ch), lambda b, t: (b, t, 0, 0)),
            pl.BlockSpec((1, 1, 1, Ch), lambda b, t: (b, t, 0, 0)),
        ],
        out_shape=[
            jax.ShapeDtypeStruct((B, Ch, HW), store_dtype),
            jax.ShapeDtypeStruct((B, n_t, 1, Ch), f32),
            jax.ShapeDtypeStruct((B, n_t, 1, Ch), f32),
        ],
        compiler_params=cp,
        cost_estimate=pl.CostEstimate(
            flops=2 * npix * 9 * Ch * Ch + 12 * npix * Ch,
            transcendentals=0,
            bytes_accessed=npix * Ch * es * 4),
    )(z1, z1, z1, w2t, sc1, sh1, colmask)
    sc2, sh2 = _bn_scale_shift(s2, q2, g2, b2, npix)

    # ---- pass 3: h2 = relu(BN2(z2)); z3 = Conv1x1(h2); partial BN3 stats ----
    z3, s3, q3 = pl.pallas_call(
        functools.partial(_bnrelu_conv1x1_stats_kernel,
                          compute_dtype=compute_dtype),
        grid=grid,
        in_specs=[
            pl.BlockSpec((1, Ch, tsp), lambda b, t: (b, 0, t)),
            pl.BlockSpec((Cout, Ch), lambda b, t: (0, 0)),
            pl.BlockSpec((Ch, 1), lambda b, t: (0, 0)),
            pl.BlockSpec((Ch, 1), lambda b, t: (0, 0)),
        ],
        out_specs=[
            pl.BlockSpec((1, Cout, tsp), lambda b, t: (b, 0, t)),
            pl.BlockSpec((1, 1, 1, Cout), lambda b, t: (b, t, 0, 0)),
            pl.BlockSpec((1, 1, 1, Cout), lambda b, t: (b, t, 0, 0)),
        ],
        out_shape=[
            jax.ShapeDtypeStruct((B, Cout, HW), store_dtype),
            jax.ShapeDtypeStruct((B, n_t, 1, Cout), f32),
            jax.ShapeDtypeStruct((B, n_t, 1, Cout), f32),
        ],
        compiler_params=cp,
        cost_estimate=pl.CostEstimate(
            flops=2 * npix * Ch * Cout + 4 * npix * Ch, transcendentals=0,
            bytes_accessed=npix * es * (Ch + Cout)),
    )(z2, w3m, sc2, sh2)
    sc3, sh3 = _bn_scale_shift(s3, q3, g3, b3, npix)

    # ---- pass 4: out = relu(BN3(z3) + x) -------------------------------------
    out3 = pl.pallas_call(
        _bn_residual_relu_kernel,
        grid=grid,
        in_specs=[
            pl.BlockSpec((1, Cout, tsp), lambda b, t: (b, 0, t)),
            pl.BlockSpec((1, Cin, tsp), lambda b, t: (b, 0, t)),
            pl.BlockSpec((Cout, 1), lambda b, t: (0, 0)),
            pl.BlockSpec((Cout, 1), lambda b, t: (0, 0)),
        ],
        out_specs=pl.BlockSpec((1, Cout, tsp), lambda b, t: (b, 0, t)),
        out_shape=jax.ShapeDtypeStruct((B, Cout, HW), f32),
        compiler_params=cp,
        cost_estimate=pl.CostEstimate(
            flops=3 * npix * Cout, transcendentals=0,
            bytes_accessed=npix * (es * Cout + 4 * Cin + 4 * Cout)),
    )(z3, x3, sc3, sh3)

    return {'feats': out3.reshape(B, Cout, H, W)}


# --------------------------- reference & test ---------------------------------

def reference_forward(x_nchw, params):
    """Pure-JAX reference mirroring the PyTorch module (train-mode BN)."""
    (w1, w2, w3, g1, b1, g2, b2, g3, b3) = params

    def conv(h, w):
        k = w.shape[2]
        return jax.lax.conv_general_dilated(
            h, w, window_strides=(1, 1), padding=[(k // 2, k // 2)] * 2,
            dimension_numbers=('NCHW', 'OIHW', 'NCHW'))

    def bn(h, g, b):
        mu = jnp.mean(h, axis=(0, 2, 3), keepdims=True)
        var = jnp.mean((h - mu) ** 2, axis=(0, 2, 3), keepdims=True)
        return ((h - mu) * jax.lax.rsqrt(var + BN_EPS) * g.reshape(1, -1, 1, 1)
                + b.reshape(1, -1, 1, 1))

    h = jax.nn.relu(bn(conv(x_nchw, w1), g1, b1))
    h = jax.nn.relu(bn(conv(h, w2), g2, b2))
    h = bn(conv(h, w3), g3, b3)
    return jax.nn.relu(h + x_nchw)


if __name__ == "__main__":
    def make_params(key, cin, ch, cout):
        ks = jax.random.split(key, 9)
        w1 = 0.1 * jax.random.normal(ks[0], (ch, cin, 1, 1), dtype=jnp.float32)
        w2 = 0.1 * jax.random.normal(ks[1], (ch, ch, 3, 3), dtype=jnp.float32)
        w3 = 0.1 * jax.random.normal(ks[2], (cout, ch, 1, 1), dtype=jnp.float32)
        g1 = 1.0 + 0.1 * jax.random.normal(ks[3], (ch,), dtype=jnp.float32)
        b1 = 0.1 * jax.random.normal(ks[4], (ch,), dtype=jnp.float32)
        g2 = 1.0 + 0.1 * jax.random.normal(ks[5], (ch,), dtype=jnp.float32)
        b2 = 0.1 * jax.random.normal(ks[6], (ch,), dtype=jnp.float32)
        g3 = 1.0 + 0.1 * jax.random.normal(ks[7], (cout,), dtype=jnp.float32)
        b3 = 0.1 * jax.random.normal(ks[8], (cout,), dtype=jnp.float32)
        return (w1, w2, w3, g1, b1, g2, b2, g3, b3)

    root = jax.random.PRNGKey(0)
    ref_fn = jax.jit(reference_forward)

    # (B, C(=in=out), hidden, H, W, compute dtype, rows_per_band, atol, rtol)
    cases = [
        (2, 32, 16, 16, 16, jnp.bfloat16, None, 1e-1, 5e-2),  # default, 1 band
        (2, 32, 16, 32, 32, jnp.float32,  8,    2e-3, 1e-3),  # 4 bands + halo
        (1, 32, 16, 32, 32, jnp.bfloat16, 4,    1e-1, 5e-2),  # 8 bands, B=1
    ]
    for i, (B, C, Ch, H, W, cdt, rpb, atol, rtol) in enumerate(cases):
        kx, kp = jax.random.split(jax.random.fold_in(root, i))
        x = jax.random.normal(kx, (B, C, H, W), dtype=jnp.float32)
        params = make_params(kp, C, Ch, C)
        fwd = jax.jit(functools.partial(resblock2d_forward,
                                        compute_dtype=cdt, rows_per_band=rpb))
        feats = jax.block_until_ready(fwd(x, params)['feats'])
        ref = jax.block_until_ready(ref_fn(x, params))
        assert feats.shape == ref.shape
        err = float(jnp.max(jnp.abs(feats - ref)))
        ok = bool(jnp.allclose(feats, ref, atol=atol, rtol=rtol))
        assert ok, f"case {i}: max abs err {err} exceeds atol={atol} rtol={rtol}"

    # TODO(synk): use_downsample / use_attention_transfer / num_blocks>1 paths
    # are not exercised (module defaults are False / False / 1).
    print("KERNEL_OK")
</pallas_src>

<mosaic_0001>
module attributes {stable_mosaic.version = 11 : i64} {
  func.func @_conv1x1_stats_kernel(%arg0: i32, %arg1: i32, %arg2: memref<1x32x256xf32, #tpu.memory_space<vmem>>, %arg3: memref<16x32xbf16, #tpu.memory_space<vmem>>, %arg4: memref<1x16x256xbf16, #tpu.memory_space<vmem>>, %arg5: memref<1x1x1x16xf32, #tpu.memory_space<vmem>>, %arg6: memref<1x1x1x16xf32, #tpu.memory_space<vmem>>) attributes {dimension_semantics = [#tpu.dimension_semantics<parallel>, #tpu.dimension_semantics<parallel>], iteration_bounds = array<i64: 2, 1>, scalar_prefetch = 0 : i64, scratch_operands = 0 : i64, tpu.core_type = #tpu.core_type<tc>, window_params = [{transform_indices = @transform_0, window_bounds = array<i64: 1, 32, 256>}, {pipeline_mode = #tpu.pipeline_mode<synchronous>, transform_indices = @transform_1, window_bounds = array<i64: 16, 32>}, {transform_indices = @transform_2, window_bounds = array<i64: 1, 16, 256>}, {transform_indices = @transform_3, window_bounds = array<i64: 1, 1, 1, 16>}, {transform_indices = @transform_4, window_bounds = array<i64: 1, 1, 1, 16>}]} {
    %c0 = arith.constant 0 : index
    %c0_0 = arith.constant 0 : index
    %c0_1 = arith.constant 0 : index
    %0 = vector.load %arg2[%c0, %c0_0, %c0_1] : memref<1x32x256xf32, #tpu.memory_space<vmem>>, vector<1x32x256xf32>
    %1 = vector.shape_cast %0 : vector<1x32x256xf32> to vector<32x256xf32>
    %2 = arith.truncf %1 : vector<32x256xf32> to vector<32x256xbf16>
    %c0_2 = arith.constant 0 : index
    %c0_3 = arith.constant 0 : index
    %3 = vector.load %arg3[%c0_2, %c0_3] : memref<16x32xbf16, #tpu.memory_space<vmem>>, vector<16x32xbf16>
    %cst = arith.constant dense<0.000000e+00> : vector<16x256xf32>
    %4 = tpu.matmul %3, %2, %cst {dimension_numbers = #tpu.dot_dimension_numbers<[1], [0], [0], [1], [0, 0, 1, 1], [], []>} : vector<16x32xbf16>, vector<32x256xbf16>, vector<16x256xf32> -> vector<16x256xf32>
    %5 = arith.truncf %4 : vector<16x256xf32> to vector<16x256xbf16>
    %c0_4 = arith.constant 0 : index
    %c0_5 = arith.constant 0 : index
    %c0_6 = arith.constant 0 : index
    %6 = vector.load %arg4[%c0_4, %c0_5, %c0_6] : memref<1x16x256xbf16, #tpu.memory_space<vmem>>, vector<1x16x256xbf16>
    %7 = vector.shape_cast %6 : vector<1x16x256xbf16> to vector<16x256xbf16>
    %8 = vector.shape_cast %5 : vector<16x256xbf16> to vector<1x16x256xbf16>
    tpu.vector_store %arg4[%c0_4, %c0_5, %c0_6], %8 {strides = array<i32>} : memref<1x16x256xbf16, #tpu.memory_space<vmem>>, vector<1x16x256xbf16>,
    %cst_7 = arith.constant dense<0.000000e+00> : vector<16xf32>
    %9 = vector.multi_reduction <add>, %4, %cst_7 [1] : vector<16x256xf32> to vector<16xf32>
    %10 = vector.shape_cast %9 : vector<16xf32> to vector<1x16xf32>
    %c0_8 = arith.constant 0 : index
    %c0_9 = arith.constant 0 : index
    %c0_10 = arith.constant 0 : index
    %c0_11 = arith.constant 0 : index
    %11 = vector.load %arg5[%c0_8, %c0_9, %c0_10, %c0_11] : memref<1x1x1x16xf32, #tpu.memory_space<vmem>>, vector<1x1x1x16xf32>
    %12 = vector.shape_cast %11 : vector<1x1x1x16xf32> to vector<1x16xf32>
    %13 = vector.shape_cast %10 : vector<1x16xf32> to vector<1x1x1x16xf32>
    tpu.vector_store %arg5[%c0_8, %c0_9, %c0_10, %c0_11], %13 {strides = array<i32>} : memref<1x1x1x16xf32, #tpu.memory_space<vmem>>, vector<1x1x1x16xf32>,
    %14 = arith.mulf %4, %4 : vector<16x256xf32>
    %cst_12 = arith.constant dense<0.000000e+00> : vector<16xf32>
    %15 = vector.multi_reduction <add>, %14, %cst_12 [1] : vector<16x256xf32> to vector<16xf32>
    %16 = vector.shape_cast %15 : vector<16xf32> to vector<1x16xf32>
    %c0_13 = arith.constant 0 : index
    %c0_14 = arith.constant 0 : index
    %c0_15 = arith.constant 0 : index
    %c0_16 = arith.constant 0 : index
    %17 = vector.load %arg6[%c0_13, %c0_14, %c0_15, %c0_16] : memref<1x1x1x16xf32, #tpu.memory_space<vmem>>, vector<1x1x1x16xf32>
    %18 = vector.shape_cast %17 : vector<1x1x1x16xf32> to vector<1x16xf32>
    %19 = vector.shape_cast %16 : vector<1x16xf32> to vector<1x1x1x16xf32>
    tpu.vector_store %arg6[%c0_13, %c0_14, %c0_15, %c0_16], %19 {strides = array<i32>} : memref<1x1x1x16xf32, #tpu.memory_space<vmem>>, vector<1x1x1x16xf32>,
    return
  }
  func.func @transform_0(%arg0: i32, %arg1: i32) -> (i32, i32, i32) {
    %c0_i32 = arith.constant 0 : i32
    %c0_i32_0 = arith.constant 0 : i32
    return %arg0, %c0_i32, %arg1 : i32, i32, i32
  }
  func.func @transform_1(%arg0: i32, %arg1: i32) -> (i32, i32) {
    %c0_i32 = arith.constant 0 : i32
    %c0_i32_0 = arith.constant 0 : i32
    %c0_i32_1 = arith.constant 0 : i32
    return %c0_i32, %c0_i32_0 : i32, i32
  }
  func.func @transform_2(%arg0: i32, %arg1: i32) -> (i32, i32, i32) {
    %c0_i32 = arith.constant 0 : i32
    %c0_i32_0 = arith.constant 0 : i32
    return %arg0, %c0_i32, %arg1 : i32, i32, i32
  }
  func.func @transform_3(%arg0: i32, %arg1: i32) -> (i32, i32, i32, i32) {
    %c0_i32 = arith.constant 0 : i32
    %c0_i32_0 = arith.constant 0 : i32
    %c0_i32_1 = arith.constant 0 : i32
    return %arg0, %arg1, %c0_i32, %c0_i32_0 : i32, i32, i32, i32
  }
  func.func @transform_4(%arg0: i32, %arg1: i32) -> (i32, i32, i32, i32) {
    %c0_i32 = arith.constant 0 : i32
    %c0_i32_0 = arith.constant 0 : i32
    %c0_i32_1 = arith.constant 0 : i32
    return %arg0, %arg1, %c0_i32, %c0_i32_0 : i32, i32, i32, i32
  }
}

module attributes {stable_mosaic.version = 11 : i64} {
  func.func @_bnrelu_conv1x1_stats_kernel(%arg0: i32, %arg1: i32, %arg2: memref<1x16x256xbf16, #tpu.memory_space<vmem>>, %arg3: memref<32x16xbf16, #tpu.memory_space<vmem>>, %arg4: memref<16x1xf32, #tpu.memory_space<vmem>>, %arg5: memref<16x1xf32, #tpu.memory_space<vmem>>, %arg6: memref<1x32x256xbf16, #tpu.memory_space<vmem>>, %arg7: memref<1x1x1x32xf32, #tpu.memory_space<vmem>>, %arg8: memref<1x1x1x32xf32, #tpu.memory_space<vmem>>) attributes {dimension_semantics = [#tpu.dimension_semantics<parallel>, #tpu.dimension_semantics<parallel>], iteration_bounds = array<i64: 2, 1>, scalar_prefetch = 0 : i64, scratch_operands = 0 : i64, tpu.core_type = #tpu.core_type<tc>, window_params = [{transform_indices = @transform_0, window_bounds = array<i64: 1, 16, 256>}, {pipeline_mode = #tpu.pipeline_mode<synchronous>, transform_indices = @transform_1, window_bounds = array<i64: 32, 16>}, {pipeline_mode = #tpu.pipeline_mode<synchronous>, transform_indices = @transform_2, window_bounds = array<i64: 16, 1>}, {pipeline_mode = #tpu.pipeline_mode<synchronous>, transform_indices = @transform_3, window_bounds = array<i64: 16, 1>}, {transform_indices = @transform_4, window_bounds = array<i64: 1, 32, 256>}, {transform_indices = @transform_5, window_bounds = array<i64: 1, 1, 1, 32>}, {transform_indices = @transform_6, window_bounds = array<i64: 1, 1, 1, 32>}]} {
    %c0 = arith.constant 0 : index
    %c0_0 = arith.constant 0 : index
    %c0_1 = arith.constant 0 : index
    %0 = vector.load %arg2[%c0, %c0_0, %c0_1] : memref<1x16x256xbf16, #tpu.memory_space<vmem>>, vector<1x16x256xbf16>
    %1 = vector.shape_cast %0 : vector<1x16x256xbf16> to vector<16x256xbf16>
    %2 = arith.extf %1 : vector<16x256xbf16> to vector<16x256xf32>
    %c0_2 = arith.constant 0 : index
    %c0_3 = arith.constant 0 : index
    %3 = vector.load %arg4[%c0_2, %c0_3] : memref<16x1xf32, #tpu.memory_space<vmem>>, vector<16x1xf32>
    %4 = vector.broadcast %3 : vector<16x1xf32> to vector<16x256xf32>
    %5 = arith.mulf %2, %4 : vector<16x256xf32>
    %c0_4 = arith.constant 0 : index
    %c0_5 = arith.constant 0 : index
    %6 = vector.load %arg5[%c0_4, %c0_5] : memref<16x1xf32, #tpu.memory_space<vmem>>, vector<16x1xf32>
    %7 = vector.broadcast %6 : vector<16x1xf32> to vector<16x256xf32>
    %8 = arith.addf %5, %7 : vector<16x256xf32>
    %cst = arith.constant 0.000000e+00 : f32
    %9 = vector.broadcast %cst : f32 to vector<16x256xf32>
    %10 = arith.maximumf %8, %9 : vector<16x256xf32>
    %c0_6 = arith.constant 0 : index
    %c0_7 = arith.constant 0 : index
    %11 = vector.load %arg3[%c0_6, %c0_7] : memref<32x16xbf16, #tpu.memory_space<vmem>>, vector<32x16xbf16>
    %12 = arith.truncf %10 : vector<16x256xf32> to vector<16x256xbf16>
    %cst_8 = arith.constant dense<0.000000e+00> : vector<32x256xf32>
    %13 = tpu.matmul %11, %12, %cst_8 {dimension_numbers = #tpu.dot_dimension_numbers<[1], [0], [0], [1], [0, 0, 1, 1], [], []>} : vector<32x16xbf16>, vector<16x256xbf16>, vector<32x256xf32> -> vector<32x256xf32>
    %14 = arith.truncf %13 : vector<32x256xf32> to vector<32x256xbf16>
    %c0_9 = arith.constant 0 : index
    %c0_10 = arith.constant 0 : index
    %c0_11 = arith.constant 0 : index
    %15 = vector.load %arg6[%c0_9, %c0_10, %c0_11] : memref<1x32x256xbf16, #tpu.memory_space<vmem>>, vector<1x32x256xbf16>
    %16 = vector.shape_cast %15 : vector<1x32x256xbf16> to vector<32x256xbf16>
    %17 = vector.shape_cast %14 : vector<32x256xbf16> to vector<1x32x256xbf16>
    tpu.vector_store %arg6[%c0_9, %c0_10, %c0_11], %17 {strides = array<i32>} : memref<1x32x256xbf16, #tpu.memory_space<vmem>>, vector<1x32x256xbf16>,
    %cst_12 = arith.constant dense<0.000000e+00> : vector<32xf32>
    %18 = vector.multi_reduction <add>, %13, %cst_12 [1] : vector<32x256xf32> to vector<32xf32>
    %19 = vector.shape_cast %18 : vector<32xf32> to vector<1x32xf32>
    %c0_13 = arith.constant 0 : index
    %c0_14 = arith.constant 0 : index
    %c0_15 = arith.constant 0 : index
    %c0_16 = arith.constant 0 : index
    %20 = vector.load %arg7[%c0_13, %c0_14, %c0_15, %c0_16] : memref<1x1x1x32xf32, #tpu.memory_space<vmem>>, vector<1x1x1x32xf32>
    %21 = vector.shape_cast %20 : vector<1x1x1x32xf32> to vector<1x32xf32>
    %22 = vector.shape_cast %19 : vector<1x32xf32> to vector<1x1x1x32xf32>
    tpu.vector_store %arg7[%c0_13, %c0_14, %c0_15, %c0_16], %22 {strides = array<i32>} : memref<1x1x1x32xf32, #tpu.memory_space<vmem>>, vector<1x1x1x32xf32>,
    %23 = arith.mulf %13, %13 : vector<32x256xf32>
    %cst_17 = arith.constant dense<0.000000e+00> : vector<32xf32>
    %24 = vector.multi_reduction <add>, %23, %cst_17 [1] : vector<32x256xf32> to vector<32xf32>
    %25 = vector.shape_cast %24 : vector<32xf32> to vector<1x32xf32>
    %c0_18 = arith.constant 0 : index
    %c0_19 = arith.constant 0 : index
    %c0_20 = arith.constant 0 : index
    %c0_21 = arith.constant 0 : index
    %26 = vector.load %arg8[%c0_18, %c0_19, %c0_20, %c0_21] : memref<1x1x1x32xf32, #tpu.memory_space<vmem>>, vector<1x1x1x32xf32>
    %27 = vector.shape_cast %26 : vector<1x1x1x32xf32> to vector<1x32xf32>
    %28 = vector.shape_cast %25 : vector<1x32xf32> to vector<1x1x1x32xf32>
    tpu.vector_store %arg8[%c0_18, %c0_19, %c0_20, %c0_21], %28 {strides = array<i32>} : memref<1x1x1x32xf32, #tpu.memory_space<vmem>>, vector<1x1x1x32xf32>,
    return
  }
  func.func @transform_0(%arg0: i32, %arg1: i32) -> (i32, i32, i32) {
    %c0_i32 = arith.constant 0 : i32
    %c0_i32_0 = arith.constant 0 : i32
    return %arg0, %c0_i32, %arg1 : i32, i32, i32
  }
  func.func @transform_1(%arg0: i32, %arg1: i32) -> (i32, i32) {
    %c0_i32 = arith.constant 0 : i32
    %c0_i32_0 = arith.constant 0 : i32
    %c0_i32_1 = arith.constant 0 : i32
    return %c0_i32, %c0_i32_0 : i32, i32
  }
  func.func @transform_2(%arg0: i32, %arg1: i32) -> (i32, i32) {
    %c0_i32 = arith.constant 0 : i32
    %c0_i32_0 = arith.constant 0 : i32
    %c0_i32_1 = arith.constant 0 : i32
    return %c0_i32, %c0_i32_0 : i32, i32
  }
  func.func @transform_3(%arg0: i32, %arg1: i32) -> (i32, i32) {
    %c0_i32 = arith.constant 0 : i32
    %c0_i32_0 = arith.constant 0 : i32
    %c0_i32_1 = arith.constant 0 : i32
    return %c0_i32, %c0_i32_0 : i32, i32
  }
  func.func @transform_4(%arg0: i32, %arg1: i32) -> (i32, i32, i32) {
    %c0_i32 = arith.constant 0 : i32
    %c0_i32_0 = arith.constant 0 : i32
    return %arg0, %c0_i32, %arg1 : i32, i32, i32
  }
  func.func @transform_5(%arg0: i32, %arg1: i32) -> (i32, i32, i32, i32) {
    %c0_i32 = arith.constant 0 : i32
    %c0_i32_0 = arith.constant 0 : i32
    %c0_i32_1 = arith.constant 0 : i32
    return %arg0, %arg1, %c0_i32, %c0_i32_0 : i32, i32, i32, i32
  }
  func.func @transform_6(%arg0: i32, %arg1: i32) -> (i32, i32, i32, i32) {
    %c0_i32 = arith.constant 0 : i32
    %c0_i32_0 = arith.constant 0 : i32
    %c0_i32_1 = arith.constant 0 : i32
    return %arg0, %arg1, %c0_i32, %c0_i32_0 : i32, i32, i32, i32
  }
}

module attributes {stable_mosaic.version = 11 : i64} {
  func.func @_bnrelu_conv3x3_stats_kernel(%arg0: i32, %arg1: i32, %arg2: memref<1x16x256xbf16, #tpu.memory_space<vmem>>, %arg3: memref<1x16x256xbf16, #tpu.memory_space<vmem>>, %arg4: memref<1x16x256xbf16, #tpu.memory_space<vmem>>, %arg5: memref<9x16x16xbf16, #tpu.memory_space<vmem>>, %arg6: memref<16x1xf32, #tpu.memory_space<vmem>>, %arg7: memref<16x1xf32, #tpu.memory_space<vmem>>, %arg8: memref<4x256xf32, #tpu.memory_space<vmem>>, %arg9: memref<1x16x256xbf16, #tpu.memory_space<vmem>>, %arg10: memref<1x1x1x16xf32, #tpu.memory_space<vmem>>, %arg11: memref<1x1x1x16xf32, #tpu.memory_space<vmem>>) attributes {dimension_semantics = [#tpu.dimension_semantics<parallel>, #tpu.dimension_semantics<parallel>], iteration_bounds = array<i64: 2, 1>, scalar_prefetch = 0 : i64, scratch_operands = 0 : i64, tpu.core_type = #tpu.core_type<tc>, window_params = [{transform_indices = @transform_0, window_bounds = array<i64: 1, 16, 256>}, {transform_indices = @transform_1, window_bounds = array<i64: 1, 16, 256>}, {transform_indices = @transform_2, window_bounds = array<i64: 1, 16, 256>}, {pipeline_mode = #tpu.pipeline_mode<synchronous>, transform_indices = @transform_3, window_bounds = array<i64: 9, 16, 16>}, {pipeline_mode = #tpu.pipeline_mode<synchronous>, transform_indices = @transform_4, window_bounds = array<i64: 16, 1>}, {pipeline_mode = #tpu.pipeline_mode<synchronous>, transform_indices = @transform_5, window_bounds = array<i64: 16, 1>}, {pipeline_mode = #tpu.pipeline_mode<synchronous>, transform_indices = @transform_6, window_bounds = array<i64: 4, 256>}, {transform_indices = @transform_7, window_bounds = array<i64: 1, 16, 256>}, {transform_indices = @transform_8, window_bounds = array<i64: 1, 1, 1, 16>}, {transform_indices = @transform_9, window_bounds = array<i64: 1, 1, 1, 16>}]} {
    %c0 = arith.constant 0 : index
    %c0_0 = arith.constant 0 : index
    %0 = vector.load %arg6[%c0, %c0_0] : memref<16x1xf32, #tpu.memory_space<vmem>>, vector<16x1xf32>
    %c0_1 = arith.constant 0 : index
    %c0_2 = arith.constant 0 : index
    %1 = vector.load %arg7[%c0_1, %c0_2] : memref<16x1xf32, #tpu.memory_space<vmem>>, vector<16x1xf32>
    %c0_3 = arith.constant 0 : index
    %c0_4 = arith.constant 0 : index
    %2 = vector.load %arg8[%c0_3, %c0_4] : memref<4x256xf32, #tpu.memory_space<vmem>>, vector<4x256xf32>
    %3 = vector.extract_strided_slice %2 {offsets = [0, 0], sizes = [1, 256], strides = [1, 1]} : vector<4x256xf32> to vector<1x256xf32>
    %4 = vector.extract_strided_slice %2 {offsets = [1, 0], sizes = [1, 256], strides = [1, 1]} : vector<4x256xf32> to vector<1x256xf32>
    %5 = vector.extract_strided_slice %2 {offsets = [2, 0], sizes = [1, 256], strides = [1, 1]} : vector<4x256xf32> to vector<1x256xf32>
    %6 = vector.extract_strided_slice %2 {offsets = [3, 0], sizes = [1, 256], strides = [1, 1]} : vector<4x256xf32> to vector<1x256xf32>
    %c0_5 = arith.constant 0 : index
    %c0_6 = arith.constant 0 : index
    %c0_7 = arith.constant 0 : index
    %7 = vector.load %arg2[%c0_5, %c0_6, %c0_7] : memref<1x16x256xbf16, #tpu.memory_space<vmem>>, vector<1x16x256xbf16>
    %8 = vector.shape_cast %7 : vector<1x16x256xbf16> to vector<16x256xbf16>
    %9 = arith.extf %8 : vector<16x256xbf16> to vector<16x256xf32>
    %10 = vector.broadcast %0 : vector<16x1xf32> to vector<16x256xf32>
    %11 = arith.mulf %9, %10 : vector<16x256xf32>
    %12 = vector.broadcast %1 : vector<16x1xf32> to vector<16x256xf32>
    %13 = arith.addf %11, %12 : vector<16x256xf32>
    %cst = arith.constant 0.000000e+00 : f32
    %14 = vector.broadcast %cst : f32 to vector<16x256xf32>
    %15 = arith.maximumf %13, %14 : vector<16x256xf32>
    %c0_i32 = arith.constant 0 : i32
    %16 = arith.cmpi sgt, %arg1, %c0_i32 : i32
    %17 = arith.extui %16 : i1 to i32
    %18 = arith.sitofp %17 : i32 to f32
    %c0_i32_8 = arith.constant 0 : i32
    %19 = arith.cmpi slt, %arg1, %c0_i32_8 : i32
    %20 = arith.extui %19 : i1 to i32
    %21 = arith.sitofp %20 : i32 to f32
    %cst_9 = arith.constant 1.000000e+00 : f32
    %22 = vector.broadcast %cst_9 : f32 to vector<1x256xf32>
    %23 = arith.subf %22, %5 : vector<1x256xf32>
    %24 = vector.broadcast %23 : vector<1x256xf32> to vector<16x256xf32>
    %25 = arith.mulf %15, %24 : vector<16x256xf32>
    %c0_10 = arith.constant 0 : index
    %c0_11 = arith.constant 0 : index
    %c0_12 = arith.constant 0 : index
    %26 = vector.load %arg3[%c0_10, %c0_11, %c0_12] : memref<1x16x256xbf16, #tpu.memory_space<vmem>>, vector<1x16x256xbf16>
    %27 = vector.shape_cast %26 : vector<1x16x256xbf16> to vector<16x256xbf16>
    %28 = arith.extf %27 : vector<16x256xbf16> to vector<16x256xf32>
    %29 = vector.broadcast %0 : vector<16x1xf32> to vector<16x256xf32>
    %30 = arith.mulf %28, %29 : vector<16x256xf32>
    %31 = vector.broadcast %1 : vector<16x1xf32> to vector<16x256xf32>
    %32 = arith.addf %30, %31 : vector<16x256xf32>
    %cst_13 = arith.constant 0.000000e+00 : f32
    %33 = vector.broadcast %cst_13 : f32 to vector<16x256xf32>
    %34 = arith.maximumf %32, %33 : vector<16x256xf32>
    %35 = vector.broadcast %18 : f32 to vector<1x256xf32>
    %36 = arith.mulf %5, %35 : vector<1x256xf32>
    %37 = vector.broadcast %36 : vector<1x256xf32> to vector<16x256xf32>
    %38 = arith.mulf %34, %37 : vector<16x256xf32>
    %39 = arith.addf %25, %38 : vector<16x256xf32>
    %cst_14 = arith.constant 1.000000e+00 : f32
    %40 = vector.broadcast %cst_14 : f32 to vector<1x256xf32>
    %41 = arith.subf %40, %6 : vector<1x256xf32>
    %42 = vector.broadcast %41 : vector<1x256xf32> to vector<16x256xf32>
    %43 = arith.mulf %15, %42 : vector<16x256xf32>
    %c0_15 = arith.constant 0 : index
    %c0_16 = arith.constant 0 : index
    %c0_17 = arith.constant 0 : index
    %44 = vector.load %arg4[%c0_15, %c0_16, %c0_17] : memref<1x16x256xbf16, #tpu.memory_space<vmem>>, vector<1x16x256xbf16>
    %45 = vector.shape_cast %44 : vector<1x16x256xbf16> to vector<16x256xbf16>
    %46 = arith.extf %45 : vector<16x256xbf16> to vector<16x256xf32>
    %47 = vector.broadcast %0 : vector<16x1xf32> to vector<16x256xf32>
    %48 = arith.mulf %46, %47 : vector<16x256xf32>
    %49 = vector.broadcast %1 : vector<16x1xf32> to vector<16x256xf32>
    %50 = arith.addf %48, %49 : vector<16x256xf32>
    %cst_18 = arith.constant 0.000000e+00 : f32
    %51 = vector.broadcast %cst_18 : f32 to vector<16x256xf32>
    %52 = arith.maximumf %50, %51 : vector<16x256xf32>
    %53 = vector.broadcast %21 : f32 to vector<1x256xf32>
    %54 = arith.mulf %6, %53 : vector<1x256xf32>
    %55 = vector.broadcast %54 : vector<1x256xf32> to vector<16x256xf32>
    %56 = arith.mulf %52, %55 : vector<16x256xf32>
    %57 = arith.addf %43, %56 : vector<16x256xf32>
    %c17_i32 = arith.constant 17 : i32
    %58 = tpu.dynamic_rotate %39 by %c17_i32 dim 1 : vector<16x256xf32>, i32 -> vector<16x256xf32>
    %59 = vector.broadcast %3 : vector<1x256xf32> to vector<16x256xf32>
    %60 = arith.mulf %58, %59 : vector<16x256xf32>
    %c0_19 = arith.constant 0 : index
    %c0_20 = arith.constant 0 : index
    %c0_21 = arith.constant 0 : index
    %61 = vector.load %arg5[%c0_19, %c0_20, %c0_21] : memref<9x16x16xbf16, #tpu.memory_space<vmem>>, vector<1x16x16xbf16>
    %62 = vector.shape_cast %61 : vector<1x16x16xbf16> to vector<16x16xbf16>
    %63 = arith.truncf %60 : vector<16x256xf32> to vector<16x256xbf16>
    %cst_22 = arith.constant dense<0.000000e+00> : vector<16x256xf32>
    %64 = tpu.matmul %62, %63, %cst_22 {dimension_numbers = #tpu.dot_dimension_numbers<[1], [0], [0], [1], [0, 0, 1, 1], [], []>} : vector<16x16xbf16>, vector<16x256xbf16>, vector<16x256xf32> -> vector<16x256xf32>
    %c16_i32 = arith.constant 16 : i32
    %65 = tpu.dynamic_rotate %39 by %c16_i32 dim 1 : vector<16x256xf32>, i32 -> vector<16x256xf32>
    %c1 = arith.constant 1 : index
    %c0_23 = arith.constant 0 : index
    %c0_24 = arith.constant 0 : index
    %66 = vector.load %arg5[%c1, %c0_23, %c0_24] : memref<9x16x16xbf16, #tpu.memory_space<vmem>>, vector<1x16x16xbf16>
    %67 = vector.shape_cast %66 : vector<1x16x16xbf16> to vector<16x16xbf16>
    %68 = arith.truncf %65 : vector<16x256xf32> to vector<16x256xbf16>
    %cst_25 = arith.constant dense<0.000000e+00> : vector<16x256xf32>
    %69 = tpu.matmul %67, %68, %cst_25 {dimension_numbers = #tpu.dot_dimension_numbers<[1], [0], [0], [1], [0, 0, 1, 1], [], []>} : vector<16x16xbf16>, vector<16x256xbf16>, vector<16x256xf32> -> vector<16x256xf32>
    %70 = arith.addf %64, %69 : vector<16x256xf32>
    %c15_i32 = arith.constant 15 : i32
    %71 = tpu.dynamic_rotate %39 by %c15_i32 dim 1 : vector<16x256xf32>, i32 -> vector<16x256xf32>
    %72 = vector.broadcast %4 : vector<1x256xf32> to vector<16x256xf32>
    %73 = arith.mulf %71, %72 : vector<16x256xf32>
    %c2 = arith.constant 2 : index
    %c0_26 = arith.constant 0 : index
    %c0_27 = arith.constant 0 : index
    %74 = vector.load %arg5[%c2, %c0_26, %c0_27] : memref<9x16x16xbf16, #tpu.memory_space<vmem>>, vector<1x16x16xbf16>
    %75 = vector.shape_cast %74 : vector<1x16x16xbf16> to vector<16x16xbf16>
    %76 = arith.truncf %73 : vector<16x256xf32> to vector<16x256xbf16>
    %cst_28 = arith.constant dense<0.000000e+00> : vector<16x256xf32>
    %77 = tpu.matmul %75, %76, %cst_28 {dimension_numbers = #tpu.dot_dimension_numbers<[1], [0], [0], [1], [0, 0, 1, 1], [], []>} : vector<16x16xbf16>, vector<16x256xbf16>, vector<16x256xf32> -> vector<16x256xf32>
    %78 = arith.addf %70, %77 : vector<16x256xf32>
    %c1_i32 = arith.constant 1 : i32
    %79 = tpu.dynamic_rotate %15 by %c1_i32 dim 1 : vector<16x256xf32>, i32 -> vector<16x256xf32>
    %80 = vector.broadcast %3 : vector<1x256xf32> to vector<16x256xf32>
    %81 = arith.mulf %79, %80 : vector<16x256xf32>
    %c3 = arith.constant 3 : index
    %c0_29 = arith.constant 0 : index
    %c0_30 = arith.constant 0 : index
    %82 = vector.load %arg5[%c3, %c0_29, %c0_30] : memref<9x16x16xbf16, #tpu.memory_space<vmem>>, vector<1x16x16xbf16>
    %83 = vector.shape_cast %82 : vector<1x16x16xbf16> to vector<16x16xbf16>
    %84 = arith.truncf %81 : vector<16x256xf32> to vector<16x256xbf16>
    %cst_31 = arith.constant dense<0.000000e+00> : vector<16x256xf32>
    %85 = tpu.matmul %83, %84, %cst_31 {dimension_numbers = #tpu.dot_dimension_numbers<[1], [0], [0], [1], [0, 0, 1, 1], [], []>} : vector<16x16xbf16>, vector<16x256xbf16>, vector<16x256xf32> -> vector<16x256xf32>
    %86 = arith.addf %78, %85 : vector<16x256xf32>
    %c4 = arith.constant 4 : index
    %c0_32 = arith.constant 0 : index
    %c0_33 = arith.constant 0 : index
    %87 = vector.load %arg5[%c4, %c0_32, %c0_33] : memref<9x16x16xbf16, #tpu.memory_space<vmem>>, vector<1x16x16xbf16>
    %88 = vector.shape_cast %87 : vector<1x16x16xbf16> to vector<16x16xbf16>
    %89 = arith.truncf %15 : vector<16x256xf32> to vector<16x256xbf16>
    %cst_34 = arith.constant dense<0.000000e+00> : vector<16x256xf32>
    %90 = tpu.matmul %88, %89, %cst_34 {dimension_numbers = #tpu.dot_dimension_numbers<[1], [0], [0], [1], [0, 0, 1, 1], [], []>} : vector<16x16xbf16>, vector<16x256xbf16>, vector<16x256xf32> -> vector<16x256xf32>
    %91 = arith.addf %86, %90 : vector<16x256xf32>
    %c255_i32 = arith.constant 255 : i32
    %92 = tpu.dynamic_rotate %15 by %c255_i32 dim 1 : vector<16x256xf32>, i32 -> vector<16x256xf32>
    %93 = vector.broadcast %4 : vector<1x256xf32> to vector<16x256xf32>
    %94 = arith.mulf %92, %93 : vector<16x256xf32>
    %c5 = arith.constant 5 : index
    %c0_35 = arith.constant 0 : index
    %c0_36 = arith.constant 0 : index
    %95 = vector.load %arg5[%c5, %c0_35, %c0_36] : memref<9x16x16xbf16, #tpu.memory_space<vmem>>, vector<1x16x16xbf16>
    %96 = vector.shape_cast %95 : vector<1x16x16xbf16> to vector<16x16xbf16>
    %97 = arith.truncf %94 : vector<16x256xf32> to vector<16x256xbf16>
    %cst_37 = arith.constant dense<0.000000e+00> : vector<16x256xf32>
    %98 = tpu.matmul %96, %97, %cst_37 {dimension_numbers = #tpu.dot_dimension_numbers<[1], [0], [0], [1], [0, 0, 1, 1], [], []>} : vector<16x16xbf16>, vector<16x256xbf16>, vector<16x256xf32> -> vector<16x256xf32>
    %99 = arith.addf %91, %98 : vector<16x256xf32>
    %c241_i32 = arith.constant 241 : i32
    %100 = tpu.dynamic_rotate %57 by %c241_i32 dim 1 : vector<16x256xf32>, i32 -> vector<16x256xf32>
    %101 = vector.broadcast %3 : vector<1x256xf32> to vector<16x256xf32>
    %102 = arith.mulf %100, %101 : vector<16x256xf32>
    %c6 = arith.constant 6 : index
    %c0_38 = arith.constant 0 : index
    %c0_39 = arith.constant 0 : index
    %103 = vector.load %arg5[%c6, %c0_38, %c0_39] : memref<9x16x16xbf16, #tpu.memory_space<vmem>>, vector<1x16x16xbf16>
    %104 = vector.shape_cast %103 : vector<1x16x16xbf16> to vector<16x16xbf16>
    %105 = arith.truncf %102 : vector<16x256xf32> to vector<16x256xbf16>
    %cst_40 = arith.constant dense<0.000000e+00> : vector<16x256xf32>
    %106 = tpu.matmul %104, %105, %cst_40 {dimension_numbers = #tpu.dot_dimension_numbers<[1], [0], [0], [1], [0, 0, 1, 1], [], []>} : vector<16x16xbf16>, vector<16x256xbf16>, vector<16x256xf32> -> vector<16x256xf32>
    %107 = arith.addf %99, %106 : vector<16x256xf32>
    %c240_i32 = arith.constant 240 : i32
    %108 = tpu.dynamic_rotate %57 by %c240_i32 dim 1 : vector<16x256xf32>, i32 -> vector<16x256xf32>
    %c7 = arith.constant 7 : index
    %c0_41 = arith.constant 0 : index
    %c0_42 = arith.constant 0 : index
    %109 = vector.load %arg5[%c7, %c0_41, %c0_42] : memref<9x16x16xbf16, #tpu.memory_space<vmem>>, vector<1x16x16xbf16>
    %110 = vector.shape_cast %109 : vector<1x16x16xbf16> to vector<16x16xbf16>
    %111 = arith.truncf %108 : vector<16x256xf32> to vector<16x256xbf16>
    %cst_43 = arith.constant dense<0.000000e+00> : vector<16x256xf32>
    %112 = tpu.matmul %110, %111, %cst_43 {dimension_numbers = #tpu.dot_dimension_numbers<[1], [0], [0], [1], [0, 0, 1, 1], [], []>} : vector<16x16xbf16>, vector<16x256xbf16>, vector<16x256xf32> -> vector<16x256xf32>
    %113 = arith.addf %107, %112 : vector<16x256xf32>
    %c239_i32 = arith.constant 239 : i32
    %114 = tpu.dynamic_rotate %57 by %c239_i32 dim 1 : vector<16x256xf32>, i32 -> vector<16x256xf32>
    %115 = vector.broadcast %4 : vector<1x256xf32> to vector<16x256xf32>
    %116 = arith.mulf %114, %115 : vector<16x256xf32>
    %c8 = arith.constant 8 : index
    %c0_44 = arith.constant 0 : index
    %c0_45 = arith.constant 0 : index
    %117 = vector.load %arg5[%c8, %c0_44, %c0_45] : memref<9x16x16xbf16, #tpu.memory_space<vmem>>, vector<1x16x16xbf16>
    %118 = vector.shape_cast %117 : vector<1x16x16xbf16> to vector<16x16xbf16>
    %119 = arith.truncf %116 : vector<16x256xf32> to vector<16x256xbf16>
    %cst_46 = arith.constant dense<0.000000e+00> : vector<16x256xf32>
    %120 = tpu.matmul %118, %119, %cst_46 {dimension_numbers = #tpu.dot_dimension_numbers<[1], [0], [0], [1], [0, 0, 1, 1], [], []>} : vector<16x16xbf16>, vector<16x256xbf16>, vector<16x256xf32> -> vector<16x256xf32>
    %121 = arith.addf %113, %120 : vector<16x256xf32>
    %122 = arith.truncf %121 : vector<16x256xf32> to vector<16x256xbf16>
    %c0_47 = arith.constant 0 : index
    %c0_48 = arith.constant 0 : index
    %c0_49 = arith.constant 0 : index
    %123 = vector.load %arg9[%c0_47, %c0_48, %c0_49] : memref<1x16x256xbf16, #tpu.memory_space<vmem>>, vector<1x16x256xbf16>
    %124 = vector.shape_cast %123 : vector<1x16x256xbf16> to vector<16x256xbf16>
    %125 = vector.shape_cast %122 : vector<16x256xbf16> to vector<1x16x256xbf16>
    tpu.vector_store %arg9[%c0_47, %c0_48, %c0_49], %125 {strides = array<i32>} : memref<1x16x256xbf16, #tpu.memory_space<vmem>>, vector<1x16x256xbf16>,
    %cst_50 = arith.constant dense<0.000000e+00> : vector<16xf32>
    %126 = vector.multi_reduction <add>, %121, %cst_50 [1] : vector<16x256xf32> to vector<16xf32>
    %127 = vector.shape_cast %126 : vector<16xf32> to vector<1x16xf32>
    %c0_51 = arith.constant 0 : index
    %c0_52 = arith.constant 0 : index
    %c0_53 = arith.constant 0 : index
    %c0_54 = arith.constant 0 : index
    %128 = vector.load %arg10[%c0_51, %c0_52, %c0_53, %c0_54] : memref<1x1x1x16xf32, #tpu.memory_space<vmem>>, vector<1x1x1x16xf32>
    %129 = vector.shape_cast %128 : vector<1x1x1x16xf32> to vector<1x16xf32>
    %130 = vector.shape_cast %127 : vector<1x16xf32> to vector<1x1x1x16xf32>
    tpu.vector_store %arg10[%c0_51, %c0_52, %c0_53, %c0_54], %130 {strides = array<i32>} : memref<1x1x1x16xf32, #tpu.memory_space<vmem>>, vector<1x1x1x16xf32>,
    %131 = arith.mulf %121, %121 : vector<16x256xf32>
    %cst_55 = arith.constant dense<0.000000e+00> : vector<16xf32>
    %132 = vector.multi_reduction <add>, %131, %cst_55 [1] : vector<16x256xf32> to vector<16xf32>
    %133 = vector.shape_cast %132 : vector<16xf32> to vector<1x16xf32>
    %c0_56 = arith.constant 0 : index
    %c0_57 = arith.constant 0 : index
    %c0_58 = arith.constant 0 : index
    %c0_59 = arith.constant 0 : index
    %134 = vector.load %arg11[%c0_56, %c0_57, %c0_58, %c0_59] : memref<1x1x1x16xf32, #tpu.memory_space<vmem>>, vector<1x1x1x16xf32>
    %135 = vector.shape_cast %134 : vector<1x1x1x16xf32> to vector<1x16xf32>
    %136 = vector.shape_cast %133 : vector<1x16xf32> to vector<1x1x1x16xf32>
    tpu.vector_store %arg11[%c0_56, %c0_57, %c0_58, %c0_59], %136 {strides = array<i32>} : memref<1x1x1x16xf32, #tpu.memory_space<vmem>>, vector<1x1x1x16xf32>,
    return
  }
  func.func @transform_0(%arg0: i32, %arg1: i32) -> (i32, i32, i32) {
    %c0_i32 = arith.constant 0 : i32
    %c0_i32_0 = arith.constant 0 : i32
    return %arg0, %c0_i32, %arg1 : i32, i32, i32
  }
  func.func @transform_1(%arg0: i32, %arg1: i32) -> (i32, i32, i32) {
    %c1_i32 = arith.constant 1 : i32
    %0 = arith.subi %arg1, %c1_i32 : i32
    %c0_i32 = arith.constant 0 : i32
    %1 = arith.maxsi %0, %c0_i32 : i32
    %c0_i32_0 = arith.constant 0 : i32
    %c0_i32_1 = arith.constant 0 : i32
    return %arg0, %c0_i32_0, %1 : i32, i32, i32
  }
  func.func @transform_2(%arg0: i32, %arg1: i32) -> (i32, i32, i32) {
    %c1_i32 = arith.constant 1 : i32
    %0 = arith.addi %arg1, %c1_i32 : i32
    %c0_i32 = arith.constant 0 : i32
    %1 = arith.minsi %0, %c0_i32 : i32
    %c0_i32_0 = arith.constant 0 : i32
    %c0_i32_1 = arith.constant 0 : i32
    return %arg0, %c0_i32_0, %1 : i32, i32, i32
  }
  func.func @transform_3(%arg0: i32, %arg1: i32) -> (i32, i32, i32) {
    %c0_i32 = arith.constant 0 : i32
    %c0_i32_0 = arith.constant 0 : i32
    %c0_i32_1 = arith.constant 0 : i32
    %c0_i32_2 = arith.constant 0 : i32
    return %c0_i32, %c0_i32_0, %c0_i32_1 : i32, i32, i32
  }
  func.func @transform_4(%arg0: i32, %arg1: i32) -> (i32, i32) {
    %c0_i32 = arith.constant 0 : i32
    %c0_i32_0 = arith.constant 0 : i32
    %c0_i32_1 = arith.constant 0 : i32
    return %c0_i32, %c0_i32_0 : i32, i32
  }
  func.func @transform_5(%arg0: i32, %arg1: i32) -> (i32, i32) {
    %c0_i32 = arith.constant 0 : i32
    %c0_i32_0 = arith.constant 0 : i32
    %c0_i32_1 = arith.constant 0 : i32
    return %c0_i32, %c0_i32_0 : i32, i32
  }
  func.func @transform_6(%arg0: i32, %arg1: i32) -> (i32, i32) {
    %c0_i32 = arith.constant 0 : i32
    %c0_i32_0 = arith.constant 0 : i32
    %c0_i32_1 = arith.constant 0 : i32
    return %c0_i32, %c0_i32_0 : i32, i32
  }
  func.func @transform_7(%arg0: i32, %arg1: i32) -> (i32, i32, i32) {
    %c0_i32 = arith.constant 0 : i32
    %c0_i32_0 = arith.constant 0 : i32
    return %arg0, %c0_i32, %arg1 : i32, i32, i32
  }
  func.func @transform_8(%arg0: i32, %arg1: i32) -> (i32, i32, i32, i32) {
    %c0_i32 = arith.constant 0 : i32
    %c0_i32_0 = arith.constant 0 : i32
    %c0_i32_1 = arith.constant 0 : i32
    return %arg0, %arg1, %c0_i32, %c0_i32_0 : i32, i32, i32, i32
  }
  func.func @transform_9(%arg0: i32, %arg1: i32) -> (i32, i32, i32, i32) {
    %c0_i32 = arith.constant 0 : i32
    %c0_i32_0 = arith.constant 0 : i32
    %c0_i32_1 = arith.constant 0 : i32
    return %arg0, %arg1, %c0_i32, %c0_i32_0 : i32, i32, i32, i32
  }
}

module attributes {stable_mosaic.version = 11 : i64} {
  func.func @_bn_residual_relu_kernel(%arg0: i32, %arg1: i32, %arg2: memref<1x32x256xbf16, #tpu.memory_space<vmem>>, %arg3: memref<1x32x256xf32, #tpu.memory_space<vmem>>, %arg4: memref<32x1xf32, #tpu.memory_space<vmem>>, %arg5: memref<32x1xf32, #tpu.memory_space<vmem>>, %arg6: memref<1x32x256xf32, #tpu.memory_space<vmem>>) attributes {dimension_semantics = [#tpu.dimension_semantics<parallel>, #tpu.dimension_semantics<parallel>], iteration_bounds = array<i64: 2, 1>, scalar_prefetch = 0 : i64, scratch_operands = 0 : i64, tpu.core_type = #tpu.core_type<tc>, window_params = [{transform_indices = @transform_0, window_bounds = array<i64: 1, 32, 256>}, {transform_indices = @transform_1, window_bounds = array<i64: 1, 32, 256>}, {pipeline_mode = #tpu.pipeline_mode<synchronous>, transform_indices = @transform_2, window_bounds = array<i64: 32, 1>}, {pipeline_mode = #tpu.pipeline_mode<synchronous>, transform_indices = @transform_3, window_bounds = array<i64: 32, 1>}, {transform_indices = @transform_4, window_bounds = array<i64: 1, 32, 256>}]} {
    %c0 = arith.constant 0 : index
    %c0_0 = arith.constant 0 : index
    %c0_1 = arith.constant 0 : index
    %0 = vector.load %arg2[%c0, %c0_0, %c0_1] : memref<1x32x256xbf16, #tpu.memory_space<vmem>>, vector<1x32x256xbf16>
    %1 = vector.shape_cast %0 : vector<1x32x256xbf16> to vector<32x256xbf16>
    %2 = arith.extf %1 : vector<32x256xbf16> to vector<32x256xf32>
    %c0_2 = arith.constant 0 : index
    %c0_3 = arith.constant 0 : index
    %3 = vector.load %arg4[%c0_2, %c0_3] : memref<32x1xf32, #tpu.memory_space<vmem>>, vector<32x1xf32>
    %4 = vector.broadcast %3 : vector<32x1xf32> to vector<32x256xf32>
    %5 = arith.mulf %2, %4 : vector<32x256xf32>
    %c0_4 = arith.constant 0 : index
    %c0_5 = arith.constant 0 : index
    %6 = vector.load %arg5[%c0_4, %c0_5] : memref<32x1xf32, #tpu.memory_space<vmem>>, vector<32x1xf32>
    %7 = vector.broadcast %6 : vector<32x1xf32> to vector<32x256xf32>
    %8 = arith.addf %5, %7 : vector<32x256xf32>
    %c0_6 = arith.constant 0 : index
    %c0_7 = arith.constant 0 : index
    %c0_8 = arith.constant 0 : index
    %9 = vector.load %arg3[%c0_6, %c0_7, %c0_8] : memref<1x32x256xf32, #tpu.memory_space<vmem>>, vector<1x32x256xf32>
    %10 = vector.shape_cast %9 : vector<1x32x256xf32> to vector<32x256xf32>
    %11 = arith.addf %8, %10 : vector<32x256xf32>
    %cst = arith.constant 0.000000e+00 : f32
    %12 = vector.broadcast %cst : f32 to vector<32x256xf32>
    %13 = arith.maximumf %11, %12 : vector<32x256xf32>
    %c0_9 = arith.constant 0 : index
    %c0_10 = arith.constant 0 : index
    %c0_11 = arith.constant 0 : index
    %14 = vector.load %arg6[%c0_9, %c0_10, %c0_11] : memref<1x32x256xf32, #tpu.memory_space<vmem>>, vector<1x32x256xf32>
    %15 = vector.shape_cast %14 : vector<1x32x256xf32> to vector<32x256xf32>
    %16 = vector.shape_cast %13 : vector<32x256xf32> to vector<1x32x256xf32>
    tpu.vector_store %arg6[%c0_9, %c0_10, %c0_11], %16 {strides = array<i32>} : memref<1x32x256xf32, #tpu.memory_space<vmem>>, vector<1x32x256xf32>,
    return
  }
  func.func @transform_0(%arg0: i32, %arg1: i32) -> (i32, i32, i32) {
    %c0_i32 = arith.constant 0 : i32
    %c0_i32_0 = arith.constant 0 : i32
    return %arg0, %c0_i32, %arg1 : i32, i32, i32
  }
  func.func @transform_1(%arg0: i32, %arg1: i32) -> (i32, i32, i32) {
    %c0_i32 = arith.constant 0 : i32
    %c0_i32_0 = arith.constant 0 : i32
    return %arg0, %c0_i32, %arg1 : i32, i32, i32
  }
  func.func @transform_2(%arg0: i32, %arg1: i32) -> (i32, i32) {
    %c0_i32 = arith.constant 0 : i32
    %c0_i32_0 = arith.constant 0 : i32
    %c0_i32_1 = arith.constant 0 : i32
    return %c0_i32, %c0_i32_0 : i32, i32
  }
  func.func @transform_3(%arg0: i32, %arg1: i32) -> (i32, i32) {
    %c0_i32 = arith.constant 0 : i32
    %c0_i32_0 = arith.constant 0 : i32
    %c0_i32_1 = arith.constant 0 : i32
    return %c0_i32, %c0_i32_0 : i32, i32
  }
  func.func @transform_4(%arg0: i32, %arg1: i32) -> (i32, i32, i32) {
    %c0_i32 = arith.constant 0 : i32
    %c0_i32_0 = arith.constant 0 : i32
    return %arg0, %c0_i32, %arg1 : i32, i32, i32
  }
}

</mosaic_0001>

<llo_original>
// kernel: resblock2d_forward.6
$region0: #{resblock2d_forward.6}
  #allocation0 [shape = 'u32[]', space=smem, size = 0x4, offset = 0x4, fixed_abs, tag = 'smem constant byte address 0x4 - core index']
  #allocation1 [shape = 'u32[144,128]{1,0:T(1,128)}', space=vmem, size = 0x12000, scoped, tag = 'internal scratch']
  %s0 = inlined_call_operand.vmem [shape: bf16[2,16,256], index: 0, kind: input, shape index: {}]
  %s1 = inlined_call_operand.vmem [shape: bf16[32,16], index: 1, kind: input, shape index: {}]
  %s2 = inlined_call_operand.vmem [shape: f32[16,1], index: 2, kind: input, shape index: {}]
  %s3 = inlined_call_operand.vmem [shape: f32[16,1], index: 3, kind: input, shape index: {}]
  %s4 = inlined_call_operand.vmem [shape: bf16[2,32,256], index: 4, kind: output, shape index: {0}]
  %s5 = inlined_call_operand.vmem [shape: f32[2,1,1,32], index: 5, kind: output, shape index: {1}]
  %s6 = inlined_call_operand.vmem [shape: f32[2,1,1,32], index: 6, kind: output, shape index: {2}]
  %7 = xla_tuple %s4, %s5, %s6
  %s8 = sld [smem:[#allocation0]]
  $region65: #{resblock2d_forward.6} parent=0
    _
  %s10 = ssub.s32 1, %s8
  %s11 = scalar_select 0, %s10, %s8
  loop: start=0, step=1, limit=4
  $region2: #{resblock2d_forward.6} parent=0 // loop_pre_header
    _
  $region3: #{resblock2d_forward.6} parent=0 // loop_header
    %s13 = sphi 0, %s17
    %p14 = scmp.ge.s32.totalorder %s13, 4
    %s20 = sphi 0, %s32
    %s21 = sphi 0, %s28
    %s22 = sphi 0, %s20
    %s23 = sphi 0, %s21
    %s24 = sphi 0, %s22
    %s25 = sphi 0, %s23
    %s37 = sphi 0, %s39
    %s40 = sphi 0, %s37
    %s41 = sphi 0, %s40
    %s57 = sphi 0, %s41
    %s61 = sphi 0, %s61
    %s63 = sphi 0, %s61
    %s64 = sphi 0, %s63
    %s78 = sphi 0, %s64
    %s82 = sphi 0, %s82
    %s84 = sphi 0, %s82
    %s85 = sphi 0, %s84
    %s99 = sphi 0, %s85
    %s103 = sphi 0, %s103
    %s105 = sphi 0, %s103
    %s106 = sphi 0, %s105
    %s120 = sphi 0, %s106
    %s128 = sphi 0, %s130
    %s131 = sphi 0, %s128
    %s132 = sphi 0, %s131
    %s148 = sphi 0, %s132
    %s156 = sphi 0, %s158
    %s159 = sphi 0, %s156
    %s160 = sphi 0, %s159
    %s176 = sphi 0, %s160
    %s184 = sphi 0, %s186
    %s187 = sphi 0, %s184
    %s188 = sphi 0, %s187
    %s204 = sphi 0, %s188
  $region4: #{resblock2d_forward.6} parent=0 // loop_header_branch
    %16 = sbr.rel (%p14) target = $region8
  $region5: #{resblock2d_forward.6} parent=0 // loop_body
    %s18 = ssub.s32 %s13, 1
    %s19 = ssub.s32 %s13, 2
    %s26 = sadd.s32 1, %s21
    %p27 = scmp.ge.s32.totalorder %s26, 1
    %s28 = scalar_select %p27, 0, %s26
    %s29 = sadd.s32 1, %s20
    %s30 = scalar_select %p27, %s29, %s20
    %p31 = scmp.ge.s32.totalorder %s30, 2
    %s32 = scalar_select %p31, 0, %s30
    %s33 = ssub.s32 %s20, %s32
    %s34 = ssub.s32 %s21, %s28
    %s35 = sor.u32 %s33, %s34
    %p36 = scmp.eq.s32.totalorder %s35, 0
    %s38 = sadd.s32 %s37, 1
    %s39 = scalar_select %p36, %s37, %s38
    %p42 = pneg %p36
    %p43 = scmp.eq.s32.totalorder %s13, 1
    %p44 = por %p42, %p43
    %p45 = scmp.ne.s32.totalorder %s37, %s40
    %p46 = scmp.eq.s32.totalorder %s13, 0
    %p47 = por %p45, %p46
    %p48 = scmp.ne.s32.totalorder %s37, %s40
    %p49 = scmp.eq.s32.totalorder %s18, 1
    %p50 = por %p48, %p49
    %p51 = scmp.ne.s32.totalorder %s40, %s41
    %p52 = scmp.eq.s32.totalorder %s18, 0
    %p53 = por %p51, %p52
    %p54 = scmp.ne.s32.totalorder %s40, %s41
    %p55 = scmp.eq.s32.totalorder %s19, 1
    %p56 = por %p54, %p55
    %p58 = scmp.ne.s32.totalorder %s41, %s57
    %p59 = scmp.eq.s32.totalorder %s19, 0
    %p60 = por %p58, %p59
    %s62 = sadd.s32 %s61, 1
    %p65 = scmp.eq.s32.totalorder %s13, 1
    %p66 = scmp.ne.s32.totalorder %s61, %s63
    %p67 = scmp.eq.s32.totalorder %s13, 0
    %p68 = por %p66, %p67
    %p69 = scmp.ne.s32.totalorder %s61, %s63
    %p70 = scmp.eq.s32.totalorder %s18, 1
    %p71 = por %p69, %p70
    %p72 = scmp.ne.s32.totalorder %s63, %s64
    %p73 = scmp.eq.s32.totalorder %s18, 0
    %p74 = por %p72, %p73
    %p75 = scmp.ne.s32.totalorder %s63, %s64
    %p76 = scmp.eq.s32.totalorder %s19, 1
    %p77 = por %p75, %p76
    %p79 = scmp.ne.s32.totalorder %s64, %s78
    %p80 = scmp.eq.s32.totalorder %s19, 0
    %p81 = por %p79, %p80
    %s83 = sadd.s32 %s82, 1
    %p86 = scmp.eq.s32.totalorder %s13, 1
    %p87 = scmp.ne.s32.totalorder %s82, %s84
    %p88 = scmp.eq.s32.totalorder %s13, 0
    %p89 = por %p87, %p88
    %p90 = scmp.ne.s32.totalorder %s82, %s84
    %p91 = scmp.eq.s32.totalorder %s18, 1
    %p92 = por %p90, %p91
    %p93 = scmp.ne.s32.totalorder %s84, %s85
    %p94 = scmp.eq.s32.totalorder %s18, 0
    %p95 = por %p93, %p94
    %p96 = scmp.ne.s32.totalorder %s84, %s85
    %p97 = scmp.eq.s32.totalorder %s19, 1
    %p98 = por %p96, %p97
    %p100 = scmp.ne.s32.totalorder %s85, %s99
    %p101 = scmp.eq.s32.totalorder %s19, 0
    %p102 = por %p100, %p101
    %s104 = sadd.s32 %s103, 1
    %p107 = scmp.eq.s32.totalorder %s13, 1
    %p108 = scmp.ne.s32.totalorder %s103, %s105
    %p109 = scmp.eq.s32.totalorder %s13, 0
    %p110 = por %p108, %p109
    %p111 = scmp.ne.s32.totalorder %s103, %s105
    %p112 = scmp.eq.s32.totalorder %s18, 1
    %p113 = por %p111, %p112
    %p114 = scmp.ne.s32.totalorder %s105, %s106
    %p115 = scmp.eq.s32.totalorder %s18, 0
    %p116 = por %p114, %p115
    %p117 = scmp.ne.s32.totalorder %s105, %s106
    %p118 = scmp.eq.s32.totalorder %s19, 1
    %p119 = por %p117, %p118
    %p121 = scmp.ne.s32.totalorder %s106, %s120
    %p122 = scmp.eq.s32.totalorder %s19, 0
    %p123 = por %p121, %p122
    %s124 = ssub.s32 %s20, %s32
    %s125 = ssub.s32 %s21, %s28
    %s126 = sor.u32 %s124, %s125
    %p127 = scmp.eq.s32.totalorder %s126, 0
    %s129 = sadd.s32 %s128, 1
    %s130 = scalar_select %p127, %s128, %s129
    %p133 = pneg %p127
    %p134 = scmp.eq.s32.totalorder %s13, 1
    %p135 = por %p133, %p134
    %p136 = scmp.ne.s32.totalorder %s128, %s131
    %p137 = scmp.eq.s32.totalorder %s13, 0
    %p138 = por %p136, %p137
    %p139 = scmp.ne.s32.totalorder %s128, %s131
    %p140 = scmp.eq.s32.totalorder %s18, 1
    %p141 = por %p139, %p140
    %p142 = scmp.ne.s32.totalorder %s131, %s132
    %p143 = scmp.eq.s32.totalorder %s18, 0
    %p144 = por %p142, %p143
    %p145 = scmp.ne.s32.totalorder %s131, %s132
    %p146 = scmp.eq.s32.totalorder %s19, 1
    %p147 = por %p145, %p146
    %p149 = scmp.ne.s32.totalorder %s132, %s148
    %p150 = scmp.eq.s32.totalorder %s19, 0
    %p151 = por %p149, %p150
    %s152 = ssub.s32 %s20, %s32
    %s153 = ssub.s32 %s21, %s28
    %s154 = sor.u32 %s152, %s153
    %p155 = scmp.eq.s32.totalorder %s154, 0
    %s157 = sadd.s32 %s156, 1
    %s158 = scalar_select %p155, %s156, %s157
    %p161 = pneg %p155
    %p162 = scmp.eq.s32.totalorder %s13, 1
    %p163 = por %p161, %p162
    %p164 = scmp.ne.s32.totalorder %s156, %s159
    %p165 = scmp.eq.s32.totalorder %s13, 0
    %p166 = por %p164, %p165
    %p167 = scmp.ne.s32.totalorder %s156, %s159
    %p168 = scmp.eq.s32.totalorder %s18, 1
    %p169 = por %p167, %p168
    %p170 = scmp.ne.s32.totalorder %s159, %s160
    %p171 = scmp.eq.s32.totalorder %s18, 0
    %p172 = por %p170, %p171
    %p173 = scmp.ne.s32.totalorder %s159, %s160
    %p174 = scmp.eq.s32.totalorder %s19, 1
    %p175 = por %p173, %p174
    %p177 = scmp.ne.s32.totalorder %s160, %s176
    %p178 = scmp.eq.s32.totalorder %s19, 0
    %p179 = por %p177, %p178
    %s180 = ssub.s32 %s20, %s32
    %s181 = ssub.s32 %s21, %s28
    %s182 = sor.u32 %s180, %s181
    %p183 = scmp.eq.s32.totalorder %s182, 0
    %s185 = sadd.s32 %s184, 1
    %s186 = scalar_select %p183, %s184, %s185
    %p189 = pneg %p183
    %p190 = scmp.eq.s32.totalorder %s13, 1
    %p191 = por %p189, %p190
    %p192 = scmp.ne.s32.totalorder %s184, %s187
    %p193 = scmp.eq.s32.totalorder %s13, 0
    %p194 = por %p192, %p193
    %p195 = scmp.ne.s32.totalorder %s184, %s187
    %p196 = scmp.eq.s32.totalorder %s18, 1
    %p197 = por %p195, %p196
    %p198 = scmp.ne.s32.totalorder %s187, %s188
    %p199 = scmp.eq.s32.totalorder %s18, 0
    %p200 = por %p198, %p199
    %p201 = scmp.ne.s32.totalorder %s187, %s188
    %p202 = scmp.eq.s32.totalorder %s19, 1
    %p203 = por %p201, %p202
    %p205 = scmp.ne.s32.totalorder %s188, %s204
    %p206 = scmp.eq.s32.totalorder %s19, 0
    %p207 = por %p205, %p206
    %p208 = scmp.le.s32.totalorder 1, %s13
    %p209 = scmp.lt.s32.totalorder %s13, 3
    %p210 = pnand %p208, %p209
    %p211 = pneg %p210
    // Predicated region
    $region9: #{resblock2d_forward.6} parent=5 // pred_check
      _
    $region10: #{resblock2d_forward.6} parent=5 // pred_check_branch
      %213 = sbr.rel (%p210) target = $region12
    $region11: #{resblock2d_forward.6} parent=5 // pred_region
      %s214 = ssub.s32 %s13, 1
      // Predicated region
      $region13: #{resblock2d_forward.6} parent=11 // pred_check
        %p215 = pneg %p74
      $region14: #{resblock2d_forward.6} parent=11 // pred_check_branch
        %217 = sbr.rel (%p215) target = $region16
      $region15: #{resblock2d_forward.6} parent=11 // pred_region
        _
      $region16: #{resblock2d_forward.6} parent=11 // pred_fallthru
        _
      // Predicated region
      $region17: #{resblock2d_forward.6} parent=11 // pred_check
        %p218 = pneg %p95
      $region18: #{resblock2d_forward.6} parent=11 // pred_check_branch
        %220 = sbr.rel (%p218) target = $region20
      $region19: #{resblock2d_forward.6} parent=11 // pred_region
        _
      $region20: #{resblock2d_forward.6} parent=11 // pred_fallthru
        _
      // Predicated region
      $region21: #{resblock2d_forward.6} parent=11 // pred_check
        %p221 = pneg %p116
      $region22: #{resblock2d_forward.6} parent=11 // pred_check_branch
        %223 = sbr.rel (%p221) target = $region24
      $region23: #{resblock2d_forward.6} parent=11 // pred_region
        _
      $region24: #{resblock2d_forward.6} parent=11 // pred_fallthru
        _
    $region12: #{resblock2d_forward.6} parent=5 // pred_fallthru
      _
    %p224 = scmp.lt.s32.totalorder %s13, 2
    // Predicated region
    $region25: #{resblock2d_forward.6} parent=5 // pred_check
      %p225 = pneg %p224
    $region26: #{resblock2d_forward.6} parent=5 // pred_check_branch
      %227 = sbr.rel (%p225) target = $region28
    $region27: #{resblock2d_forward.6} parent=5 // pred_region
      // Predicated region
      $region29: #{resblock2d_forward.6} parent=27 // pred_check
        %p228 = pneg %p47
      $region30: #{resblock2d_forward.6} parent=27 // pred_check_branch
        %230 = sbr.rel (%p228) target = $region32
      $region31: #{resblock2d_forward.6} parent=27 // pred_region
        %s231 = smul.u32 2, %s21
        %p232 = scmp.lt.s32.totalorder %s20, 1
        %s233 = scalar_select %p232, %s20, 1
        %p234 = scmp.lt.s32.totalorder %s231, 1
        %s235 = scalar_select %p234, %s231, 1
        %s236 = smul.addr %s233, 4
        %s237 = sadd.s32 %s235, %s236
        %s238 = smul.addr %s237, 4
        %s239 = scalar_lea.vmem %s0, %s238
        %s240 = smul.u32 2, %s21
      $region32: #{resblock2d_forward.6} parent=27 // pred_fallthru
        _
    $region28: #{resblock2d_forward.6} parent=5 // pred_fallthru
      _
    %p241 = scmp.le.s32.totalorder 1, %s13
    %p242 = scmp.lt.s32.totalorder %s13, 3
    %p243 = pnand %p241, %p242
    %p244 = pneg %p243
    // Predicated region
    $region33: #{resblock2d_forward.6} parent=5 // pred_check
      _
    $region34: #{resblock2d_forward.6} parent=5 // pred_check_branch
      %246 = sbr.rel (%p243) target = $region36
    $region35: #{resblock2d_forward.6} parent=5 // pred_region
      %s247 = ssub.s32 %s13, 1
      %s248 = smul.u32 2, %s23
      %p249 = scmp.lt.s32.totalorder %s22, 1
      %s250 = scalar_select %p249, %s22, 1
      %p251 = scmp.lt.s32.totalorder %s248, 1
      %s252 = scalar_select %p251, %s248, 1
      %s253 = smul.addr %s250, 4
      %s254 = sadd.s32 %s252, %s253
      %s255 = smul.addr %s254, 4
      %s256 = scalar_lea.vmem %s0, %s255
      %p257 = pneg %p53
      %p258 = pneg %p50
      %p259 = pneg %p74
      %p260 = pneg %p71
      %p261 = pneg %p95
      %p262 = pneg %p92
      %p263 = pneg %p116
      %p264 = pneg %p113
      %p265 = pneg %p144
      %p266 = pneg %p141
      %s267 = smul.u32 2, %s23
      %p268 = scmp.lt.s32.totalorder %s22, 1
      %s269 = scalar_select %p268, %s22, 1
      %p270 = scmp.lt.s32.totalorder %s267, 1
      %s271 = scalar_select %p270, %s267, 1
      %s272 = smul.addr %s269, 8
      %s273 = sadd.s32 %s271, %s272
      %s274 = smul.addr %s273, 4
      %s275 = scalar_lea.vmem %s4, %s274
      %p276 = pneg %p172
      %p277 = pneg %p169
      %p278 = scmp.lt.s32.totalorder %s22, 1
      %s279 = scalar_select %p278, %s22, 1
      %p280 = scmp.lt.s32.totalorder %s23, 0
      %s281 = scalar_select %p280, %s23, 0
      %s282 = sadd.s32 %s281, %s279
      %s283 = scalar_lea.vmem %s5, %s282
      %p284 = pneg %p200
      %p285 = pneg %p197
      %p286 = scmp.lt.s32.totalorder %s22, 1
      %s287 = scalar_select %p286, %s22, 1
      %p288 = scmp.lt.s32.totalorder %s23, 0
      %s289 = scalar_select %p288, %s23, 0
      %s290 = sadd.s32 %s289, %s287
      %s291 = scalar_lea.vmem %s6, %s290
      %s292 = smul.u32 2, %s23
      %p293 = scmp.lt.s32.totalorder %s22, 1
      %s294 = scalar_select %p293, %s22, 1
      %p295 = scmp.lt.s32.totalorder %s292, 1
      %s296 = scalar_select %p295, %s292, 1
      %s297 = smul.addr %s294, 4
      %s298 = sadd.s32 %s296, %s297
      %s299 = smul.addr %s298, 4
      %s300 = scalar_lea.vmem %s0, %s299
      %s301 = smul.u32 2, %s23
      %s302 = smul.u32 2, %s23
      %p303 = scmp.lt.s32.totalorder %s22, 1
      %s304 = scalar_select %p303, %s22, 1
      %p305 = scmp.lt.s32.totalorder %s302, 1
      %s306 = scalar_select %p305, %s302, 1
      %s307 = smul.addr %s304, 8
      %s308 = sadd.s32 %s306, %s307
      %s309 = smul.addr %s308, 4
      %s310 = scalar_lea.vmem %s4, %s309
      %s311 = smul.u32 2, %s23
      %p312 = scmp.lt.s32.totalorder %s22, 1
      %s313 = scalar_select %p312, %s22, 1
      %p314 = scmp.lt.s32.totalorder %s23, 0
      %s315 = scalar_select %p314, %s23, 0
      %s316 = sadd.s32 %s315, %s313
      %s317 = scalar_lea.vmem %s5, %s316
      %p318 = scmp.lt.s32.totalorder %s22, 1
      %s319 = scalar_select %p318, %s22, 1
      %p320 = scmp.lt.s32.totalorder %s23, 0
      %s321 = scalar_select %p320, %s23, 0
      %s322 = sadd.s32 %s321, %s319
      %s323 = scalar_lea.vmem %s6, %s322
      %v325 = vld [vmem:[%s300] sm:$0xff]
      %v326 = vld [vmem:[%s300 + $0x8] sm:$0xff]
      %v327 = vunpack.c.l.bf16 %v325
      %v328 = vunpack.c.h.bf16 %v325
      %v329 = vunpack.c.l.bf16 %v326
      %v330 = vunpack.c.h.bf16 %v326
      %v331 = vld [vmem:[%s2] sm:$0xff]
      %v332 = vld [vmem:[%s2 + $0x8] sm:$0xff]
      %334 = vset.pattern.permute.xlu0 0
      %335 = vperm.xlu0 %334, %v331
      %v336 = vpop.permute.xlu0 %335
      %339 = vset.pattern.permute.xlu0 0
      %340 = vperm.xlu0 %339, %v332
      %v341 = vpop.permute.xlu0 %340
      %v343 = vmul.f32 %v327, %v336
      %v344 = vmul.f32 %v328, %v336
      %v345 = vmul.f32 %v329, %v341
      %v346 = vmul.f32 %v330, %v341
      %v347 = vld [vmem:[%s3] sm:$0xff]
      %v348 = vld [vmem:[%s3 + $0x8] sm:$0xff]
      %350 = vset.pattern.permute.xlu0 0
      %351 = vperm.xlu0 %350, %v347
      %v352 = vpop.permute.xlu0 %351
      %355 = vset.pattern.permute.xlu0 0
      %356 = vperm.xlu0 %355, %v348
      %v357 = vpop.permute.xlu0 %356
      %v359 = vadd.f32 %v343, %v352
      %v360 = vadd.f32 %v344, %v352
      %v361 = vadd.f32 %v345, %v357
      %v362 = vadd.f32 %v346, %v357
      %v363 = vmax.f32 %v359, 0.0
      %v364 = vmax.f32 %v360, 0.0
      %v365 = vmax.f32 %v361, 0.0
      %v366 = vmax.f32 %v362, 0.0
      %v367 = vld [vmem:[%s1] sm:$0xf]
      %v368 = vld [vmem:[%s1 + $0x4] sm:$0xf]
      %v369 = vld [vmem:[%s1 + $0x8] sm:$0xf]
      %v370 = vld [vmem:[%s1 + $0xc] sm:$0xf]
      %v371 = vpack.c.bf16 %v365, %v363
      %v372 = vpack.c.bf16 %v366, %v364
      %v377 = vunpack.c.l.b16 %v367
      %v378 = vunpack.c.l.b16 %v368
      %v379 = vunpack.c.l.b16 %v369
      %v380 = vunpack.c.l.b16 %v370
      %v381 = vpack.c.b16 %v378, %v377
      %v382 = vpack.c.b16 %v380, %v379
      %vm383 = vcmask 130048
      %v385 = vsel %vm383, %v381, 0
      %v388 = vsel %vm383, %v382, 0
      %390 = vmatprep.subr.bf16.mxu0 %v372
      %391 = vmatpush1.bf16.msra.mxu0 %v371
      %392 = vmatprep.subr.bf16.mxu0 0
      %393 = vmatpush1.bf16.msra.mxu0 0
      %394 = vmatprep.subr.bf16.mxu0 0
      %395 = vmatpush1.bf16.msra.mxu0 0
      %396 = vmatprep.subr.bf16.mxu0 0
      %397 = vmatpush1.bf16.msra.mxu0 0
      %398 = vmatprep.subr.bf16.mxu0 0
      %399 = vmatpush1.bf16.msra.mxu0 0
      %400 = vmatprep.subr.bf16.mxu0 0
      %401 = vmatpush1.bf16.msra.mxu0 0
      %402 = vmatprep.subr.bf16.mxu0 0
      %403 = vmatpush1.bf16.msra.mxu0 0
      %404 = vmatprep.subr.bf16.mxu0 0
      %405 = vmatpush1.bf16.msra.mxu0 0
      %406 = vmatprep.subr.bf16.mxu0 0
      %407 = vmatpush1.bf16.msra.mxu0 0
      %408 = vmatprep.subr.bf16.mxu0 0
      %409 = vmatpush1.bf16.msra.mxu0 0
      %410 = vmatprep.subr.bf16.mxu0 0
      %411 = vmatpush1.bf16.msra.mxu0 0
      %412 = vmatprep.subr.bf16.mxu0 0
      %413 = vmatpush1.bf16.msra.mxu0 0
      %414 = vmatprep.subr.bf16.mxu0 0
      %415 = vmatpush1.bf16.msra.mxu0 0
      %416 = vmatprep.subr.bf16.mxu0 0
      %417 = vmatpush1.bf16.msra.mxu0 0
      %418 = vmatprep.subr.bf16.mxu0 0
      %419 = vmatpush1.bf16.msra.mxu0 0
      %420 = vmatprep.subr.bf16.mxu0 0
      %421 = vmatpush1.bf16.msra.mxu0 0
      %422 = vmatprep.mubr.bf16.mxu0 0
      %423 = vmatmul.mubr.bf16.gmra.mrb[0].mxu0 %v385
      %v424 = vpop.f32.mrb[0].mxu0
      %v425 = vadd.f32 0.0, %v424
      %v426 = vpop.f32.mrb[0].mxu0
      %v427 = vadd.f32 0.0, %v426
      %v428 = vpop.f32.mrb[0].mxu0
      %v429 = vadd.f32 0.0, %v428
      %v430 = vpop.f32.mrb[0].mxu0
      %v431 = vadd.f32 0.0, %v430
      %432 = vmatprep.mubr.bf16.mxu0 0
      %433 = vmatmul.mubr.bf16.gmra.mrb[0].mxu0 %v388
      %v434 = vpop.f32.mrb[0].mxu0
      %v435 = vadd.f32 0.0, %v434
      %v436 = vpop.f32.mrb[0].mxu0
      %v437 = vadd.f32 0.0, %v436
      %v438 = vpop.f32.mrb[0].mxu0
      %v439 = vadd.f32 0.0, %v438
      %v440 = vpop.f32.mrb[0].mxu0
      %v441 = vadd.f32 0.0, %v440
      %442 = vdwg.mxu0
      %v443 = vpack.c.bf16 %v429, %v425
      %v444 = vpack.c.bf16 %v431, %v427
      %v445 = vpack.c.bf16 %v439, %v435
      %v446 = vpack.c.bf16 %v441, %v437
      %v451 = vunpack.c.l.b16 %v443
      %v452 = vunpack.c.l.b16 %v444
      %v453 = vunpack.c.h.b16 %v443
      %v454 = vunpack.c.h.b16 %v444
      %v455 = vunpack.c.l.b16 %v445
      %v456 = vunpack.c.l.b16 %v446
      %v457 = vunpack.c.h.b16 %v445
      %v458 = vunpack.c.h.b16 %v446
      %v459 = vpack.c.b16 %v452, %v451
      %v460 = vpack.c.b16 %v454, %v453
      %v461 = vpack.c.b16 %v456, %v455
      %v462 = vpack.c.b16 %v458, %v457
      %467 = vst [vmem:[%s310] sm:$0xff] %v459
      %468 = vst [vmem:[%s310 + $0x8] sm:$0xff] %v460
      %469 = vst [vmem:[%s310 + $0x10] sm:$0xff] %v461
      %470 = vst [vmem:[%s310 + $0x18] sm:$0xff] %v462
      %v471 = vadd.f32 %v425, %v427
      %472 = vadd.xlane.f32.xlu0 %v471
      %v473 = vpop.xlane.xlu0 %472
      %v474 = vadd.f32 %v429, %v431
      %475 = vadd.xlane.f32.xlu0 %v474
      %v476 = vpop.xlane.xlu0 %475
      %v477 = vadd.f32 %v435, %v437
      %478 = vadd.xlane.f32.xlu0 %v477
      %v479 = vpop.xlane.xlu0 %478
      %v480 = vadd.f32 %v439, %v441
      %481 = vadd.xlane.f32.xlu0 %v480
      %v482 = vpop.xlane.xlu0 %481
      %v487 = vlaneseq
      %v488 = vand.u32 %v487, 127
      %v489 = vlaneseq
      %v490 = vshrl.u32 %v489, 7
      %v491 = vsub.s32 %v488, %v490
      %v492 = vrot.slane %v473, %v491
      %v493 = vadd.s32 %v488, 4294967288
      %v494 = vlaneseq
      %v495 = vshrl.u32 %v494, 7
      %v496 = vsub.s32 %v493, %v495
      %v497 = vrot.slane %v476, %v496
      %vm498 = vcmask 130112
      %v499 = vsel %vm498, %v497, %v492
      %v500 = vadd.s32 %v488, 4294967280
      %v501 = vlaneseq
      %v502 = vshrl.u32 %v501, 7
      %v503 = vsub.s32 %v500, %v502
      %v504 = vrot.slane %v479, %v503
      %vm505 = vcmask 195712
      %v506 = vsel %vm505, %v504, %v499
      %v507 = vadd.s32 %v488, 4294967272
      %v508 = vlaneseq
      %v509 = vshrl.u32 %v508, 7
      %v510 = vsub.s32 %v507, %v509
      %v511 = vrot.slane %v482, %v510
      %vm512 = vcmask 261312
      %v513 = vsel %vm512, %v511, %v506
      %vm515 = vcmask 253952
      %516 = vst.msk [vmem:[%s317] sm:$0x1] %vm515, %v513
      %v517 = vmul.f32 %v425, %v425
      %v518 = vmul.f32 %v427, %v427
      %v519 = vmul.f32 %v429, %v429
      %v520 = vmul.f32 %v431, %v431
      %v521 = vmul.f32 %v435, %v435
      %v522 = vmul.f32 %v437, %v437
      %v523 = vmul.f32 %v439, %v439
      %v524 = vmul.f32 %v441, %v441
      %v525 = vadd.f32 %v517, %v518
      %526 = vadd.xlane.f32.xlu0 %v525
      %v527 = vpop.xlane.xlu0 %526
      %v528 = vadd.f32 %v519, %v520
      %529 = vadd.xlane.f32.xlu0 %v528
      %v530 = vpop.xlane.xlu0 %529
      %v531 = vadd.f32 %v521, %v522
      %532 = vadd.xlane.f32.xlu0 %v531
      %v533 = vpop.xlane.xlu0 %532
      %v534 = vadd.f32 %v523, %v524
      %535 = vadd.xlane.f32.xlu0 %v534
      %v536 = vpop.xlane.xlu0 %535
      %v541 = vlaneseq
      %v542 = vshrl.u32 %v541, 7
      %v543 = vsub.s32 %v488, %v542
      %v544 = vrot.slane %v527, %v543
      %v545 = vlaneseq
      %v546 = vshrl.u32 %v545, 7
      %v547 = vsub.s32 %v493, %v546
      %v548 = vrot.slane %v530, %v547
      %v549 = vsel %vm498, %v548, %v544
      %v550 = vlaneseq
      %v551 = vshrl.u32 %v550, 7
      %v552 = vsub.s32 %v500, %v551
      %v553 = vrot.slane %v533, %v552
      %v554 = vsel %vm505, %v553, %v549
      %v555 = vlaneseq
      %v556 = vshrl.u32 %v555, 7
      %v557 = vsub.s32 %v507, %v556
      %v558 = vrot.slane %v536, %v557
      %v559 = vsel %vm512, %v558, %v554
      %561 = vst.msk [vmem:[%s323] sm:$0x1] %vm515, %v559
      %s562 = smul.u32 2, %s23
      %p563 = scmp.lt.s32.totalorder %s22, 1
      %s564 = scalar_select %p563, %s22, 1
      %p565 = scmp.lt.s32.totalorder %s562, 1
      %s566 = scalar_select %p565, %s562, 1
      %s567 = smul.addr %s564, 8
      %s568 = sadd.s32 %s566, %s567
      %s569 = smul.addr %s568, 4
      %s570 = scalar_lea.vmem %s4, %s569
      %p571 = scmp.lt.s32.totalorder %s22, 1
      %s572 = scalar_select %p571, %s22, 1
      %p573 = scmp.lt.s32.totalorder %s23, 0
      %s574 = scalar_select %p573, %s23, 0
      %s575 = sadd.s32 %s574, %s572
      %s576 = scalar_lea.vmem %s5, %s575
      %p577 = scmp.lt.s32.totalorder %s22, 1
      %s578 = scalar_select %p577, %s22, 1
      %p579 = scmp.lt.s32.totalorder %s23, 0
      %s580 = scalar_select %p579, %s23, 0
      %s581 = sadd.s32 %s580, %s578
      %s582 = scalar_lea.vmem %s6, %s581
      // Predicated region
      $region37: #{resblock2d_forward.6} parent=35 // pred_check
        %p583 = pneg %p141
      $region38: #{resblock2d_forward.6} parent=35 // pred_check_branch
        %585 = sbr.rel (%p583) target = $region40
      $region39: #{resblock2d_forward.6} parent=35 // pred_region
        %s586 = smul.u32 2, %s23
      $region40: #{resblock2d_forward.6} parent=35 // pred_fallthru
        _
      // Predicated region
      $region41: #{resblock2d_forward.6} parent=35 // pred_check
        %p587 = pneg %p169
      $region42: #{resblock2d_forward.6} parent=35 // pred_check_branch
        %589 = sbr.rel (%p587) target = $region44
      $region43: #{resblock2d_forward.6} parent=35 // pred_region
        _
      $region44: #{resblock2d_forward.6} parent=35 // pred_fallthru
        _
      // Predicated region
      $region45: #{resblock2d_forward.6} parent=35 // pred_check
        %p590 = pneg %p197
      $region46: #{resblock2d_forward.6} parent=35 // pred_check_branch
        %592 = sbr.rel (%p590) target = $region48
      $region47: #{resblock2d_forward.6} parent=35 // pred_region
        _
      $region48: #{resblock2d_forward.6} parent=35 // pred_fallthru
        _
    $region36: #{resblock2d_forward.6} parent=5 // pred_fallthru
      _
    %p593 = scmp.le.s32.totalorder 2, %s13
    // Predicated region
    $region49: #{resblock2d_forward.6} parent=5 // pred_check
      %p594 = pneg %p593
    $region50: #{resblock2d_forward.6} parent=5 // pred_check_branch
      %596 = sbr.rel (%p594) target = $region52
    $region51: #{resblock2d_forward.6} parent=5 // pred_region
      %s597 = ssub.s32 %s13, 2
      // Predicated region
      $region53: #{resblock2d_forward.6} parent=51 // pred_check
        %p598 = pneg %p147
      $region54: #{resblock2d_forward.6} parent=51 // pred_check_branch
        %600 = sbr.rel (%p598) target = $region56
      $region55: #{resblock2d_forward.6} parent=51 // pred_region
        %s601 = smul.u32 2, %s25
        %p602 = scmp.lt.s32.totalorder %s24, 1
        %s603 = scalar_select %p602, %s24, 1
        %p604 = scmp.lt.s32.totalorder %s601, 1
        %s605 = scalar_select %p604, %s601, 1
        %s606 = smul.addr %s603, 8
        %s607 = sadd.s32 %s605, %s606
        %s608 = smul.addr %s607, 4
        %s609 = scalar_lea.vmem %s4, %s608
      $region56: #{resblock2d_forward.6} parent=51 // pred_fallthru
        _
      // Predicated region
      $region57: #{resblock2d_forward.6} parent=51 // pred_check
        %p610 = pneg %p175
      $region58: #{resblock2d_forward.6} parent=51 // pred_check_branch
        %612 = sbr.rel (%p610) target = $region60
      $region59: #{resblock2d_forward.6} parent=51 // pred_region
        %p613 = scmp.lt.s32.totalorder %s24, 1
        %s614 = scalar_select %p613, %s24, 1
        %p615 = scmp.lt.s32.totalorder %s25, 0
        %s616 = scalar_select %p615, %s25, 0
        %s617 = sadd.s32 %s616, %s614
        %s618 = scalar_lea.vmem %s5, %s617
      $region60: #{resblock2d_forward.6} parent=51 // pred_fallthru
        _
      // Predicated region
      $region61: #{resblock2d_forward.6} parent=51 // pred_check
        %p619 = pneg %p203
      $region62: #{resblock2d_forward.6} parent=51 // pred_check_branch
        %621 = sbr.rel (%p619) target = $region64
      $region63: #{resblock2d_forward.6} parent=51 // pred_region
        %p622 = scmp.lt.s32.totalorder %s24, 1
        %s623 = scalar_select %p622, %s24, 1
        %p624 = scmp.lt.s32.totalorder %s25, 0
        %s625 = scalar_select %p624, %s25, 0
        %s626 = sadd.s32 %s625, %s623
        %s627 = scalar_lea.vmem %s6, %s626
      $region64: #{resblock2d_forward.6} parent=51 // pred_fallthru
        _
    $region52: #{resblock2d_forward.6} parent=5 // pred_fallthru
      _
  $region6: #{resblock2d_forward.6} parent=0 // loop_footer
    %s17 = sadd.s32 1, %s13
  $region7: #{resblock2d_forward.6} parent=0 // loop_footer_branch
    %12 = sbr.rel target = $region3
  $region8: #{resblock2d_forward.6} parent=0 // loop_exit
    _

// kernel: resblock2d_forward.7
$region0: #{resblock2d_forward.7}
  #allocation0 [shape = 'u32[]', space=smem, size = 0x4, offset = 0x4, fixed_abs, tag = 'smem constant byte address 0x4 - core index']
  #allocation1 [shape = 'u32[144,128]{1,0:T(1,128)}', space=vmem, size = 0x12000, scoped, tag = 'internal scratch']
  %s0 = inlined_call_operand.vmem [shape: bf16[2,32,256], index: 0, kind: input, shape index: {}]
  %s1 = inlined_call_operand.vmem [shape: f32[2,32,256], index: 1, kind: input, shape index: {}]
  %s2 = inlined_call_operand.vmem [shape: f32[32,1], index: 2, kind: input, shape index: {}]
  %s3 = inlined_call_operand.vmem [shape: f32[32,1], index: 3, kind: input, shape index: {}]
  %s4 = inlined_call_operand.vmem [shape: f32[2,32,256], index: 4, kind: output, shape index: {}]
  %s5 = sld [smem:[#allocation0]]
  $region49: #{resblock2d_forward.7} parent=0
    _
  %s7 = ssub.s32 1, %s5
  %s8 = scalar_select 0, %s7, %s5
  loop: start=0, step=1, limit=4
  $region2: #{resblock2d_forward.7} parent=0 // loop_pre_header
    _
  $region3: #{resblock2d_forward.7} parent=0 // loop_header
    %s10 = sphi 0, %s14
    %p11 = scmp.ge.s32.totalorder %s10, 4
    %s17 = sphi 0, %s29
    %s18 = sphi 0, %s25
    %s19 = sphi 0, %s17
    %s20 = sphi 0, %s18
    %s21 = sphi 0, %s19
    %s22 = sphi 0, %s20
    %s34 = sphi 0, %s36
    %s37 = sphi 0, %s34
    %s38 = sphi 0, %s37
    %s54 = sphi 0, %s38
    %s62 = sphi 0, %s64
    %s65 = sphi 0, %s62
    %s66 = sphi 0, %s65
    %s82 = sphi 0, %s66
    %s86 = sphi 0, %s86
    %s88 = sphi 0, %s86
    %s89 = sphi 0, %s88
    %s103 = sphi 0, %s89
    %s107 = sphi 0, %s107
    %s109 = sphi 0, %s107
    %s110 = sphi 0, %s109
    %s124 = sphi 0, %s110
    %s132 = sphi 0, %s134
    %s135 = sphi 0, %s132
    %s136 = sphi 0, %s135
    %s152 = sphi 0, %s136
  $region4: #{resblock2d_forward.7} parent=0 // loop_header_branch
    %13 = sbr.rel (%p11) target = $region8
  $region5: #{resblock2d_forward.7} parent=0 // loop_body
    %s15 = ssub.s32 %s10, 1
    %s16 = ssub.s32 %s10, 2
    %s23 = sadd.s32 1, %s18
    %p24 = scmp.ge.s32.totalorder %s23, 1
    %s25 = scalar_select %p24, 0, %s23
    %s26 = sadd.s32 1, %s17
    %s27 = scalar_select %p24, %s26, %s17
    %p28 = scmp.ge.s32.totalorder %s27, 2
    %s29 = scalar_select %p28, 0, %s27
    %s30 = ssub.s32 %s17, %s29
    %s31 = ssub.s32 %s18, %s25
    %s32 = sor.u32 %s30, %s31
    %p33 = scmp.eq.s32.totalorder %s32, 0
    %s35 = sadd.s32 %s34, 1
    %s36 = scalar_select %p33, %s34, %s35
    %p39 = pneg %p33
    %p40 = scmp.eq.s32.totalorder %s10, 1
    %p41 = por %p39, %p40
    %p42 = scmp.ne.s32.totalorder %s34, %s37
    %p43 = scmp.eq.s32.totalorder %s10, 0
    %p44 = por %p42, %p43
    %p45 = scmp.ne.s32.totalorder %s34, %s37
    %p46 = scmp.eq.s32.totalorder %s15, 1
    %p47 = por %p45, %p46
    %p48 = scmp.ne.s32.totalorder %s37, %s38
    %p49 = scmp.eq.s32.totalorder %s15, 0
    %p50 = por %p48, %p49
    %p51 = scmp.ne.s32.totalorder %s37, %s38
    %p52 = scmp.eq.s32.totalorder %s16, 1
    %p53 = por %p51, %p52
    %p55 = scmp.ne.s32.totalorder %s38, %s54
    %p56 = scmp.eq.s32.totalorder %s16, 0
    %p57 = por %p55, %p56
    %s58 = ssub.s32 %s17, %s29
    %s59 = ssub.s32 %s18, %s25
    %s60 = sor.u32 %s58, %s59
    %p61 = scmp.eq.s32.totalorder %s60, 0
    %s63 = sadd.s32 %s62, 1
    %s64 = scalar_select %p61, %s62, %s63
    %p67 = pneg %p61
    %p68 = scmp.eq.s32.totalorder %s10, 1
    %p69 = por %p67, %p68
    %p70 = scmp.ne.s32.totalorder %s62, %s65
    %p71 = scmp.eq.s32.totalorder %s10, 0
    %p72 = por %p70, %p71
    %p73 = scmp.ne.s32.totalorder %s62, %s65
    %p74 = scmp.eq.s32.totalorder %s15, 1
    %p75 = por %p73, %p74
    %p76 = scmp.ne.s32.totalorder %s65, %s66
    %p77 = scmp.eq.s32.totalorder %s15, 0
    %p78 = por %p76, %p77
    %p79 = scmp.ne.s32.totalorder %s65, %s66
    %p80 = scmp.eq.s32.totalorder %s16, 1
    %p81 = por %p79, %p80
    %p83 = scmp.ne.s32.totalorder %s66, %s82
    %p84 = scmp.eq.s32.totalorder %s16, 0
    %p85 = por %p83, %p84
    %s87 = sadd.s32 %s86, 1
    %p90 = scmp.eq.s32.totalorder %s10, 1
    %p91 = scmp.ne.s32.totalorder %s86, %s88
    %p92 = scmp.eq.s32.totalorder %s10, 0
    %p93 = por %p91, %p92
    %p94 = scmp.ne.s32.totalorder %s86, %s88
    %p95 = scmp.eq.s32.totalorder %s15, 1
    %p96 = por %p94, %p95
    %p97 = scmp.ne.s32.totalorder %s88, %s89
    %p98 = scmp.eq.s32.totalorder %s15, 0
    %p99 = por %p97, %p98
    %p100 = scmp.ne.s32.totalorder %s88, %s89
    %p101 = scmp.eq.s32.totalorder %s16, 1
    %p102 = por %p100, %p101
    %p104 = scmp.ne.s32.totalorder %s89, %s103
    %p105 = scmp.eq.s32.totalorder %s16, 0
    %p106 = por %p104, %p105
    %s108 = sadd.s32 %s107, 1
    %p111 = scmp.eq.s32.totalorder %s10, 1
    %p112 = scmp.ne.s32.totalorder %s107, %s109
    %p113 = scmp.eq.s32.totalorder %s10, 0
    %p114 = por %p112, %p113
    %p115 = scmp.ne.s32.totalorder %s107, %s109
    %p116 = scmp.eq.s32.totalorder %s15, 1
    %p117 = por %p115, %p116
    %p118 = scmp.ne.s32.totalorder %s109, %s110
    %p119 = scmp.eq.s32.totalorder %s15, 0
    %p120 = por %p118, %p119
    %p121 = scmp.ne.s32.totalorder %s109, %s110
    %p122 = scmp.eq.s32.totalorder %s16, 1
    %p123 = por %p121, %p122
    %p125 = scmp.ne.s32.totalorder %s110, %s124
    %p126 = scmp.eq.s32.totalorder %s16, 0
    %p127 = por %p125, %p126
    %s128 = ssub.s32 %s17, %s29
    %s129 = ssub.s32 %s18, %s25
    %s130 = sor.u32 %s128, %s129
    %p131 = scmp.eq.s32.totalorder %s130, 0
    %s133 = sadd.s32 %s132, 1
    %s134 = scalar_select %p131, %s132, %s133
    %p137 = pneg %p131
    %p138 = scmp.eq.s32.totalorder %s10, 1
    %p139 = por %p137, %p138
    %p140 = scmp.ne.s32.totalorder %s132, %s135
    %p141 = scmp.eq.s32.totalorder %s10, 0
    %p142 = por %p140, %p141
    %p143 = scmp.ne.s32.totalorder %s132, %s135
    %p144 = scmp.eq.s32.totalorder %s15, 1
    %p145 = por %p143, %p144
    %p146 = scmp.ne.s32.totalorder %s135, %s136
    %p147 = scmp.eq.s32.totalorder %s15, 0
    %p148 = por %p146, %p147
    %p149 = scmp.ne.s32.totalorder %s135, %s136
    %p150 = scmp.eq.s32.totalorder %s16, 1
    %p151 = por %p149, %p150
    %p153 = scmp.ne.s32.totalorder %s136, %s152
    %p154 = scmp.eq.s32.totalorder %s16, 0
    %p155 = por %p153, %p154
    %p156 = scmp.le.s32.totalorder 1, %s10
    %p157 = scmp.lt.s32.totalorder %s10, 3
    %p158 = pnand %p156, %p157
    %p159 = pneg %p158
    // Predicated region
    $region9: #{resblock2d_forward.7} parent=5 // pred_check
      _
    $region10: #{resblock2d_forward.7} parent=5 // pred_check_branch
      %161 = sbr.rel (%p158) target = $region12
    $region11: #{resblock2d_forward.7} parent=5 // pred_region
      %s162 = ssub.s32 %s10, 1
      // Predicated region
      $region13: #{resblock2d_forward.7} parent=11 // pred_check
        %p163 = pneg %p99
      $region14: #{resblock2d_forward.7} parent=11 // pred_check_branch
        %165 = sbr.rel (%p163) target = $region16
      $region15: #{resblock2d_forward.7} parent=11 // pred_region
        _
      $region16: #{resblock2d_forward.7} parent=11 // pred_fallthru
        _
      // Predicated region
      $region17: #{resblock2d_forward.7} parent=11 // pred_check
        %p166 = pneg %p120
      $region18: #{resblock2d_forward.7} parent=11 // pred_check_branch
        %168 = sbr.rel (%p166) target = $region20
      $region19: #{resblock2d_forward.7} parent=11 // pred_region
        _
      $region20: #{resblock2d_forward.7} parent=11 // pred_fallthru
        _
    $region12: #{resblock2d_forward.7} parent=5 // pred_fallthru
      _
    %p169 = scmp.lt.s32.totalorder %s10, 2
    // Predicated region
    $region21: #{resblock2d_forward.7} parent=5 // pred_check
      %p170 = pneg %p169
    $region22: #{resblock2d_forward.7} parent=5 // pred_check_branch
      %172 = sbr.rel (%p170) target = $region24
    $region23: #{resblock2d_forward.7} parent=5 // pred_region
      // Predicated region
      $region25: #{resblock2d_forward.7} parent=23 // pred_check
        %p173 = pneg %p44
      $region26: #{resblock2d_forward.7} parent=23 // pred_check_branch
        %175 = sbr.rel (%p173) target = $region28
      $region27: #{resblock2d_forward.7} parent=23 // pred_region
        %s176 = smul.u32 2, %s18
        %p177 = scmp.lt.s32.totalorder %s17, 1
        %s178 = scalar_select %p177, %s17, 1
        %p179 = scmp.lt.s32.totalorder %s176, 1
        %s180 = scalar_select %p179, %s176, 1
        %s181 = smul.addr %s178, 8
        %s182 = sadd.s32 %s180, %s181
        %s183 = smul.addr %s182, 4
        %s184 = scalar_lea.vmem %s0, %s183
        %s185 = smul.u32 2, %s18
      $region28: #{resblock2d_forward.7} parent=23 // pred_fallthru
        _
      // Predicated region
      $region29: #{resblock2d_forward.7} parent=23 // pred_check
        %p186 = pneg %p72
      $region30: #{resblock2d_forward.7} parent=23 // pred_check_branch
        %188 = sbr.rel (%p186) target = $region32
      $region31: #{resblock2d_forward.7} parent=23 // pred_region
        %s189 = smul.u32 2, %s18
        %p190 = scmp.lt.s32.totalorder %s17, 1
        %s191 = scalar_select %p190, %s17, 1
        %p192 = scmp.lt.s32.totalorder %s189, 1
        %s193 = scalar_select %p192, %s189, 1
        %s194 = smul.addr %s191, 8
        %s195 = sadd.s32 %s193, %s194
        %s196 = smul.addr %s195, 8
        %s197 = scalar_lea.vmem %s1, %s196
        %s198 = smul.u32 2, %s18
      $region32: #{resblock2d_forward.7} parent=23 // pred_fallthru
        _
    $region24: #{resblock2d_forward.7} parent=5 // pred_fallthru
      _
    %p199 = scmp.le.s32.totalorder 1, %s10
    %p200 = scmp.lt.s32.totalorder %s10, 3
    %p201 = pnand %p199, %p200
    %p202 = pneg %p201
    // Predicated region
    $region33: #{resblock2d_forward.7} parent=5 // pred_check
      _
    $region34: #{resblock2d_forward.7} parent=5 // pred_check_branch
      %204 = sbr.rel (%p201) target = $region36
    $region35: #{resblock2d_forward.7} parent=5 // pred_region
      %s205 = ssub.s32 %s10, 1
      %s206 = smul.u32 2, %s20
      %p207 = scmp.lt.s32.totalorder %s19, 1
      %s208 = scalar_select %p207, %s19, 1
      %p209 = scmp.lt.s32.totalorder %s206, 1
      %s210 = scalar_select %p209, %s206, 1
      %s211 = smul.addr %s208, 8
      %s212 = sadd.s32 %s210, %s211
      %s213 = smul.addr %s212, 4
      %s214 = scalar_lea.vmem %s0, %s213
      %p215 = pneg %p50
      %p216 = pneg %p47
      %s217 = smul.u32 2, %s20
      %p218 = scmp.lt.s32.totalorder %s19, 1
      %s219 = scalar_select %p218, %s19, 1
      %p220 = scmp.lt.s32.totalorder %s217, 1
      %s221 = scalar_select %p220, %s217, 1
      %s222 = smul.addr %s219, 8
      %s223 = sadd.s32 %s221, %s222
      %s224 = smul.addr %s223, 8
      %s225 = scalar_lea.vmem %s1, %s224
      %p226 = pneg %p78
      %p227 = pneg %p75
      %p228 = pneg %p99
      %p229 = pneg %p96
      %p230 = pneg %p120
      %p231 = pneg %p117
      %p232 = pneg %p148
      %p233 = pneg %p145
      %s234 = smul.u32 2, %s20
      %p235 = scmp.lt.s32.totalorder %s19, 1
      %s236 = scalar_select %p235, %s19, 1
      %p237 = scmp.lt.s32.totalorder %s234, 1
      %s238 = scalar_select %p237, %s234, 1
      %s239 = smul.addr %s236, 8
      %s240 = sadd.s32 %s238, %s239
      %s241 = smul.addr %s240, 8
      %s242 = scalar_lea.vmem %s4, %s241
      %s243 = smul.u32 2, %s20
      %p244 = scmp.lt.s32.totalorder %s19, 1
      %s245 = scalar_select %p244, %s19, 1
      %p246 = scmp.lt.s32.totalorder %s243, 1
      %s247 = scalar_select %p246, %s243, 1
      %s248 = smul.addr %s245, 8
      %s249 = sadd.s32 %s247, %s248
      %s250 = smul.addr %s249, 4
      %s251 = scalar_lea.vmem %s0, %s250
      %s252 = smul.u32 2, %s20
      %s253 = smul.u32 2, %s20
      %p254 = scmp.lt.s32.totalorder %s19, 1
      %s255 = scalar_select %p254, %s19, 1
      %p256 = scmp.lt.s32.totalorder %s253, 1
      %s257 = scalar_select %p256, %s253, 1
      %s258 = smul.addr %s255, 8
      %s259 = sadd.s32 %s257, %s258
      %s260 = smul.addr %s259, 8
      %s261 = scalar_lea.vmem %s1, %s260
      %s262 = smul.u32 2, %s20
      %s263 = smul.u32 2, %s20
      %p264 = scmp.lt.s32.totalorder %s19, 1
      %s265 = scalar_select %p264, %s19, 1
      %p266 = scmp.lt.s32.totalorder %s263, 1
      %s267 = scalar_select %p266, %s263, 1
      %s268 = smul.addr %s265, 8
      %s269 = sadd.s32 %s267, %s268
      %s270 = smul.addr %s269, 8
      %s271 = scalar_lea.vmem %s4, %s270
      %s272 = smul.u32 2, %s20
      %v273 = vld [vmem:[%s251] sm:$0xff]
      %v274 = vld [vmem:[%s251 + $0x8] sm:$0xff]
      %v275 = vld [vmem:[%s251 + $0x10] sm:$0xff]
      %v276 = vld [vmem:[%s251 + $0x18] sm:$0xff]
      %v277 = vunpack.c.l.bf16 %v273
      %v278 = vunpack.c.h.bf16 %v273
      %v279 = vunpack.c.l.bf16 %v274
      %v280 = vunpack.c.h.bf16 %v274
      %v281 = vunpack.c.l.bf16 %v275
      %v282 = vunpack.c.h.bf16 %v275
      %v283 = vunpack.c.l.bf16 %v276
      %v284 = vunpack.c.h.bf16 %v276
      %v285 = vld [vmem:[%s2] sm:$0xff]
      %v286 = vld [vmem:[%s2 + $0x8] sm:$0xff]
      %v287 = vld [vmem:[%s2 + $0x10] sm:$0xff]
      %v288 = vld [vmem:[%s2 + $0x18] sm:$0xff]
      %290 = vset.pattern.permute.xlu0 0
      %291 = vperm.xlu0 %290, %v285
      %v292 = vpop.permute.xlu0 %291
      %295 = vset.pattern.permute.xlu0 0
      %296 = vperm.xlu0 %295, %v286
      %v297 = vpop.permute.xlu0 %296
      %300 = vset.pattern.permute.xlu0 0
      %301 = vperm.xlu0 %300, %v287
      %v302 = vpop.permute.xlu0 %301
      %305 = vset.pattern.permute.xlu0 0
      %306 = vperm.xlu0 %305, %v288
      %v307 = vpop.permute.xlu0 %306
      %v309 = vmul.f32 %v277, %v292
      %v310 = vmul.f32 %v278, %v292
      %v311 = vmul.f32 %v279, %v297
      %v312 = vmul.f32 %v280, %v297
      %v313 = vmul.f32 %v281, %v302
      %v314 = vmul.f32 %v282, %v302
      %v315 = vmul.f32 %v283, %v307
      %v316 = vmul.f32 %v284, %v307
      %v317 = vld [vmem:[%s3] sm:$0xff]
      %v318 = vld [vmem:[%s3 + $0x8] sm:$0xff]
      %v319 = vld [vmem:[%s3 + $0x10] sm:$0xff]
      %v320 = vld [vmem:[%s3 + $0x18] sm:$0xff]
      %322 = vset.pattern.permute.xlu0 0
      %323 = vperm.xlu0 %322, %v317
      %v324 = vpop.permute.xlu0 %323
      %327 = vset.pattern.permute.xlu0 0
      %328 = vperm.xlu0 %327, %v318
      %v329 = vpop.permute.xlu0 %328
      %332 = vset.pattern.permute.xlu0 0
      %333 = vperm.xlu0 %332, %v319
      %v334 = vpop.permute.xlu0 %333
      %337 = vset.pattern.permute.xlu0 0
      %338 = vperm.xlu0 %337, %v320
      %v339 = vpop.permute.xlu0 %338
      %v341 = vadd.f32 %v309, %v324
      %v342 = vadd.f32 %v310, %v324
      %v343 = vadd.f32 %v311, %v329
      %v344 = vadd.f32 %v312, %v329
      %v345 = vadd.f32 %v313, %v334
      %v346 = vadd.f32 %v314, %v334
      %v347 = vadd.f32 %v315, %v339
      %v348 = vadd.f32 %v316, %v339
      %v349 = vld [vmem:[%s261] sm:$0xff]
      %v350 = vld [vmem:[%s261 + $0x8] sm:$0xff]
      %v351 = vld [vmem:[%s261 + $0x10] sm:$0xff]
      %v352 = vld [vmem:[%s261 + $0x18] sm:$0xff]
      %v353 = vld [vmem:[%s261 + $0x20] sm:$0xff]
      %v354 = vld [vmem:[%s261 + $0x28] sm:$0xff]
      %v355 = vld [vmem:[%s261 + $0x30] sm:$0xff]
      %v356 = vld [vmem:[%s261 + $0x38] sm:$0xff]
      %v357 = vadd.f32 %v341, %v349
      %v358 = vadd.f32 %v342, %v350
      %v359 = vadd.f32 %v343, %v351
      %v360 = vadd.f32 %v344, %v352
      %v361 = vadd.f32 %v345, %v353
      %v362 = vadd.f32 %v346, %v354
      %v363 = vadd.f32 %v347, %v355
      %v364 = vadd.f32 %v348, %v356
      %v365 = vmax.f32 %v357, 0.0
      %v366 = vmax.f32 %v358, 0.0
      %v367 = vmax.f32 %v359, 0.0
      %v368 = vmax.f32 %v360, 0.0
      %v369 = vmax.f32 %v361, 0.0
      %v370 = vmax.f32 %v362, 0.0
      %v371 = vmax.f32 %v363, 0.0
      %v372 = vmax.f32 %v364, 0.0
      %373 = vst [vmem:[%s271] sm:$0xff] %v365
      %374 = vst [vmem:[%s271 + $0x8] sm:$0xff] %v366
      %375 = vst [vmem:[%s271 + $0x10] sm:$0xff] %v367
      %376 = vst [vmem:[%s271 + $0x18] sm:$0xff] %v368
      %377 = vst [vmem:[%s271 + $0x20] sm:$0xff] %v369
      %378 = vst [vmem:[%s271 + $0x28] sm:$0xff] %v370
      %379 = vst [vmem:[%s271 + $0x30] sm:$0xff] %v371
      %380 = vst [vmem:[%s271 + $0x38] sm:$0xff] %v372
      %s381 = smul.u32 2, %s20
      %p382 = scmp.lt.s32.totalorder %s19, 1
      %s383 = scalar_select %p382, %s19, 1
      %p384 = scmp.lt.s32.totalorder %s381, 1
      %s385 = scalar_select %p384, %s381, 1
      %s386 = smul.addr %s383, 8
      %s387 = sadd.s32 %s385, %s386
      %s388 = smul.addr %s387, 8
      %s389 = scalar_lea.vmem %s4, %s388
      // Predicated region
      $region37: #{resblock2d_forward.7} parent=35 // pred_check
        %p390 = pneg %p145
      $region38: #{resblock2d_forward.7} parent=35 // pred_check_branch
        %392 = sbr.rel (%p390) target = $region40
      $region39: #{resblock2d_forward.7} parent=35 // pred_region
        %s393 = smul.u32 2, %s20
      $region40: #{resblock2d_forward.7} parent=35 // pred_fallthru
        _
    $region36: #{resblock2d_forward.7} parent=5 // pred_fallthru
      _
    %p394 = scmp.le.s32.totalorder 2, %s10
    // Predicated region
    $region41: #{resblock2d_forward.7} parent=5 // pred_check
      %p395 = pneg %p394
    $region42: #{resblock2d_forward.7} parent=5 // pred_check_branch
      %397 = sbr.rel (%p395) target = $region44
    $region43: #{resblock2d_forward.7} parent=5 // pred_region
      %s398 = ssub.s32 %s10, 2
      // Predicated region
      $region45: #{resblock2d_forward.7} parent=43 // pred_check
        %p399 = pneg %p151
      $region46: #{resblock2d_forward.7} parent=43 // pred_check_branch
        %401 = sbr.rel (%p399) target = $region48
      $region47: #{resblock2d_forward.7} parent=43 // pred_region
        %s402 = smul.u32 2, %s22
        %p403 = scmp.lt.s32.totalorder %s21, 1
        %s404 = scalar_select %p403, %s21, 1
        %p405 = scmp.lt.s32.totalorder %s402, 1
        %s406 = scalar_select %p405, %s402, 1
        %s407 = smul.addr %s404, 8
        %s408 = sadd.s32 %s406, %s407
        %s409 = smul.addr %s408, 8
        %s410 = scalar_lea.vmem %s4, %s409
      $region48: #{resblock2d_forward.7} parent=43 // pred_fallthru
        _
    $region44: #{resblock2d_forward.7} parent=5 // pred_fallthru
      _
  $region6: #{resblock2d_forward.7} parent=0 // loop_footer
    %s14 = sadd.s32 1, %s10
  $region7: #{resblock2d_forward.7} parent=0 // loop_footer_branch
    %9 = sbr.rel target = $region3
  $region8: #{resblock2d_forward.7} parent=0 // loop_exit
    _

// kernel: resblock2d_forward.4
$region0: #{resblock2d_forward.4}
  #allocation0 [shape = 'u32[]', space=smem, size = 0x4, offset = 0x4, fixed_abs, tag = 'smem constant byte address 0x4 - core index']
  #allocation1 [shape = 'u32[144,128]{1,0:T(1,128)}', space=vmem, size = 0x12000, scoped, tag = 'internal scratch']
  %s0 = inlined_call_operand.vmem [shape: f32[2,32,256], index: 0, kind: input, shape index: {}]
  %s1 = inlined_call_operand.vmem [shape: bf16[16,32], index: 1, kind: input, shape index: {}]
  %s2 = inlined_call_operand.vmem [shape: bf16[2,16,256], index: 2, kind: output, shape index: {0}]
  %s3 = inlined_call_operand.vmem [shape: f32[2,1,1,16], index: 3, kind: output, shape index: {1}]
  %s4 = inlined_call_operand.vmem [shape: f32[2,1,1,16], index: 4, kind: output, shape index: {2}]
  %5 = xla_tuple %s2, %s3, %s4
  %s6 = sld [smem:[#allocation0]]
  $region57: #{resblock2d_forward.4} parent=0
    _
  %s8 = ssub.s32 1, %s6
  %s9 = scalar_select 0, %s8, %s6
  loop: start=0, step=1, limit=4
  $region2: #{resblock2d_forward.4} parent=0 // loop_pre_header
    _
  $region3: #{resblock2d_forward.4} parent=0 // loop_header
    %s11 = sphi 0, %s15
    %p12 = scmp.ge.s32.totalorder %s11, 4
    %s18 = sphi 0, %s30
    %s19 = sphi 0, %s26
    %s20 = sphi 0, %s18
    %s21 = sphi 0, %s19
    %s22 = sphi 0, %s20
    %s23 = sphi 0, %s21
    %s35 = sphi 0, %s37
    %s38 = sphi 0, %s35
    %s39 = sphi 0, %s38
    %s55 = sphi 0, %s39
    %s59 = sphi 0, %s59
    %s61 = sphi 0, %s59
    %s62 = sphi 0, %s61
    %s76 = sphi 0, %s62
    %s84 = sphi 0, %s86
    %s87 = sphi 0, %s84
    %s88 = sphi 0, %s87
    %s104 = sphi 0, %s88
    %s112 = sphi 0, %s114
    %s115 = sphi 0, %s112
    %s116 = sphi 0, %s115
    %s132 = sphi 0, %s116
    %s140 = sphi 0, %s142
    %s143 = sphi 0, %s140
    %s144 = sphi 0, %s143
    %s160 = sphi 0, %s144
  $region4: #{resblock2d_forward.4} parent=0 // loop_header_branch
    %14 = sbr.rel (%p12) target = $region8
  $region5: #{resblock2d_forward.4} parent=0 // loop_body
    %s16 = ssub.s32 %s11, 1
    %s17 = ssub.s32 %s11, 2
    %s24 = sadd.s32 1, %s19
    %p25 = scmp.ge.s32.totalorder %s24, 1
    %s26 = scalar_select %p25, 0, %s24
    %s27 = sadd.s32 1, %s18
    %s28 = scalar_select %p25, %s27, %s18
    %p29 = scmp.ge.s32.totalorder %s28, 2
    %s30 = scalar_select %p29, 0, %s28
    %s31 = ssub.s32 %s18, %s30
    %s32 = ssub.s32 %s19, %s26
    %s33 = sor.u32 %s31, %s32
    %p34 = scmp.eq.s32.totalorder %s33, 0
    %s36 = sadd.s32 %s35, 1
    %s37 = scalar_select %p34, %s35, %s36
    %p40 = pneg %p34
    %p41 = scmp.eq.s32.totalorder %s11, 1
    %p42 = por %p40, %p41
    %p43 = scmp.ne.s32.totalorder %s35, %s38
    %p44 = scmp.eq.s32.totalorder %s11, 0
    %p45 = por %p43, %p44
    %p46 = scmp.ne.s32.totalorder %s35, %s38
    %p47 = scmp.eq.s32.totalorder %s16, 1
    %p48 = por %p46, %p47
    %p49 = scmp.ne.s32.totalorder %s38, %s39
    %p50 = scmp.eq.s32.totalorder %s16, 0
    %p51 = por %p49, %p50
    %p52 = scmp.ne.s32.totalorder %s38, %s39
    %p53 = scmp.eq.s32.totalorder %s17, 1
    %p54 = por %p52, %p53
    %p56 = scmp.ne.s32.totalorder %s39, %s55
    %p57 = scmp.eq.s32.totalorder %s17, 0
    %p58 = por %p56, %p57
    %s60 = sadd.s32 %s59, 1
    %p63 = scmp.eq.s32.totalorder %s11, 1
    %p64 = scmp.ne.s32.totalorder %s59, %s61
    %p65 = scmp.eq.s32.totalorder %s11, 0
    %p66 = por %p64, %p65
    %p67 = scmp.ne.s32.totalorder %s59, %s61
    %p68 = scmp.eq.s32.totalorder %s16, 1
    %p69 = por %p67, %p68
    %p70 = scmp.ne.s32.totalorder %s61, %s62
    %p71 = scmp.eq.s32.totalorder %s16, 0
    %p72 = por %p70, %p71
    %p73 = scmp.ne.s32.totalorder %s61, %s62
    %p74 = scmp.eq.s32.totalorder %s17, 1
    %p75 = por %p73, %p74
    %p77 = scmp.ne.s32.totalorder %s62, %s76
    %p78 = scmp.eq.s32.totalorder %s17, 0
    %p79 = por %p77, %p78
    %s80 = ssub.s32 %s18, %s30
    %s81 = ssub.s32 %s19, %s26
    %s82 = sor.u32 %s80, %s81
    %p83 = scmp.eq.s32.totalorder %s82, 0
    %s85 = sadd.s32 %s84, 1
    %s86 = scalar_select %p83, %s84, %s85
    %p89 = pneg %p83
    %p90 = scmp.eq.s32.totalorder %s11, 1
    %p91 = por %p89, %p90
    %p92 = scmp.ne.s32.totalorder %s84, %s87
    %p93 = scmp.eq.s32.totalorder %s11, 0
    %p94 = por %p92, %p93
    %p95 = scmp.ne.s32.totalorder %s84, %s87
    %p96 = scmp.eq.s32.totalorder %s16, 1
    %p97 = por %p95, %p96
    %p98 = scmp.ne.s32.totalorder %s87, %s88
    %p99 = scmp.eq.s32.totalorder %s16, 0
    %p100 = por %p98, %p99
    %p101 = scmp.ne.s32.totalorder %s87, %s88
    %p102 = scmp.eq.s32.totalorder %s17, 1
    %p103 = por %p101, %p102
    %p105 = scmp.ne.s32.totalorder %s88, %s104
    %p106 = scmp.eq.s32.totalorder %s17, 0
    %p107 = por %p105, %p106
    %s108 = ssub.s32 %s18, %s30
    %s109 = ssub.s32 %s19, %s26
    %s110 = sor.u32 %s108, %s109
    %p111 = scmp.eq.s32.totalorder %s110, 0
    %s113 = sadd.s32 %s112, 1
    %s114 = scalar_select %p111, %s112, %s113
    %p117 = pneg %p111
    %p118 = scmp.eq.s32.totalorder %s11, 1
    %p119 = por %p117, %p118
    %p120 = scmp.ne.s32.totalorder %s112, %s115
    %p121 = scmp.eq.s32.totalorder %s11, 0
    %p122 = por %p120, %p121
    %p123 = scmp.ne.s32.totalorder %s112, %s115
    %p124 = scmp.eq.s32.totalorder %s16, 1
    %p125 = por %p123, %p124
    %p126 = scmp.ne.s32.totalorder %s115, %s116
    %p127 = scmp.eq.s32.totalorder %s16, 0
    %p128 = por %p126, %p127
    %p129 = scmp.ne.s32.totalorder %s115, %s116
    %p130 = scmp.eq.s32.totalorder %s17, 1
    %p131 = por %p129, %p130
    %p133 = scmp.ne.s32.totalorder %s116, %s132
    %p134 = scmp.eq.s32.totalorder %s17, 0
    %p135 = por %p133, %p134
    %s136 = ssub.s32 %s18, %s30
    %s137 = ssub.s32 %s19, %s26
    %s138 = sor.u32 %s136, %s137
    %p139 = scmp.eq.s32.totalorder %s138, 0
    %s141 = sadd.s32 %s140, 1
    %s142 = scalar_select %p139, %s140, %s141
    %p145 = pneg %p139
    %p146 = scmp.eq.s32.totalorder %s11, 1
    %p147 = por %p145, %p146
    %p148 = scmp.ne.s32.totalorder %s140, %s143
    %p149 = scmp.eq.s32.totalorder %s11, 0
    %p150 = por %p148, %p149
    %p151 = scmp.ne.s32.totalorder %s140, %s143
    %p152 = scmp.eq.s32.totalorder %s16, 1
    %p153 = por %p151, %p152
    %p154 = scmp.ne.s32.totalorder %s143, %s144
    %p155 = scmp.eq.s32.totalorder %s16, 0
    %p156 = por %p154, %p155
    %p157 = scmp.ne.s32.totalorder %s143, %s144
    %p158 = scmp.eq.s32.totalorder %s17, 1
    %p159 = por %p157, %p158
    %p161 = scmp.ne.s32.totalorder %s144, %s160
    %p162 = scmp.eq.s32.totalorder %s17, 0
    %p163 = por %p161, %p162
    %p164 = scmp.le.s32.totalorder 1, %s11
    %p165 = scmp.lt.s32.totalorder %s11, 3
    %p166 = pnand %p164, %p165
    %p167 = pneg %p166
    // Predicated region
    $region9: #{resblock2d_forward.4} parent=5 // pred_check
      _
    $region10: #{resblock2d_forward.4} parent=5 // pred_check_branch
      %169 = sbr.rel (%p166) target = $region12
    $region11: #{resblock2d_forward.4} parent=5 // pred_region
      %s170 = ssub.s32 %s11, 1
      // Predicated region
      $region13: #{resblock2d_forward.4} parent=11 // pred_check
        %p171 = pneg %p72
      $region14: #{resblock2d_forward.4} parent=11 // pred_check_branch
        %173 = sbr.rel (%p171) target = $region16
      $region15: #{resblock2d_forward.4} parent=11 // pred_region
        _
      $region16: #{resblock2d_forward.4} parent=11 // pred_fallthru
        _
    $region12: #{resblock2d_forward.4} parent=5 // pred_fallthru
      _
    %p174 = scmp.lt.s32.totalorder %s11, 2
    // Predicated region
    $region17: #{resblock2d_forward.4} parent=5 // pred_check
      %p175 = pneg %p174
    $region18: #{resblock2d_forward.4} parent=5 // pred_check_branch
      %177 = sbr.rel (%p175) target = $region20
    $region19: #{resblock2d_forward.4} parent=5 // pred_region
      // Predicated region
      $region21: #{resblock2d_forward.4} parent=19 // pred_check
        %p178 = pneg %p45
      $region22: #{resblock2d_forward.4} parent=19 // pred_check_branch
        %180 = sbr.rel (%p178) target = $region24
      $region23: #{resblock2d_forward.4} parent=19 // pred_region
        %s181 = smul.u32 2, %s19
        %p182 = scmp.lt.s32.totalorder %s18, 1
        %s183 = scalar_select %p182, %s18, 1
        %p184 = scmp.lt.s32.totalorder %s181, 1
        %s185 = scalar_select %p184, %s181, 1
        %s186 = smul.addr %s183, 8
        %s187 = sadd.s32 %s185, %s186
        %s188 = smul.addr %s187, 8
        %s189 = scalar_lea.vmem %s0, %s188
        %s190 = smul.u32 2, %s19
      $region24: #{resblock2d_forward.4} parent=19 // pred_fallthru
        _
    $region20: #{resblock2d_forward.4} parent=5 // pred_fallthru
      _
    %p191 = scmp.le.s32.totalorder 1, %s11
    %p192 = scmp.lt.s32.totalorder %s11, 3
    %p193 = pnand %p191, %p192
    %p194 = pneg %p193
    // Predicated region
    $region25: #{resblock2d_forward.4} parent=5 // pred_check
      _
    $region26: #{resblock2d_forward.4} parent=5 // pred_check_branch
      %196 = sbr.rel (%p193) target = $region28
    $region27: #{resblock2d_forward.4} parent=5 // pred_region
      %s197 = ssub.s32 %s11, 1
      %s198 = smul.u32 2, %s21
      %p199 = scmp.lt.s32.totalorder %s20, 1
      %s200 = scalar_select %p199, %s20, 1
      %p201 = scmp.lt.s32.totalorder %s198, 1
      %s202 = scalar_select %p201, %s198, 1
      %s203 = smul.addr %s200, 8
      %s204 = sadd.s32 %s202, %s203
      %s205 = smul.addr %s204, 8
      %s206 = scalar_lea.vmem %s0, %s205
      %p207 = pneg %p51
      %p208 = pneg %p48
      %p209 = pneg %p72
      %p210 = pneg %p69
      %p211 = pneg %p100
      %p212 = pneg %p97
      %s213 = smul.u32 2, %s21
      %p214 = scmp.lt.s32.totalorder %s20, 1
      %s215 = scalar_select %p214, %s20, 1
      %p216 = scmp.lt.s32.totalorder %s213, 1
      %s217 = scalar_select %p216, %s213, 1
      %s218 = smul.addr %s215, 4
      %s219 = sadd.s32 %s217, %s218
      %s220 = smul.addr %s219, 4
      %s221 = scalar_lea.vmem %s2, %s220
      %p222 = pneg %p128
      %p223 = pneg %p125
      %p224 = scmp.lt.s32.totalorder %s20, 1
      %s225 = scalar_select %p224, %s20, 1
      %p226 = scmp.lt.s32.totalorder %s21, 0
      %s227 = scalar_select %p226, %s21, 0
      %s228 = sadd.s32 %s227, %s225
      %s229 = scalar_lea.vmem %s3, %s228
      %p230 = pneg %p156
      %p231 = pneg %p153
      %p232 = scmp.lt.s32.totalorder %s20, 1
      %s233 = scalar_select %p232, %s20, 1
      %p234 = scmp.lt.s32.totalorder %s21, 0
      %s235 = scalar_select %p234, %s21, 0
      %s236 = sadd.s32 %s235, %s233
      %s237 = scalar_lea.vmem %s4, %s236
      %s238 = smul.u32 2, %s21
      %p239 = scmp.lt.s32.totalorder %s20, 1
      %s240 = scalar_select %p239, %s20, 1
      %p241 = scmp.lt.s32.totalorder %s238, 1
      %s242 = scalar_select %p241, %s238, 1
      %s243 = smul.addr %s240, 8
      %s244 = sadd.s32 %s242, %s243
      %s245 = smul.addr %s244, 8
      %s246 = scalar_lea.vmem %s0, %s245
      %s247 = smul.u32 2, %s21
      %s248 = smul.u32 2, %s21
      %p249 = scmp.lt.s32.totalorder %s20, 1
      %s250 = scalar_select %p249, %s20, 1
      %p251 = scmp.lt.s32.totalorder %s248, 1
      %s252 = scalar_select %p251, %s248, 1
      %s253 = smul.addr %s250, 4
      %s254 = sadd.s32 %s252, %s253
      %s255 = smul.addr %s254, 4
      %s256 = scalar_lea.vmem %s2, %s255
      %s257 = smul.u32 2, %s21
      %p258 = scmp.lt.s32.totalorder %s20, 1
      %s259 = scalar_select %p258, %s20, 1
      %p260 = scmp.lt.s32.totalorder %s21, 0
      %s261 = scalar_select %p260, %s21, 0
      %s262 = sadd.s32 %s261, %s259
      %s263 = scalar_lea.vmem %s3, %s262
      %p264 = scmp.lt.s32.totalorder %s20, 1
      %s265 = scalar_select %p264, %s20, 1
      %p266 = scmp.lt.s32.totalorder %s21, 0
      %s267 = scalar_select %p266, %s21, 0
      %s268 = sadd.s32 %s267, %s265
      %s269 = scalar_lea.vmem %s4, %s268
      %v271 = vld [vmem:[%s246] sm:$0xff]
      %v272 = vld [vmem:[%s246 + $0x8] sm:$0xff]
      %v273 = vld [vmem:[%s246 + $0x10] sm:$0xff]
      %v274 = vld [vmem:[%s246 + $0x18] sm:$0xff]
      %v275 = vld [vmem:[%s246 + $0x20] sm:$0xff]
      %v276 = vld [vmem:[%s246 + $0x28] sm:$0xff]
      %v277 = vld [vmem:[%s246 + $0x30] sm:$0xff]
      %v278 = vld [vmem:[%s246 + $0x38] sm:$0xff]
      %v279 = vpack.c.bf16 %v273, %v271
      %v280 = vpack.c.bf16 %v274, %v272
      %v281 = vpack.c.bf16 %v277, %v275
      %v282 = vpack.c.bf16 %v278, %v276
      %v283 = vld [vmem:[%s1] sm:$0xf]
      %v284 = vld [vmem:[%s1 + $0x4] sm:$0xf]
      %v287 = vunpack.c.l.b16 %v283
      %v288 = vunpack.c.l.b16 %v284
      %v289 = vpack.c.b16 %v288, %v287
      %vm290 = vcmask 261120
      %v292 = vsel %vm290, %v289, 0
      %294 = vmatprep.subr.bf16.mxu0 %v280
      %295 = vmatpush1.bf16.msra.mxu0 %v279
      %296 = vmatprep.subr.bf16.mxu0 %v282
      %297 = vmatpush1.bf16.msra.mxu0 %v281
      %298 = vmatprep.subr.bf16.mxu0 0
      %299 = vmatpush1.bf16.msra.mxu0 0
      %300 = vmatprep.subr.bf16.mxu0 0
      %301 = vmatpush1.bf16.msra.mxu0 0
      %302 = vmatprep.subr.bf16.mxu0 0
      %303 = vmatpush1.bf16.msra.mxu0 0
      %304 = vmatprep.subr.bf16.mxu0 0
      %305 = vmatpush1.bf16.msra.mxu0 0
      %306 = vmatprep.subr.bf16.mxu0 0
      %307 = vmatpush1.bf16.msra.mxu0 0
      %308 = vmatprep.subr.bf16.mxu0 0
      %309 = vmatpush1.bf16.msra.mxu0 0
      %310 = vmatprep.subr.bf16.mxu0 0
      %311 = vmatpush1.bf16.msra.mxu0 0
      %312 = vmatprep.subr.bf16.mxu0 0
      %313 = vmatpush1.bf16.msra.mxu0 0
      %314 = vmatprep.subr.bf16.mxu0 0
      %315 = vmatpush1.bf16.msra.mxu0 0
      %316 = vmatprep.subr.bf16.mxu0 0
      %317 = vmatpush1.bf16.msra.mxu0 0
      %318 = vmatprep.subr.bf16.mxu0 0
      %319 = vmatpush1.bf16.msra.mxu0 0
      %320 = vmatprep.subr.bf16.mxu0 0
      %321 = vmatpush1.bf16.msra.mxu0 0
      %322 = vmatprep.subr.bf16.mxu0 0
      %323 = vmatpush1.bf16.msra.mxu0 0
      %324 = vmatprep.subr.bf16.mxu0 0
      %325 = vmatpush1.bf16.msra.mxu0 0
      %326 = vmatprep.mubr.bf16.mxu0 0
      %327 = vmatmul.mubr.bf16.gmra.mrb[0].mxu0 %v292
      %v328 = vpop.f32.mrb[0].mxu0
      %v329 = vadd.f32 0.0, %v328
      %v330 = vpop.f32.mrb[0].mxu0
      %v331 = vadd.f32 0.0, %v330
      %v332 = vpop.f32.mrb[0].mxu0
      %v333 = vadd.f32 0.0, %v332
      %v334 = vpop.f32.mrb[0].mxu0
      %v335 = vadd.f32 0.0, %v334
      %336 = vdwg.mxu0
      %v337 = vpack.c.bf16 %v333, %v329
      %v338 = vpack.c.bf16 %v335, %v331
      %v341 = vunpack.c.l.b16 %v337
      %v342 = vunpack.c.l.b16 %v338
      %v343 = vunpack.c.h.b16 %v337
      %v344 = vunpack.c.h.b16 %v338
      %v345 = vpack.c.b16 %v342, %v341
      %v346 = vpack.c.b16 %v344, %v343
      %349 = vst [vmem:[%s256] sm:$0xff] %v345
      %350 = vst [vmem:[%s256 + $0x8] sm:$0xff] %v346
      %v351 = vadd.f32 %v329, %v331
      %352 = vadd.xlane.f32.xlu0 %v351
      %v353 = vpop.xlane.xlu0 %352
      %v354 = vadd.f32 %v333, %v335
      %355 = vadd.xlane.f32.xlu0 %v354
      %v356 = vpop.xlane.xlu0 %355
      %v359 = vlaneseq
      %v360 = vand.u32 %v359, 127
      %v361 = vlaneseq
      %v362 = vshrl.u32 %v361, 7
      %v363 = vsub.s32 %v360, %v362
      %v364 = vrot.slane %v353, %v363
      %v365 = vadd.s32 %v360, 4294967288
      %v366 = vlaneseq
      %v367 = vshrl.u32 %v366, 7
      %v368 = vsub.s32 %v365, %v367
      %v369 = vrot.slane %v356, %v368
      %vm370 = vcmask 130112
      %v371 = vsel %vm370, %v369, %v364
      %vm373 = vcmask 122880
      %374 = vst.msk [vmem:[%s263] sm:$0x1] %vm373, %v371
      %v375 = vmul.f32 %v329, %v329
      %v376 = vmul.f32 %v331, %v331
      %v377 = vmul.f32 %v333, %v333
      %v378 = vmul.f32 %v335, %v335
      %v379 = vadd.f32 %v375, %v376
      %380 = vadd.xlane.f32.xlu0 %v379
      %v381 = vpop.xlane.xlu0 %380
      %v382 = vadd.f32 %v377, %v378
      %383 = vadd.xlane.f32.xlu0 %v382
      %v384 = vpop.xlane.xlu0 %383
      %v387 = vlaneseq
      %v388 = vshrl.u32 %v387, 7
      %v389 = vsub.s32 %v360, %v388
      %v390 = vrot.slane %v381, %v389
      %v391 = vlaneseq
      %v392 = vshrl.u32 %v391, 7
      %v393 = vsub.s32 %v365, %v392
      %v394 = vrot.slane %v384, %v393
      %v395 = vsel %vm370, %v394, %v390
      %397 = vst.msk [vmem:[%s269] sm:$0x1] %vm373, %v395
      %s398 = smul.u32 2, %s21
      %p399 = scmp.lt.s32.totalorder %s20, 1
      %s400 = scalar_select %p399, %s20, 1
      %p401 = scmp.lt.s32.totalorder %s398, 1
      %s402 = scalar_select %p401, %s398, 1
      %s403 = smul.addr %s400, 4
      %s404 = sadd.s32 %s402, %s403
      %s405 = smul.addr %s404, 4
      %s406 = scalar_lea.vmem %s2, %s405
      %p407 = scmp.lt.s32.totalorder %s20, 1
      %s408 = scalar_select %p407, %s20, 1
      %p409 = scmp.lt.s32.totalorder %s21, 0
      %s410 = scalar_select %p409, %s21, 0
      %s411 = sadd.s32 %s410, %s408
      %s412 = scalar_lea.vmem %s3, %s411
      %p413 = scmp.lt.s32.totalorder %s20, 1
      %s414 = scalar_select %p413, %s20, 1
      %p415 = scmp.lt.s32.totalorder %s21, 0
      %s416 = scalar_select %p415, %s21, 0
      %s417 = sadd.s32 %s416, %s414
      %s418 = scalar_lea.vmem %s4, %s417
      // Predicated region
      $region29: #{resblock2d_forward.4} parent=27 // pred_check
        %p419 = pneg %p97
      $region30: #{resblock2d_forward.4} parent=27 // pred_check_branch
        %421 = sbr.rel (%p419) target = $region32
      $region31: #{resblock2d_forward.4} parent=27 // pred_region
        %s422 = smul.u32 2, %s21
      $region32: #{resblock2d_forward.4} parent=27 // pred_fallthru
        _
      // Predicated region
      $region33: #{resblock2d_forward.4} parent=27 // pred_check
        %p423 = pneg %p125
      $region34: #{resblock2d_forward.4} parent=27 // pred_check_branch
        %425 = sbr.rel (%p423) target = $region36
      $region35: #{resblock2d_forward.4} parent=27 // pred_region
        _
      $region36: #{resblock2d_forward.4} parent=27 // pred_fallthru
        _
      // Predicated region
      $region37: #{resblock2d_forward.4} parent=27 // pred_check
        %p426 = pneg %p153
      $region38: #{resblock2d_forward.4} parent=27 // pred_check_branch
        %428 = sbr.rel (%p426) target = $region40
      $region39: #{resblock2d_forward.4} parent=27 // pred_region
        _
      $region40: #{resblock2d_forward.4} parent=27 // pred_fallthru
        _
    $region28: #{resblock2d_forward.4} parent=5 // pred_fallthru
      _
    %p429 = scmp.le.s32.totalorder 2, %s11
    // Predicated region
    $region41: #{resblock2d_forward.4} parent=5 // pred_check
      %p430 = pneg %p429
    $region42: #{resblock2d_forward.4} parent=5 // pred_check_branch
      %432 = sbr.rel (%p430) target = $region44
    $region43: #{resblock2d_forward.4} parent=5 // pred_region
      %s433 = ssub.s32 %s11, 2
      // Predicated region
      $region45: #{resblock2d_forward.4} parent=43 // pred_check
        %p434 = pneg %p103
      $region46: #{resblock2d_forward.4} parent=43 // pred_check_branch
        %436 = sbr.rel (%p434) target = $region48
      $region47: #{resblock2d_forward.4} parent=43 // pred_region
        %s437 = smul.u32 2, %s23
        %p438 = scmp.lt.s32.totalorder %s22, 1
        %s439 = scalar_select %p438, %s22, 1
        %p440 = scmp.lt.s32.totalorder %s437, 1
        %s441 = scalar_select %p440, %s437, 1
        %s442 = smul.addr %s439, 4
        %s443 = sadd.s32 %s441, %s442
        %s444 = smul.addr %s443, 4
        %s445 = scalar_lea.vmem %s2, %s444
      $region48: #{resblock2d_forward.4} parent=43 // pred_fallthru
        _
      // Predicated region
      $region49: #{resblock2d_forward.4} parent=43 // pred_check
        %p446 = pneg %p131
      $region50: #{resblock2d_forward.4} parent=43 // pred_check_branch
        %448 = sbr.rel (%p446) target = $region52
      $region51: #{resblock2d_forward.4} parent=43 // pred_region
        %p449 = scmp.lt.s32.totalorder %s22, 1
        %s450 = scalar_select %p449, %s22, 1
        %p451 = scmp.lt.s32.totalorder %s23, 0
        %s452 = scalar_select %p451, %s23, 0
        %s453 = sadd.s32 %s452, %s450
        %s454 = scalar_lea.vmem %s3, %s453
      $region52: #{resblock2d_forward.4} parent=43 // pred_fallthru
        _
      // Predicated region
      $region53: #{resblock2d_forward.4} parent=43 // pred_check
        %p455 = pneg %p159
      $region54: #{resblock2d_forward.4} parent=43 // pred_check_branch
        %457 = sbr.rel (%p455) target = $region56
      $region55: #{resblock2d_forward.4} parent=43 // pred_region
        %p458 = scmp.lt.s32.totalorder %s22, 1
        %s459 = scalar_select %p458, %s22, 1
        %p460 = scmp.lt.s32.totalorder %s23, 0
        %s461 = scalar_select %p460, %s23, 0
        %s462 = sadd.s32 %s461, %s459
        %s463 = scalar_lea.vmem %s4, %s462
      $region56: #{resblock2d_forward.4} parent=43 // pred_fallthru
        _
    $region44: #{resblock2d_forward.4} parent=5 // pred_fallthru
      _
  $region6: #{resblock2d_forward.4} parent=0 // loop_footer
    %s15 = sadd.s32 1, %s11
  $region7: #{resblock2d_forward.4} parent=0 // loop_footer_branch
    %10 = sbr.rel target = $region3
  $region8: #{resblock2d_forward.4} parent=0 // loop_exit
    _

// kernel: resblock2d_forward.5
$region0: #{resblock2d_forward.5}
  #allocation0 [shape = 'u32[]', space=smem, size = 0x4, offset = 0x4, fixed_abs, tag = 'smem constant byte address 0x4 - core index']
  #allocation1 [shape = 'u32[144,128]{1,0:T(1,128)}', space=vmem, size = 0x12000, scoped, tag = 'internal scratch']
  %s0 = inlined_call_operand.vmem [shape: bf16[2,16,256], index: 0, kind: input, shape index: {}, may-alias: {0,1,2}]
  %s1 = inlined_call_operand.vmem [shape: bf16[2,16,256], index: 1, kind: input, shape index: {}, may-alias: {0,1,2}]
  %s2 = inlined_call_operand.vmem [shape: bf16[2,16,256], index: 2, kind: input, shape index: {}, may-alias: {0,1,2}]
  %s3 = inlined_call_operand.vmem [shape: bf16[9,16,16], index: 3, kind: input, shape index: {}]
  %s4 = inlined_call_operand.vmem [shape: f32[16,1], index: 4, kind: input, shape index: {}]
  %s5 = inlined_call_operand.vmem [shape: f32[16,1], index: 5, kind: input, shape index: {}]
  %s6 = inlined_call_operand.vmem [shape: f32[4,256], index: 6, kind: input, shape index: {}]
  %s7 = inlined_call_operand.vmem [shape: bf16[2,16,256], index: 7, kind: output, shape index: {0}]
  %s8 = inlined_call_operand.vmem [shape: f32[2,1,1,16], index: 8, kind: output, shape index: {1}]
  %s9 = inlined_call_operand.vmem [shape: f32[2,1,1,16], index: 9, kind: output, shape index: {2}]
  %10 = xla_tuple %s7, %s8, %s9
  %s11 = sld [smem:[#allocation0]]
  $region77: #{resblock2d_forward.5} parent=0
    _
  %s13 = ssub.s32 1, %s11
  %s14 = scalar_select 0, %s13, %s11
  loop: start=0, step=1, limit=4
  $region2: #{resblock2d_forward.5} parent=0 // loop_pre_header
    _
  $region3: #{resblock2d_forward.5} parent=0 // loop_header
    %s16 = sphi 0, %s20
    %p17 = scmp.ge.s32.totalorder %s16, 4
    %s23 = sphi 0, %s35
    %s24 = sphi 0, %s31
    %s25 = sphi 0, %s23
    %s26 = sphi 0, %s24
    %s27 = sphi 0, %s25
    %s28 = sphi 0, %s26
    %s40 = sphi 0, %s42
    %s43 = sphi 0, %s40
    %s44 = sphi 0, %s43
    %s60 = sphi 0, %s44
    %s74 = sphi 0, %s76
    %s77 = sphi 0, %s74
    %s78 = sphi 0, %s77
    %s94 = sphi 0, %s78
    %s108 = sphi 0, %s110
    %s111 = sphi 0, %s108
    %s112 = sphi 0, %s111
    %s128 = sphi 0, %s112
    %s132 = sphi 0, %s132
    %s134 = sphi 0, %s132
    %s135 = sphi 0, %s134
    %s149 = sphi 0, %s135
    %s153 = sphi 0, %s153
    %s155 = sphi 0, %s153
    %s156 = sphi 0, %s155
    %s170 = sphi 0, %s156
    %s174 = sphi 0, %s174
    %s176 = sphi 0, %s174
    %s177 = sphi 0, %s176
    %s191 = sphi 0, %s177
    %s195 = sphi 0, %s195
    %s197 = sphi 0, %s195
    %s198 = sphi 0, %s197
    %s212 = sphi 0, %s198
    %s220 = sphi 0, %s222
    %s223 = sphi 0, %s220
    %s224 = sphi 0, %s223
    %s240 = sphi 0, %s224
    %s248 = sphi 0, %s250
    %s251 = sphi 0, %s248
    %s252 = sphi 0, %s251
    %s268 = sphi 0, %s252
    %s276 = sphi 0, %s278
    %s279 = sphi 0, %s276
    %s280 = sphi 0, %s279
    %s296 = sphi 0, %s280
  $region4: #{resblock2d_forward.5} parent=0 // loop_header_branch
    %19 = sbr.rel (%p17) target = $region8
  $region5: #{resblock2d_forward.5} parent=0 // loop_body
    %s21 = ssub.s32 %s16, 1
    %s22 = ssub.s32 %s16, 2
    %s29 = sadd.s32 1, %s24
    %p30 = scmp.ge.s32.totalorder %s29, 1
    %s31 = scalar_select %p30, 0, %s29
    %s32 = sadd.s32 1, %s23
    %s33 = scalar_select %p30, %s32, %s23
    %p34 = scmp.ge.s32.totalorder %s33, 2
    %s35 = scalar_select %p34, 0, %s33
    %s36 = ssub.s32 %s23, %s35
    %s37 = ssub.s32 %s24, %s31
    %s38 = sor.u32 %s36, %s37
    %p39 = scmp.eq.s32.totalorder %s38, 0
    %s41 = sadd.s32 %s40, 1
    %s42 = scalar_select %p39, %s40, %s41
    %p45 = pneg %p39
    %p46 = scmp.eq.s32.totalorder %s16, 1
    %p47 = por %p45, %p46
    %p48 = scmp.ne.s32.totalorder %s40, %s43
    %p49 = scmp.eq.s32.totalorder %s16, 0
    %p50 = por %p48, %p49
    %p51 = scmp.ne.s32.totalorder %s40, %s43
    %p52 = scmp.eq.s32.totalorder %s21, 1
    %p53 = por %p51, %p52
    %p54 = scmp.ne.s32.totalorder %s43, %s44
    %p55 = scmp.eq.s32.totalorder %s21, 0
    %p56 = por %p54, %p55
    %p57 = scmp.ne.s32.totalorder %s43, %s44
    %p58 = scmp.eq.s32.totalorder %s22, 1
    %p59 = por %p57, %p58
    %p61 = scmp.ne.s32.totalorder %s44, %s60
    %p62 = scmp.eq.s32.totalorder %s22, 0
    %p63 = por %p61, %p62
    %s64 = ssub.s32 %s24, 1
    %p65 = scmp.gt.s32.totalorder %s64, 0
    %s66 = scalar_select %p65, %s64, 0
    %s67 = ssub.s32 %s31, 1
    %p68 = scmp.gt.s32.totalorder %s67, 0
    %s69 = scalar_select %p68, %s67, 0
    %s70 = ssub.s32 %s23, %s35
    %s71 = ssub.s32 %s66, %s69
    %s72 = sor.u32 %s70, %s71
    %p73 = scmp.eq.s32.totalorder %s72, 0
    %s75 = sadd.s32 %s74, 1
    %s76 = scalar_select %p73, %s74, %s75
    %p79 = pneg %p73
    %p80 = scmp.eq.s32.totalorder %s16, 1
    %p81 = por %p79, %p80
    %p82 = scmp.ne.s32.totalorder %s74, %s77
    %p83 = scmp.eq.s32.totalorder %s16, 0
    %p84 = por %p82, %p83
    %p85 = scmp.ne.s32.totalorder %s74, %s77
    %p86 = scmp.eq.s32.totalorder %s21, 1
    %p87 = por %p85, %p86
    %p88 = scmp.ne.s32.totalorder %s77, %s78
    %p89 = scmp.eq.s32.totalorder %s21, 0
    %p90 = por %p88, %p89
    %p91 = scmp.ne.s32.totalorder %s77, %s78
    %p92 = scmp.eq.s32.totalorder %s22, 1
    %p93 = por %p91, %p92
    %p95 = scmp.ne.s32.totalorder %s78, %s94
    %p96 = scmp.eq.s32.totalorder %s22, 0
    %p97 = por %p95, %p96
    %s98 = sadd.s32 %s24, 1
    %p99 = scmp.lt.s32.totalorder %s98, 0
    %s100 = scalar_select %p99, %s98, 0
    %s101 = sadd.s32 %s31, 1
    %p102 = scmp.lt.s32.totalorder %s101, 0
    %s103 = scalar_select %p102, %s101, 0
    %s104 = ssub.s32 %s23, %s35
    %s105 = ssub.s32 %s100, %s103
    %s106 = sor.u32 %s104, %s105
    %p107 = scmp.eq.s32.totalorder %s106, 0
    %s109 = sadd.s32 %s108, 1
    %s110 = scalar_select %p107, %s108, %s109
    %p113 = pneg %p107
    %p114 = scmp.eq.s32.totalorder %s16, 1
    %p115 = por %p113, %p114
    %p116 = scmp.ne.s32.totalorder %s108, %s111
    %p117 = scmp.eq.s32.totalorder %s16, 0
    %p118 = por %p116, %p117
    %p119 = scmp.ne.s32.totalorder %s108, %s111
    %p120 = scmp.eq.s32.totalorder %s21, 1
    %p121 = por %p119, %p120
    %p122 = scmp.ne.s32.totalorder %s111, %s112
    %p123 = scmp.eq.s32.totalorder %s21, 0
    %p124 = por %p122, %p123
    %p125 = scmp.ne.s32.totalorder %s111, %s112
    %p126 = scmp.eq.s32.totalorder %s22, 1
    %p127 = por %p125, %p126
    %p129 = scmp.ne.s32.totalorder %s112, %s128
    %p130 = scmp.eq.s32.totalorder %s22, 0
    %p131 = por %p129, %p130
    %s133 = sadd.s32 %s132, 1
    %p136 = scmp.eq.s32.totalorder %s16, 1
    %p137 = scmp.ne.s32.totalorder %s132, %s134
    %p138 = scmp.eq.s32.totalorder %s16, 0
    %p139 = por %p137, %p138
    %p140 = scmp.ne.s32.totalorder %s132, %s134
    %p141 = scmp.eq.s32.totalorder %s21, 1
    %p142 = por %p140, %p141
    %p143 = scmp.ne.s32.totalorder %s134, %s135
    %p144 = scmp.eq.s32.totalorder %s21, 0
    %p145 = por %p143, %p144
    %p146 = scmp.ne.s32.totalorder %s134, %s135
    %p147 = scmp.eq.s32.totalorder %s22, 1
    %p148 = por %p146, %p147
    %p150 = scmp.ne.s32.totalorder %s135, %s149
    %p151 = scmp.eq.s32.totalorder %s22, 0
    %p152 = por %p150, %p151
    %s154 = sadd.s32 %s153, 1
    %p157 = scmp.eq.s32.totalorder %s16, 1
    %p158 = scmp.ne.s32.totalorder %s153, %s155
    %p159 = scmp.eq.s32.totalorder %s16, 0
    %p160 = por %p158, %p159
    %p161 = scmp.ne.s32.totalorder %s153, %s155
    %p162 = scmp.eq.s32.totalorder %s21, 1
    %p163 = por %p161, %p162
    %p164 = scmp.ne.s32.totalorder %s155, %s156
    %p165 = scmp.eq.s32.totalorder %s21, 0
    %p166 = por %p164, %p165
    %p167 = scmp.ne.s32.totalorder %s155, %s156
    %p168 = scmp.eq.s32.totalorder %s22, 1
    %p169 = por %p167, %p168
    %p171 = scmp.ne.s32.totalorder %s156, %s170
    %p172 = scmp.eq.s32.totalorder %s22, 0
    %p173 = por %p171, %p172
    %s175 = sadd.s32 %s174, 1
    %p178 = scmp.eq.s32.totalorder %s16, 1
    %p179 = scmp.ne.s32.totalorder %s174, %s176
    %p180 = scmp.eq.s32.totalorder %s16, 0
    %p181 = por %p179, %p180
    %p182 = scmp.ne.s32.totalorder %s174, %s176
    %p183 = scmp.eq.s32.totalorder %s21, 1
    %p184 = por %p182, %p183
    %p185 = scmp.ne.s32.totalorder %s176, %s177
    %p186 = scmp.eq.s32.totalorder %s21, 0
    %p187 = por %p185, %p186
    %p188 = scmp.ne.s32.totalorder %s176, %s177
    %p189 = scmp.eq.s32.totalorder %s22, 1
    %p190 = por %p188, %p189
    %p192 = scmp.ne.s32.totalorder %s177, %s191
    %p193 = scmp.eq.s32.totalorder %s22, 0
    %p194 = por %p192, %p193
    %s196 = sadd.s32 %s195, 1
    %p199 = scmp.eq.s32.totalorder %s16, 1
    %p200 = scmp.ne.s32.totalorder %s195, %s197
    %p201 = scmp.eq.s32.totalorder %s16, 0
    %p202 = por %p200, %p201
    %p203 = scmp.ne.s32.totalorder %s195, %s197
    %p204 = scmp.eq.s32.totalorder %s21, 1
    %p205 = por %p203, %p204
    %p206 = scmp.ne.s32.totalorder %s197, %s198
    %p207 = scmp.eq.s32.totalorder %s21, 0
    %p208 = por %p206, %p207
    %p209 = scmp.ne.s32.totalorder %s197, %s198
    %p210 = scmp.eq.s32.totalorder %s22, 1
    %p211 = por %p209, %p210
    %p213 = scmp.ne.s32.totalorder %s198, %s212
    %p214 = scmp.eq.s32.totalorder %s22, 0
    %p215 = por %p213, %p214
    %s216 = ssub.s32 %s23, %s35
    %s217 = ssub.s32 %s24, %s31
    %s218 = sor.u32 %s216, %s217
    %p219 = scmp.eq.s32.totalorder %s218, 0
    %s221 = sadd.s32 %s220, 1
    %s222 = scalar_select %p219, %s220, %s221
    %p225 = pneg %p219
    %p226 = scmp.eq.s32.totalorder %s16, 1
    %p227 = por %p225, %p226
    %p228 = scmp.ne.s32.totalorder %s220, %s223
    %p229 = scmp.eq.s32.totalorder %s16, 0
    %p230 = por %p228, %p229
    %p231 = scmp.ne.s32.totalorder %s220, %s223
    %p232 = scmp.eq.s32.totalorder %s21, 1
    %p233 = por %p231, %p232
    %p234 = scmp.ne.s32.totalorder %s223, %s224
    %p235 = scmp.eq.s32.totalorder %s21, 0
    %p236 = por %p234, %p235
    %p237 = scmp.ne.s32.totalorder %s223, %s224
    %p238 = scmp.eq.s32.totalorder %s22, 1
    %p239 = por %p237, %p238
    %p241 = scmp.ne.s32.totalorder %s224, %s240
    %p242 = scmp.eq.s32.totalorder %s22, 0
    %p243 = por %p241, %p242
    %s244 = ssub.s32 %s23, %s35
    %s245 = ssub.s32 %s24, %s31
    %s246 = sor.u32 %s244, %s245
    %p247 = scmp.eq.s32.totalorder %s246, 0
    %s249 = sadd.s32 %s248, 1
    %s250 = scalar_select %p247, %s248, %s249
    %p253 = pneg %p247
    %p254 = scmp.eq.s32.totalorder %s16, 1
    %p255 = por %p253, %p254
    %p256 = scmp.ne.s32.totalorder %s248, %s251
    %p257 = scmp.eq.s32.totalorder %s16, 0
    %p258 = por %p256, %p257
    %p259 = scmp.ne.s32.totalorder %s248, %s251
    %p260 = scmp.eq.s32.totalorder %s21, 1
    %p261 = por %p259, %p260
    %p262 = scmp.ne.s32.totalorder %s251, %s252
    %p263 = scmp.eq.s32.totalorder %s21, 0
    %p264 = por %p262, %p263
    %p265 = scmp.ne.s32.totalorder %s251, %s252
    %p266 = scmp.eq.s32.totalorder %s22, 1
    %p267 = por %p265, %p266
    %p269 = scmp.ne.s32.totalorder %s252, %s268
    %p270 = scmp.eq.s32.totalorder %s22, 0
    %p271 = por %p269, %p270
    %s272 = ssub.s32 %s23, %s35
    %s273 = ssub.s32 %s24, %s31
    %s274 = sor.u32 %s272, %s273
    %p275 = scmp.eq.s32.totalorder %s274, 0
    %s277 = sadd.s32 %s276, 1
    %s278 = scalar_select %p275, %s276, %s277
    %p281 = pneg %p275
    %p282 = scmp.eq.s32.totalorder %s16, 1
    %p283 = por %p281, %p282
    %p284 = scmp.ne.s32.totalorder %s276, %s279
    %p285 = scmp.eq.s32.totalorder %s16, 0
    %p286 = por %p284, %p285
    %p287 = scmp.ne.s32.totalorder %s276, %s279
    %p288 = scmp.eq.s32.totalorder %s21, 1
    %p289 = por %p287, %p288
    %p290 = scmp.ne.s32.totalorder %s279, %s280
    %p291 = scmp.eq.s32.totalorder %s21, 0
    %p292 = por %p290, %p291
    %p293 = scmp.ne.s32.totalorder %s279, %s280
    %p294 = scmp.eq.s32.totalorder %s22, 1
    %p295 = por %p293, %p294
    %p297 = scmp.ne.s32.totalorder %s280, %s296
    %p298 = scmp.eq.s32.totalorder %s22, 0
    %p299 = por %p297, %p298
    %p300 = scmp.le.s32.totalorder 1, %s16
    %p301 = scmp.lt.s32.totalorder %s16, 3
    %p302 = pnand %p300, %p301
    %p303 = pneg %p302
    // Predicated region
    $region9: #{resblock2d_forward.5} parent=5 // pred_check
      _
    $region10: #{resblock2d_forward.5} parent=5 // pred_check_branch
      %305 = sbr.rel (%p302) target = $region12
    $region11: #{resblock2d_forward.5} parent=5 // pred_region
      %s306 = ssub.s32 %s16, 1
      // Predicated region
      $region13: #{resblock2d_forward.5} parent=11 // pred_check
        %p307 = pneg %p145
      $region14: #{resblock2d_forward.5} parent=11 // pred_check_branch
        %309 = sbr.rel (%p307) target = $region16
      $region15: #{resblock2d_forward.5} parent=11 // pred_region
        _
      $region16: #{resblock2d_forward.5} parent=11 // pred_fallthru
        _
      // Predicated region
      $region17: #{resblock2d_forward.5} parent=11 // pred_check
        %p310 = pneg %p166
      $region18: #{resblock2d_forward.5} parent=11 // pred_check_branch
        %312 = sbr.rel (%p310) target = $region20
      $region19: #{resblock2d_forward.5} parent=11 // pred_region
        _
      $region20: #{resblock2d_forward.5} parent=11 // pred_fallthru
        _
      // Predicated region
      $region21: #{resblock2d_forward.5} parent=11 // pred_check
        %p313 = pneg %p187
      $region22: #{resblock2d_forward.5} parent=11 // pred_check_branch
        %315 = sbr.rel (%p313) target = $region24
      $region23: #{resblock2d_forward.5} parent=11 // pred_region
        _
      $region24: #{resblock2d_forward.5} parent=11 // pred_fallthru
        _
      // Predicated region
      $region25: #{resblock2d_forward.5} parent=11 // pred_check
        %p316 = pneg %p208
      $region26: #{resblock2d_forward.5} parent=11 // pred_check_branch
        %318 = sbr.rel (%p316) target = $region28
      $region27: #{resblock2d_forward.5} parent=11 // pred_region
        _
      $region28: #{resblock2d_forward.5} parent=11 // pred_fallthru
        _
    $region12: #{resblock2d_forward.5} parent=5 // pred_fallthru
      _
    %p319 = scmp.lt.s32.totalorder %s16, 2
    // Predicated region
    $region29: #{resblock2d_forward.5} parent=5 // pred_check
      %p320 = pneg %p319
    $region30: #{resblock2d_forward.5} parent=5 // pred_check_branch
      %322 = sbr.rel (%p320) target = $region32
    $region31: #{resblock2d_forward.5} parent=5 // pred_region
      // Predicated region
      $region33: #{resblock2d_forward.5} parent=31 // pred_check
        %p323 = pneg %p50
      $region34: #{resblock2d_forward.5} parent=31 // pred_check_branch
        %325 = sbr.rel (%p323) target = $region36
      $region35: #{resblock2d_forward.5} parent=31 // pred_region
        %s326 = smul.u32 2, %s24
        %p327 = scmp.lt.s32.totalorder %s23, 1
        %s328 = scalar_select %p327, %s23, 1
        %p329 = scmp.lt.s32.totalorder %s326, 1
        %s330 = scalar_select %p329, %s326, 1
        %s331 = smul.addr %s328, 4
        %s332 = sadd.s32 %s330, %s331
        %s333 = smul.addr %s332, 4
        %s334 = scalar_lea.vmem %s0, %s333
        %s335 = smul.u32 2, %s24
      $region36: #{resblock2d_forward.5} parent=31 // pred_fallthru
        _
      // Predicated region
      $region37: #{resblock2d_forward.5} parent=31 // pred_check
        %p336 = pneg %p84
      $region38: #{resblock2d_forward.5} parent=31 // pred_check_branch
        %338 = sbr.rel (%p336) target = $region40
      $region39: #{resblock2d_forward.5} parent=31 // pred_region
        %s339 = ssub.s32 %s24, 1
        %p340 = scmp.gt.s32.totalorder %s339, 0
        %s341 = scalar_select %p340, %s339, 0
        %s342 = smul.u32 2, %s341
        %p343 = scmp.lt.s32.totalorder %s23, 1
        %s344 = scalar_select %p343, %s23, 1
        %p345 = scmp.lt.s32.totalorder %s342, 1
        %s346 = scalar_select %p345, %s342, 1
        %s347 = smul.addr %s344, 4
        %s348 = sadd.s32 %s346, %s347
        %s349 = smul.addr %s348, 4
        %s350 = scalar_lea.vmem %s1, %s349
        %s351 = ssub.s32 %s24, 1
        %p352 = scmp.gt.s32.totalorder %s351, 0
        %s353 = scalar_select %p352, %s351, 0
        %s354 = smul.u32 2, %s353
      $region40: #{resblock2d_forward.5} parent=31 // pred_fallthru
        _
      // Predicated region
      $region41: #{resblock2d_forward.5} parent=31 // pred_check
        %p355 = pneg %p118
      $region42: #{resblock2d_forward.5} parent=31 // pred_check_branch
        %357 = sbr.rel (%p355) target = $region44
      $region43: #{resblock2d_forward.5} parent=31 // pred_region
        %s358 = sadd.s32 %s24, 1
        %p359 = scmp.lt.s32.totalorder %s358, 0
        %s360 = scalar_select %p359, %s358, 0
        %s361 = smul.u32 2, %s360
        %p362 = scmp.lt.s32.totalorder %s23, 1
        %s363 = scalar_select %p362, %s23, 1
        %p364 = scmp.lt.s32.totalorder %s361, 1
        %s365 = scalar_select %p364, %s361, 1
        %s366 = smul.addr %s363, 4
        %s367 = sadd.s32 %s365, %s366
        %s368 = smul.addr %s367, 4
        %s369 = scalar_lea.vmem %s2, %s368
        %s370 = sadd.s32 %s24, 1
        %p371 = scmp.lt.s32.totalorder %s370, 0
        %s372 = scalar_select %p371, %s370, 0
        %s373 = smul.u32 2, %s372
      $region44: #{resblock2d_forward.5} parent=31 // pred_fallthru
        _
    $region32: #{resblock2d_forward.5} parent=5 // pred_fallthru
      _
    %p374 = scmp.le.s32.totalorder 1, %s16
    %p375 = scmp.lt.s32.totalorder %s16, 3
    %p376 = pnand %p374, %p375
    %p377 = pneg %p376
    // Predicated region
    $region45: #{resblock2d_forward.5} parent=5 // pred_check
      _
    $region46: #{resblock2d_forward.5} parent=5 // pred_check_branch
      %379 = sbr.rel (%p376) target = $region48
    $region47: #{resblock2d_forward.5} parent=5 // pred_region
      %s380 = ssub.s32 %s16, 1
      %s381 = smul.u32 2, %s26
      %p382 = scmp.lt.s32.totalorder %s25, 1
      %s383 = scalar_select %p382, %s25, 1
      %p384 = scmp.lt.s32.totalorder %s381, 1
      %s385 = scalar_select %p384, %s381, 1
      %s386 = smul.addr %s383, 4
      %s387 = sadd.s32 %s385, %s386
      %s388 = smul.addr %s387, 4
      %s389 = scalar_lea.vmem %s0, %s388
      %p390 = pneg %p56
      %p391 = pneg %p53
      %s392 = ssub.s32 %s26, 1
      %p393 = scmp.gt.s32.totalorder %s392, 0
      %s394 = scalar_select %p393, %s392, 0
      %s395 = smul.u32 2, %s394
      %p396 = scmp.lt.s32.totalorder %s25, 1
      %s397 = scalar_select %p396, %s25, 1
      %p398 = scmp.lt.s32.totalorder %s395, 1
      %s399 = scalar_select %p398, %s395, 1
      %s400 = smul.addr %s397, 4
      %s401 = sadd.s32 %s399, %s400
      %s402 = smul.addr %s401, 4
      %s403 = scalar_lea.vmem %s1, %s402
      %p404 = pneg %p90
      %p405 = pneg %p87
      %s406 = sadd.s32 %s26, 1
      %p407 = scmp.lt.s32.totalorder %s406, 0
      %s408 = scalar_select %p407, %s406, 0
      %s409 = smul.u32 2, %s408
      %p410 = scmp.lt.s32.totalorder %s25, 1
      %s411 = scalar_select %p410, %s25, 1
      %p412 = scmp.lt.s32.totalorder %s409, 1
      %s413 = scalar_select %p412, %s409, 1
      %s414 = smul.addr %s411, 4
      %s415 = sadd.s32 %s413, %s414
      %s416 = smul.addr %s415, 4
      %s417 = scalar_lea.vmem %s2, %s416
      %p418 = pneg %p124
      %p419 = pneg %p121
      %p420 = pneg %p145
      %p421 = pneg %p142
      %p422 = pneg %p166
      %p423 = pneg %p163
      %p424 = pneg %p187
      %p425 = pneg %p184
      %p426 = pneg %p208
      %p427 = pneg %p205
      %p428 = pneg %p236
      %p429 = pneg %p233
      %s430 = smul.u32 2, %s26
      %p431 = scmp.lt.s32.totalorder %s25, 1
      %s432 = scalar_select %p431, %s25, 1
      %p433 = scmp.lt.s32.totalorder %s430, 1
      %s434 = scalar_select %p433, %s430, 1
      %s435 = smul.addr %s432, 4
      %s436 = sadd.s32 %s434, %s435
      %s437 = smul.addr %s436, 4
      %s438 = scalar_lea.vmem %s7, %s437
      %p439 = pneg %p264
      %p440 = pneg %p261
      %p441 = scmp.lt.s32.totalorder %s25, 1
      %s442 = scalar_select %p441, %s25, 1
      %p443 = scmp.lt.s32.totalorder %s26, 0
      %s444 = scalar_select %p443, %s26, 0
      %s445 = sadd.s32 %s444, %s442
      %s446 = scalar_lea.vmem %s8, %s445
      %p447 = pneg %p292
      %p448 = pneg %p289
      %p449 = scmp.lt.s32.totalorder %s25, 1
      %s450 = scalar_select %p449, %s25, 1
      %p451 = scmp.lt.s32.totalorder %s26, 0
      %s452 = scalar_select %p451, %s26, 0
      %s453 = sadd.s32 %s452, %s450
      %s454 = scalar_lea.vmem %s9, %s453
      %s455 = smul.u32 2, %s26
      %p456 = scmp.lt.s32.totalorder %s25, 1
      %s457 = scalar_select %p456, %s25, 1
      %p458 = scmp.lt.s32.totalorder %s455, 1
      %s459 = scalar_select %p458, %s455, 1
      %s460 = smul.addr %s457, 4
      %s461 = sadd.s32 %s459, %s460
      %s462 = smul.addr %s461, 4
      %s463 = scalar_lea.vmem %s0, %s462
      %s464 = smul.u32 2, %s26
      %s465 = ssub.s32 %s26, 1
      %p466 = scmp.gt.s32.totalorder %s465, 0
      %s467 = scalar_select %p466, %s465, 0
      %s468 = smul.u32 2, %s467
      %p469 = scmp.lt.s32.totalorder %s25, 1
      %s470 = scalar_select %p469, %s25, 1
      %p471 = scmp.lt.s32.totalorder %s468, 1
      %s472 = scalar_select %p471, %s468, 1
      %s473 = smul.addr %s470, 4
      %s474 = sadd.s32 %s472, %s473
      %s475 = smul.addr %s474, 4
      %s476 = scalar_lea.vmem %s1, %s475
      %s477 = ssub.s32 %s26, 1
      %p478 = scmp.gt.s32.totalorder %s477, 0
      %s479 = scalar_select %p478, %s477, 0
      %s480 = smul.u32 2, %s479
      %s481 = sadd.s32 %s26, 1
      %p482 = scmp.lt.s32.totalorder %s481, 0
      %s483 = scalar_select %p482, %s481, 0
      %s484 = smul.u32 2, %s483
      %p485 = scmp.lt.s32.totalorder %s25, 1
      %s486 = scalar_select %p485, %s25, 1
      %p487 = scmp.lt.s32.totalorder %s484, 1
      %s488 = scalar_select %p487, %s484, 1
      %s489 = smul.addr %s486, 4
      %s490 = sadd.s32 %s488, %s489
      %s491 = smul.addr %s490, 4
      %s492 = scalar_lea.vmem %s2, %s491
      %s493 = sadd.s32 %s26, 1
      %p494 = scmp.lt.s32.totalorder %s493, 0
      %s495 = scalar_select %p494, %s493, 0
      %s496 = smul.u32 2, %s495
      %s497 = smul.u32 2, %s26
      %p498 = scmp.lt.s32.totalorder %s25, 1
      %s499 = scalar_select %p498, %s25, 1
      %p500 = scmp.lt.s32.totalorder %s497, 1
      %s501 = scalar_select %p500, %s497, 1
      %s502 = smul.addr %s499, 4
      %s503 = sadd.s32 %s501, %s502
      %s504 = smul.addr %s503, 4
      %s505 = scalar_lea.vmem %s7, %s504
      %s506 = smul.u32 2, %s26
      %p507 = scmp.lt.s32.totalorder %s25, 1
      %s508 = scalar_select %p507, %s25, 1
      %p509 = scmp.lt.s32.totalorder %s26, 0
      %s510 = scalar_select %p509, %s26, 0
      %s511 = sadd.s32 %s510, %s508
      %s512 = scalar_lea.vmem %s8, %s511
      %p513 = scmp.lt.s32.totalorder %s25, 1
      %s514 = scalar_select %p513, %s25, 1
      %p515 = scmp.lt.s32.totalorder %s26, 0
      %s516 = scalar_select %p515, %s26, 0
      %s517 = sadd.s32 %s516, %s514
      %s518 = scalar_lea.vmem %s9, %s517
      %v520 = vld [vmem:[%s4] sm:$0xff]
      %v521 = vld [vmem:[%s4 + $0x8] sm:$0xff]
      %v522 = vld [vmem:[%s5] sm:$0xff]
      %v523 = vld [vmem:[%s5 + $0x8] sm:$0xff]
      %v524 = vld [vmem:[%s6] sm:$0xff]
      %v525 = vld [vmem:[%s463] sm:$0xff]
      %v526 = vld [vmem:[%s463 + $0x8] sm:$0xff]
      %v527 = vunpack.c.l.bf16 %v525
      %v528 = vunpack.c.h.bf16 %v525
      %v529 = vunpack.c.l.bf16 %v526
      %v530 = vunpack.c.h.bf16 %v526
      %532 = vset.pattern.permute.xlu0 0
      %533 = vperm.xlu0 %532, %v520
      %v534 = vpop.permute.xlu0 %533
      %537 = vset.pattern.permute.xlu0 0
      %538 = vperm.xlu0 %537, %v521
      %v539 = vpop.permute.xlu0 %538
      %v541 = vmul.f32 %v527, %v534
      %v542 = vmul.f32 %v528, %v534
      %v543 = vmul.f32 %v529, %v539
      %v544 = vmul.f32 %v530, %v539
      %546 = vset.pattern.permute.xlu0 0
      %547 = vperm.xlu0 %546, %v522
      %v548 = vpop.permute.xlu0 %547
      %551 = vset.pattern.permute.xlu0 0
      %552 = vperm.xlu0 %551, %v523
      %v553 = vpop.permute.xlu0 %552
      %v555 = vadd.f32 %v541, %v548
      %v556 = vadd.f32 %v542, %v548
      %v557 = vadd.f32 %v543, %v553
      %v558 = vadd.f32 %v544, %v553
      %v559 = vmax.f32 %v555, 0.0
      %v560 = vmax.f32 %v556, 0.0
      %v561 = vmax.f32 %v557, 0.0
      %v562 = vmax.f32 %v558, 0.0
      %p563 = scmp.gt.s32.totalorder %s26, 0
      %s564 = scalar_select %p563, 1, 0
      %s565 = scvt.s32.f32 %s564
      %p566 = scmp.lt.s32.totalorder %s26, 0
      %s567 = scalar_select %p566, 1, 0
      %s568 = scvt.s32.f32 %s567
      %v569 = vsub.f32 1.0, %v524
      %v571 = vlaneseq
      %v572 = vshrl.u32 %v571, 7
      %v573 = vsub.s32 2, %v572
      %v574 = vrot.slane %v569, %v573
      %v575 = vlaneseq
      %v576 = vshrl.u32 %v575, 7
      %v577 = vsub.s32 6, %v576
      %v578 = vrot.slane %v569, %v577
      %v581 = vlaneseq
      %v582 = vshrl.u32 %v581, 7
      %v583 = vsub.s32 2, %v582
      %v584 = vrot.slane %v574, %v583
      %v585 = vlaneseq
      %v586 = vshrl.u32 %v585, 7
      %v587 = vsub.s32 2, %v586
      %v588 = vrot.slane %v578, %v587
      %v589 = vmul.f32 %v559, %v584
      %v590 = vmul.f32 %v560, %v588
      %v591 = vmul.f32 %v561, %v584
      %v592 = vmul.f32 %v562, %v588
      %v593 = vld [vmem:[%s476] sm:$0xff]
      %v594 = vld [vmem:[%s476 + $0x8] sm:$0xff]
      %v595 = vunpack.c.l.bf16 %v593
      %v596 = vunpack.c.h.bf16 %v593
      %v597 = vunpack.c.l.bf16 %v594
      %v598 = vunpack.c.h.bf16 %v594
      %v599 = vmul.f32 %v595, %v534
      %v600 = vmul.f32 %v596, %v534
      %v601 = vmul.f32 %v597, %v539
      %v602 = vmul.f32 %v598, %v539
      %v603 = vadd.f32 %v599, %v548
      %v604 = vadd.f32 %v600, %v548
      %v605 = vadd.f32 %v601, %v553
      %v606 = vadd.f32 %v602, %v553
      %v607 = vmax.f32 %v603, 0.0
      %v608 = vmax.f32 %v604, 0.0
      %v609 = vmax.f32 %v605, 0.0
      %v610 = vmax.f32 %v606, 0.0
      %v611 = vstv %s565
      %v612 = vmul.f32 %v524, %v611
      %v614 = vlaneseq
      %v615 = vshrl.u32 %v614, 7
      %v616 = vsub.s32 2, %v615
      %v617 = vrot.slane %v612, %v616
      %v618 = vlaneseq
      %v619 = vshrl.u32 %v618, 7
      %v620 = vsub.s32 6, %v619
      %v621 = vrot.slane %v612, %v620
      %v624 = vlaneseq
      %v625 = vshrl.u32 %v624, 7
      %v626 = vsub.s32 2, %v625
      %v627 = vrot.slane %v617, %v626
      %v628 = vlaneseq
      %v629 = vshrl.u32 %v628, 7
      %v630 = vsub.s32 2, %v629
      %v631 = vrot.slane %v621, %v630
      %v632 = vmul.f32 %v607, %v627
      %v633 = vmul.f32 %v608, %v631
      %v634 = vmul.f32 %v609, %v627
      %v635 = vmul.f32 %v610, %v631
      %v636 = vadd.f32 %v589, %v632
      %v637 = vadd.f32 %v590, %v633
      %v638 = vadd.f32 %v591, %v634
      %v639 = vadd.f32 %v592, %v635
      %v640 = vlaneseq
      %v641 = vshrl.u32 %v640, 7
      %v642 = vsub.s32 3, %v641
      %v643 = vrot.slane %v569, %v642
      %v644 = vlaneseq
      %v645 = vshrl.u32 %v644, 7
      %v646 = vsub.s32 7, %v645
      %v647 = vrot.slane %v569, %v646
      %v650 = vlaneseq
      %v651 = vshrl.u32 %v650, 7
      %v652 = vsub.s32 3, %v651
      %v653 = vrot.slane %v643, %v652
      %v654 = vlaneseq
      %v655 = vshrl.u32 %v654, 7
      %v656 = vsub.s32 3, %v655
      %v657 = vrot.slane %v647, %v656
      %v658 = vmul.f32 %v559, %v653
      %v659 = vmul.f32 %v560, %v657
      %v660 = vmul.f32 %v561, %v653
      %v661 = vmul.f32 %v562, %v657
      %v662 = vld [vmem:[%s492] sm:$0xff]
      %v663 = vld [vmem:[%s492 + $0x8] sm:$0xff]
      %v664 = vunpack.c.l.bf16 %v662
      %v665 = vunpack.c.h.bf16 %v662
      %v666 = vunpack.c.l.bf16 %v663
      %v667 = vunpack.c.h.bf16 %v663
      %v668 = vmul.f32 %v664, %v534
      %v669 = vmul.f32 %v665, %v534
      %v670 = vmul.f32 %v666, %v539
      %v671 = vmul.f32 %v667, %v539
      %v672 = vadd.f32 %v668, %v548
      %v673 = vadd.f32 %v669, %v548
      %v674 = vadd.f32 %v670, %v553
      %v675 = vadd.f32 %v671, %v553
      %v676 = vmax.f32 %v672, 0.0
      %v677 = vmax.f32 %v673, 0.0
      %v678 = vmax.f32 %v674, 0.0
      %v679 = vmax.f32 %v675, 0.0
      %v680 = vstv %s568
      %v681 = vmul.f32 %v524, %v680
      %v683 = vlaneseq
      %v684 = vshrl.u32 %v683, 7
      %v685 = vsub.s32 3, %v684
      %v686 = vrot.slane %v681, %v685
      %v687 = vlaneseq
      %v688 = vshrl.u32 %v687, 7
      %v689 = vsub.s32 7, %v688
      %v690 = vrot.slane %v681, %v689
      %v693 = vlaneseq
      %v694 = vshrl.u32 %v693, 7
      %v695 = vsub.s32 3, %v694
      %v696 = vrot.slane %v686, %v695
      %v697 = vlaneseq
      %v698 = vshrl.u32 %v697, 7
      %v699 = vsub.s32 3, %v698
      %v700 = vrot.slane %v690, %v699
      %v701 = vmul.f32 %v676, %v696
      %v702 = vmul.f32 %v677, %v700
      %v703 = vmul.f32 %v678, %v696
      %v704 = vmul.f32 %v679, %v700
      %v705 = vadd.f32 %v658, %v701
      %v706 = vadd.f32 %v659, %v702
      %v707 = vadd.f32 %v660, %v703
      %v708 = vadd.f32 %v661, %v704
      %709 = vrot.lane.b32.xlu0 %v636, 17
      %v710 = vpop.permute.xlu0 %709
      %711 = vrot.lane.b32.xlu0 %v638, 17
      %v712 = vpop.permute.xlu0 %711
      %713 = vrot.lane.b32.xlu0 %v637, 17
      %v714 = vpop.permute.xlu0 %713
      %715 = vrot.lane.b32.xlu0 %v639, 17
      %v716 = vpop.permute.xlu0 %715
      %v717 = vlaneseq
      %v718 = vand.u32 %v717, 127
      %vm719 = vcmp.lt.s32.totalorder %v718, 17
      %v720 = vsel %vm719, %v710, %v714
      %v721 = vsel %vm719, %v712, %v716
      %v722 = vsel %vm719, %v714, %v710
      %v723 = vsel %vm719, %v716, %v712
      %v725 = vlaneseq
      %v726 = vshrl.u32 %v725, 7
      %v727 = vsub.s32 0, %v726
      %v728 = vrot.slane %v524, %v727
      %v729 = vlaneseq
      %v730 = vshrl.u32 %v729, 7
      %v731 = vsub.s32 4, %v730
      %v732 = vrot.slane %v524, %v731
      %v735 = vlaneseq
      %v736 = vshrl.u32 %v735, 7
      %v737 = vsub.s32 0, %v736
      %v738 = vrot.slane %v728, %v737
      %v739 = vlaneseq
      %v740 = vshrl.u32 %v739, 7
      %v741 = vsub.s32 0, %v740
      %v742 = vrot.slane %v732, %v741
      %v743 = vmul.f32 %v722, %v738
      %v744 = vmul.f32 %v720, %v742
      %v745 = vmul.f32 %v723, %v738
      %v746 = vmul.f32 %v721, %v742
      %v747 = vld [vmem:[%s3] sm:$0xf]
      %v748 = vld [vmem:[%s3 + $0x4] sm:$0xf]
      %v749 = vpack.c.bf16 %v745, %v743
      %v750 = vpack.c.bf16 %v746, %v744
      %751 = vrot.lane.b32.xlu0 %v636, 16
      %v752 = vpop.permute.xlu0 %751
      %753 = vrot.lane.b32.xlu0 %v638, 16
      %v754 = vpop.permute.xlu0 %753
      %755 = vrot.lane.b32.xlu0 %v637, 16
      %v756 = vpop.permute.xlu0 %755
      %757 = vrot.lane.b32.xlu0 %v639, 16
      %v758 = vpop.permute.xlu0 %757
      %vm759 = vcmp.lt.s32.totalorder %v718, 16
      %v760 = vsel %vm759, %v752, %v756
      %v761 = vsel %vm759, %v754, %v758
      %v762 = vsel %vm759, %v756, %v752
      %v763 = vsel %vm759, %v758, %v754
      %s764 = scalar_lea.vmem %s3, 8
      %v765 = vld [vmem:[%s764] sm:$0xf]
      %v766 = vld [vmem:[%s764 + $0x4] sm:$0xf]
      %v767 = vpack.c.bf16 %v763, %v762
      %v768 = vpack.c.bf16 %v761, %v760
      %v771 = vunpack.c.l.b16 %v765
      %v772 = vunpack.c.l.b16 %v766
      %v773 = vpack.c.b16 %v772, %v771
      %vm774 = vcmask 130048
      %v776 = vsel %vm774, %v773, 0
      %778 = vmatprep.subr.bf16.mxu0 %v768
      %779 = vmatpush1.bf16.msra.mxu0 %v767
      %780 = vmatprep.subr.bf16.mxu0 0
      %781 = vmatpush1.bf16.msra.mxu0 0
      %782 = vmatprep.subr.bf16.mxu0 0
      %783 = vmatpush1.bf16.msra.mxu0 0
      %784 = vmatprep.subr.bf16.mxu0 0
      %785 = vmatpush1.bf16.msra.mxu0 0
      %786 = vmatprep.subr.bf16.mxu0 0
      %787 = vmatpush1.bf16.msra.mxu0 0
      %788 = vmatprep.subr.bf16.mxu0 0
      %789 = vmatpush1.bf16.msra.mxu0 0
      %790 = vmatprep.subr.bf16.mxu0 0
      %791 = vmatpush1.bf16.msra.mxu0 0
      %792 = vmatprep.subr.bf16.mxu0 0
      %793 = vmatpush1.bf16.msra.mxu0 0
      %794 = vmatprep.subr.bf16.mxu0 0
      %795 = vmatpush1.bf16.msra.mxu0 0
      %796 = vmatprep.subr.bf16.mxu0 0
      %797 = vmatpush1.bf16.msra.mxu0 0
      %798 = vmatprep.subr.bf16.mxu0 0
      %799 = vmatpush1.bf16.msra.mxu0 0
      %800 = vmatprep.subr.bf16.mxu0 0
      %801 = vmatpush1.bf16.msra.mxu0 0
      %802 = vmatprep.subr.bf16.mxu0 0
      %803 = vmatpush1.bf16.msra.mxu0 0
      %804 = vmatprep.subr.bf16.mxu0 0
      %805 = vmatpush1.bf16.msra.mxu0 0
      %806 = vmatprep.subr.bf16.mxu0 0
      %807 = vmatpush1.bf16.msra.mxu0 0
      %808 = vmatprep.subr.bf16.mxu0 0
      %809 = vmatpush1.bf16.msra.mxu0 0
      %810 = vmatprep.mubr.bf16.mxu0 0
      %811 = vmatmul.mubr.bf16.gmra.mrb[0].mxu0 %v776
      %v812 = vpop.f32.mrb[0].mxu0
      %v813 = vadd.f32 0.0, %v812
      %v814 = vpop.f32.mrb[0].mxu0
      %v815 = vadd.f32 0.0, %v814
      %v816 = vpop.f32.mrb[0].mxu0
      %v817 = vadd.f32 0.0, %v816
      %v818 = vpop.f32.mrb[0].mxu0
      %v819 = vadd.f32 0.0, %v818
      %820 = vdwg.mxu0
      %v823 = vunpack.c.l.b16 %v747
      %v824 = vunpack.c.l.b16 %v748
      %v825 = vpack.c.b16 %v824, %v823
      %v827 = vsel %vm774, %v825, 0
      %829 = vmatprep.subr.bf16.mxu0 %v750
      %830 = vmatpush1.bf16.msra.mxu0 %v749
      %831 = vmatprep.subr.bf16.mxu0 0
      %832 = vmatpush1.bf16.msra.mxu0 0
      %833 = vmatprep.subr.bf16.mxu0 0
      %834 = vmatpush1.bf16.msra.mxu0 0
      %835 = vmatprep.subr.bf16.mxu0 0
      %836 = vmatpush1.bf16.msra.mxu0 0
      %837 = vmatprep.subr.bf16.mxu0 0
      %838 = vmatpush1.bf16.msra.mxu0 0
      %839 = vmatprep.subr.bf16.mxu0 0
      %840 = vmatpush1.bf16.msra.mxu0 0
      %841 = vmatprep.subr.bf16.mxu0 0
      %842 = vmatpush1.bf16.msra.mxu0 0
      %843 = vmatprep.subr.bf16.mxu0 0
      %844 = vmatpush1.bf16.msra.mxu0 0
      %845 = vmatprep.subr.bf16.mxu0 0
      %846 = vmatpush1.bf16.msra.mxu0 0
      %847 = vmatprep.subr.bf16.mxu0 0
      %848 = vmatpush1.bf16.msra.mxu0 0
      %849 = vmatprep.subr.bf16.mxu0 0
      %850 = vmatpush1.bf16.msra.mxu0 0
      %851 = vmatprep.subr.bf16.mxu0 0
      %852 = vmatpush1.bf16.msra.mxu0 0
      %853 = vmatprep.subr.bf16.mxu0 0
      %854 = vmatpush1.bf16.msra.mxu0 0
      %855 = vmatprep.subr.bf16.mxu0 0
      %856 = vmatpush1.bf16.msra.mxu0 0
      %857 = vmatprep.subr.bf16.mxu0 0
      %858 = vmatpush1.bf16.msra.mxu0 0
      %859 = vmatprep.subr.bf16.mxu0 0
      %860 = vmatpush1.bf16.msra.mxu0 0
      %861 = vmatprep.mubr.bf16.mxu0 0
      %862 = vmatmul.mubr.bf16.gmra.mrb[0].mxu0 %v827
      %v863 = vpop.f32.mrb[0].mxu0
      %v864 = vadd.f32 %v813, %v863
      %v865 = vpop.f32.mrb[0].mxu0
      %v866 = vadd.f32 %v815, %v865
      %v867 = vpop.f32.mrb[0].mxu0
      %v868 = vadd.f32 %v817, %v867
      %v869 = vpop.f32.mrb[0].mxu0
      %v870 = vadd.f32 %v819, %v869
      %871 = vdwg.mxu0
      %872 = vrot.lane.b32.xlu0 %v636, 15
      %v873 = vpop.permute.xlu0 %872
      %874 = vrot.lane.b32.xlu0 %v638, 15
      %v875 = vpop.permute.xlu0 %874
      %876 = vrot.lane.b32.xlu0 %v637, 15
      %v877 = vpop.permute.xlu0 %876
      %878 = vrot.lane.b32.xlu0 %v639, 15
      %v879 = vpop.permute.xlu0 %878
      %vm880 = vcmp.lt.s32.totalorder %v718, 15
      %v881 = vsel %vm880, %v873, %v877
      %v882 = vsel %vm880, %v875, %v879
      %v883 = vsel %vm880, %v877, %v873
      %v884 = vsel %vm880, %v879, %v875
      %v885 = vlaneseq
      %v886 = vshrl.u32 %v885, 7
      %v887 = vsub.s32 1, %v886
      %v888 = vrot.slane %v524, %v887
      %v889 = vlaneseq
      %v890 = vshrl.u32 %v889, 7
      %v891 = vsub.s32 5, %v890
      %v892 = vrot.slane %v524, %v891
      %v895 = vlaneseq
      %v896 = vshrl.u32 %v895, 7
      %v897 = vsub.s32 1, %v896
      %v898 = vrot.slane %v888, %v897
      %v899 = vlaneseq
      %v900 = vshrl.u32 %v899, 7
      %v901 = vsub.s32 1, %v900
      %v902 = vrot.slane %v892, %v901
      %v903 = vmul.f32 %v883, %v898
      %v904 = vmul.f32 %v881, %v902
      %v905 = vmul.f32 %v884, %v898
      %v906 = vmul.f32 %v882, %v902
      %s907 = scalar_lea.vmem %s3, 16
      %v908 = vld [vmem:[%s907] sm:$0xf]
      %v909 = vld [vmem:[%s907 + $0x4] sm:$0xf]
      %v910 = vpack.c.bf16 %v905, %v903
      %v911 = vpack.c.bf16 %v906, %v904
      %v914 = vunpack.c.l.b16 %v908
      %v915 = vunpack.c.l.b16 %v909
      %v916 = vpack.c.b16 %v915, %v914
      %v918 = vsel %vm774, %v916, 0
      %920 = vmatprep.subr.bf16.mxu0 %v911
      %921 = vmatpush1.bf16.msra.mxu0 %v910
      %922 = vmatprep.subr.bf16.mxu0 0
      %923 = vmatpush1.bf16.msra.mxu0 0
      %924 = vmatprep.subr.bf16.mxu0 0
      %925 = vmatpush1.bf16.msra.mxu0 0
      %926 = vmatprep.subr.bf16.mxu0 0
      %927 = vmatpush1.bf16.msra.mxu0 0
      %928 = vmatprep.subr.bf16.mxu0 0
      %929 = vmatpush1.bf16.msra.mxu0 0
      %930 = vmatprep.subr.bf16.mxu0 0
      %931 = vmatpush1.bf16.msra.mxu0 0
      %932 = vmatprep.subr.bf16.mxu0 0
      %933 = vmatpush1.bf16.msra.mxu0 0
      %934 = vmatprep.subr.bf16.mxu0 0
      %935 = vmatpush1.bf16.msra.mxu0 0
      %936 = vmatprep.subr.bf16.mxu0 0
      %937 = vmatpush1.bf16.msra.mxu0 0
      %938 = vmatprep.subr.bf16.mxu0 0
      %939 = vmatpush1.bf16.msra.mxu0 0
      %940 = vmatprep.subr.bf16.mxu0 0
      %941 = vmatpush1.bf16.msra.mxu0 0
      %942 = vmatprep.subr.bf16.mxu0 0
      %943 = vmatpush1.bf16.msra.mxu0 0
      %944 = vmatprep.subr.bf16.mxu0 0
      %945 = vmatpush1.bf16.msra.mxu0 0
      %946 = vmatprep.subr.bf16.mxu0 0
      %947 = vmatpush1.bf16.msra.mxu0 0
      %948 = vmatprep.subr.bf16.mxu0 0
      %949 = vmatpush1.bf16.msra.mxu0 0
      %950 = vmatprep.subr.bf16.mxu0 0
      %951 = vmatpush1.bf16.msra.mxu0 0
      %952 = vmatprep.mubr.bf16.mxu0 0
      %953 = vmatmul.mubr.bf16.gmra.mrb[0].mxu0 %v918
      %v954 = vpop.f32.mrb[0].mxu0
      %v955 = vadd.f32 0.0, %v954
      %v956 = vpop.f32.mrb[0].mxu0
      %v957 = vadd.f32 0.0, %v956
      %v958 = vpop.f32.mrb[0].mxu0
      %v959 = vadd.f32 0.0, %v958
      %v960 = vpop.f32.mrb[0].mxu0
      %v961 = vadd.f32 0.0, %v960
      %962 = vdwg.mxu0
      %v963 = vadd.f32 %v864, %v955
      %v964 = vadd.f32 %v866, %v957
      %v965 = vadd.f32 %v868, %v959
      %v966 = vadd.f32 %v870, %v961
      %967 = vrot.lane.b32.xlu0 %v559, 1
      %v968 = vpop.permute.xlu0 %967
      %969 = vrot.lane.b32.xlu0 %v561, 1
      %v970 = vpop.permute.xlu0 %969
      %971 = vrot.lane.b32.xlu0 %v560, 1
      %v972 = vpop.permute.xlu0 %971
      %973 = vrot.lane.b32.xlu0 %v562, 1
      %v974 = vpop.permute.xlu0 %973
      %vm975 = vcmp.lt.s32.totalorder %v718, 1
      %v976 = vsel %vm975, %v968, %v972
      %v977 = vsel %vm975, %v970, %v974
      %v978 = vsel %vm975, %v972, %v968
      %v979 = vsel %vm975, %v974, %v970
      %v980 = vmul.f32 %v978, %v738
      %v981 = vmul.f32 %v976, %v742
      %v982 = vmul.f32 %v979, %v738
      %v983 = vmul.f32 %v977, %v742
      %s984 = scalar_lea.vmem %s3, 24
      %v985 = vld [vmem:[%s984] sm:$0xf]
      %v986 = vld [vmem:[%s984 + $0x4] sm:$0xf]
      %v987 = vpack.c.bf16 %v982, %v980
      %v988 = vpack.c.bf16 %v983, %v981
      %v991 = vunpack.c.l.b16 %v985
      %v992 = vunpack.c.l.b16 %v986
      %v993 = vpack.c.b16 %v992, %v991
      %v995 = vsel %vm774, %v993, 0
      %997 = vmatprep.subr.bf16.mxu0 %v988
      %998 = vmatpush1.bf16.msra.mxu0 %v987
      %999 = vmatprep.subr.bf16.mxu0 0
      %1000 = vmatpush1.bf16.msra.mxu0 0
      %1001 = vmatprep.subr.bf16.mxu0 0
      %1002 = vmatpush1.bf16.msra.mxu0 0
      %1003 = vmatprep.subr.bf16.mxu0 0
      %1004 = vmatpush1.bf16.msra.mxu0 0
      %1005 = vmatprep.subr.bf16.mxu0 0
      %1006 = vmatpush1.bf16.msra.mxu0 0
      %1007 = vmatprep.subr.bf16.mxu0 0
      %1008 = vmatpush1.bf16.msra.mxu0 0
      %1009 = vmatprep.subr.bf16.mxu0 0
      %1010 = vmatpush1.bf16.msra.mxu0 0
      %1011 = vmatprep.subr.bf16.mxu0 0
      %1012 = vmatpush1.bf16.msra.mxu0 0
      %1013 = vmatprep.subr.bf16.mxu0 0
      %1014 = vmatpush1.bf16.msra.mxu0 0
      %1015 = vmatprep.subr.bf16.mxu0 0
      %1016 = vmatpush1.bf16.msra.mxu0 0
      %1017 = vmatprep.subr.bf16.mxu0 0
      %1018 = vmatpush1.bf16.msra.mxu0 0
      %1019 = vmatprep.subr.bf16.mxu0 0
      %1020 = vmatpush1.bf16.msra.mxu0 0
      %1021 = vmatprep.subr.bf16.mxu0 0
      %1022 = vmatpush1.bf16.msra.mxu0 0
      %1023 = vmatprep.subr.bf16.mxu0 0
      %1024 = vmatpush1.bf16.msra.mxu0 0
      %1025 = vmatprep.subr.bf16.mxu0 0
      %1026 = vmatpush1.bf16.msra.mxu0 0
      %1027 = vmatprep.subr.bf16.mxu0 0
      %1028 = vmatpush1.bf16.msra.mxu0 0
      %1029 = vmatprep.mubr.bf16.mxu0 0
      %1030 = vmatmul.mubr.bf16.gmra.mrb[0].mxu0 %v995
      %v1031 = vpop.f32.mrb[0].mxu0
      %v1032 = vadd.f32 0.0, %v1031
      %v1033 = vpop.f32.mrb[0].mxu0
      %v1034 = vadd.f32 0.0, %v1033
      %v1035 = vpop.f32.mrb[0].mxu0
      %v1036 = vadd.f32 0.0, %v1035
      %v1037 = vpop.f32.mrb[0].mxu0
      %v1038 = vadd.f32 0.0, %v1037
      %1039 = vdwg.mxu0
      %v1040 = vadd.f32 %v963, %v1032
      %v1041 = vadd.f32 %v964, %v1034
      %v1042 = vadd.f32 %v965, %v1036
      %v1043 = vadd.f32 %v966, %v1038
      %s1044 = scalar_lea.vmem %s3, 32
      %v1045 = vld [vmem:[%s1044] sm:$0xf]
      %v1046 = vld [vmem:[%s1044 + $0x4] sm:$0xf]
      %v1047 = vpack.c.bf16 %v561, %v559
      %v1048 = vpack.c.bf16 %v562, %v560
      %v1051 = vunpack.c.l.b16 %v1045
      %v1052 = vunpack.c.l.b16 %v1046
      %v1053 = vpack.c.b16 %v1052, %v1051
      %v1055 = vsel %vm774, %v1053, 0
      %1057 = vmatprep.subr.bf16.mxu0 %v1048
      %1058 = vmatpush1.bf16.msra.mxu0 %v1047
      %1059 = vmatprep.subr.bf16.mxu0 0
      %1060 = vmatpush1.bf16.msra.mxu0 0
      %1061 = vmatprep.subr.bf16.mxu0 0
      %1062 = vmatpush1.bf16.msra.mxu0 0
      %1063 = vmatprep.subr.bf16.mxu0 0
      %1064 = vmatpush1.bf16.msra.mxu0 0
      %1065 = vmatprep.subr.bf16.mxu0 0
      %1066 = vmatpush1.bf16.msra.mxu0 0
      %1067 = vmatprep.subr.bf16.mxu0 0
      %1068 = vmatpush1.bf16.msra.mxu0 0
      %1069 = vmatprep.subr.bf16.mxu0 0
      %1070 = vmatpush1.bf16.msra.mxu0 0
      %1071 = vmatprep.subr.bf16.mxu0 0
      %1072 = vmatpush1.bf16.msra.mxu0 0
      %1073 = vmatprep.subr.bf16.mxu0 0
      %1074 = vmatpush1.bf16.msra.mxu0 0
      %1075 = vmatprep.subr.bf16.mxu0 0
      %1076 = vmatpush1.bf16.msra.mxu0 0
      %1077 = vmatprep.subr.bf16.mxu0 0
      %1078 = vmatpush1.bf16.msra.mxu0 0
      %1079 = vmatprep.subr.bf16.mxu0 0
      %1080 = vmatpush1.bf16.msra.mxu0 0
      %1081 = vmatprep.subr.bf16.mxu0 0
      %1082 = vmatpush1.bf16.msra.mxu0 0
      %1083 = vmatprep.subr.bf16.mxu0 0
      %1084 = vmatpush1.bf16.msra.mxu0 0
      %1085 = vmatprep.subr.bf16.mxu0 0
      %1086 = vmatpush1.bf16.msra.mxu0 0
      %1087 = vmatprep.subr.bf16.mxu0 0
      %1088 = vmatpush1.bf16.msra.mxu0 0
      %1089 = vmatprep.mubr.bf16.mxu0 0
      %1090 = vmatmul.mubr.bf16.gmra.mrb[0].mxu0 %v1055
      %v1091 = vpop.f32.mrb[0].mxu0
      %v1092 = vadd.f32 0.0, %v1091
      %v1093 = vpop.f32.mrb[0].mxu0
      %v1094 = vadd.f32 0.0, %v1093
      %v1095 = vpop.f32.mrb[0].mxu0
      %v1096 = vadd.f32 0.0, %v1095
      %v1097 = vpop.f32.mrb[0].mxu0
      %v1098 = vadd.f32 0.0, %v1097
      %1099 = vdwg.mxu0
      %v1100 = vadd.f32 %v1040, %v1092
      %v1101 = vadd.f32 %v1041, %v1094
      %v1102 = vadd.f32 %v1042, %v1096
      %v1103 = vadd.f32 %v1043, %v1098
      %1104 = vrot.lane.b32.xlu0 %v559, 127
      %v1105 = vpop.permute.xlu0 %1104
      %1106 = vrot.lane.b32.xlu0 %v561, 127
      %v1107 = vpop.permute.xlu0 %1106
      %1108 = vrot.lane.b32.xlu0 %v560, 127
      %v1109 = vpop.permute.xlu0 %1108
      %1110 = vrot.lane.b32.xlu0 %v562, 127
      %v1111 = vpop.permute.xlu0 %1110
      %vm1112 = vcmp.lt.s32.totalorder %v718, 127
      %v1113 = vsel %vm1112, %v1105, %v1109
      %v1114 = vsel %vm1112, %v1107, %v1111
      %v1115 = vsel %vm1112, %v1109, %v1105
      %v1116 = vsel %vm1112, %v1111, %v1107
      %v1117 = vmul.f32 %v1113, %v898
      %v1118 = vmul.f32 %v1115, %v902
      %v1119 = vmul.f32 %v1114, %v898
      %v1120 = vmul.f32 %v1116, %v902
      %s1121 = scalar_lea.vmem %s3, 40
      %v1122 = vld [vmem:[%s1121] sm:$0xf]
      %v1123 = vld [vmem:[%s1121 + $0x4] sm:$0xf]
      %v1124 = vpack.c.bf16 %v1119, %v1117
      %v1125 = vpack.c.bf16 %v1120, %v1118
      %v1128 = vunpack.c.l.b16 %v1122
      %v1129 = vunpack.c.l.b16 %v1123
      %v1130 = vpack.c.b16 %v1129, %v1128
      %v1132 = vsel %vm774, %v1130, 0
      %1134 = vmatprep.subr.bf16.mxu0 %v1125
      %1135 = vmatpush1.bf16.msra.mxu0 %v1124
      %1136 = vmatprep.subr.bf16.mxu0 0
      %1137 = vmatpush1.bf16.msra.mxu0 0
      %1138 = vmatprep.subr.bf16.mxu0 0
      %1139 = vmatpush1.bf16.msra.mxu0 0
      %1140 = vmatprep.subr.bf16.mxu0 0
      %1141 = vmatpush1.bf16.msra.mxu0 0
      %1142 = vmatprep.subr.bf16.mxu0 0
      %1143 = vmatpush1.bf16.msra.mxu0 0
      %1144 = vmatprep.subr.bf16.mxu0 0
      %1145 = vmatpush1.bf16.msra.mxu0 0
      %1146 = vmatprep.subr.bf16.mxu0 0
      %1147 = vmatpush1.bf16.msra.mxu0 0
      %1148 = vmatprep.subr.bf16.mxu0 0
      %1149 = vmatpush1.bf16.msra.mxu0 0
      %1150 = vmatprep.subr.bf16.mxu0 0
      %1151 = vmatpush1.bf16.msra.mxu0 0
      %1152 = vmatprep.subr.bf16.mxu0 0
      %1153 = vmatpush1.bf16.msra.mxu0 0
      %1154 = vmatprep.subr.bf16.mxu0 0
      %1155 = vmatpush1.bf16.msra.mxu0 0
      %1156 = vmatprep.subr.bf16.mxu0 0
      %1157 = vmatpush1.bf16.msra.mxu0 0
      %1158 = vmatprep.subr.bf16.mxu0 0
      %1159 = vmatpush1.bf16.msra.mxu0 0
      %1160 = vmatprep.subr.bf16.mxu0 0
      %1161 = vmatpush1.bf16.msra.mxu0 0
      %1162 = vmatprep.subr.bf16.mxu0 0
      %1163 = vmatpush1.bf16.msra.mxu0 0
      %1164 = vmatprep.subr.bf16.mxu0 0
      %1165 = vmatpush1.bf16.msra.mxu0 0
      %1166 = vmatprep.mubr.bf16.mxu0 0
      %1167 = vmatmul.mubr.bf16.gmra.mrb[0].mxu0 %v1132
      %v1168 = vpop.f32.mrb[0].mxu0
      %v1169 = vadd.f32 0.0, %v1168
      %v1170 = vpop.f32.mrb[0].mxu0
      %v1171 = vadd.f32 0.0, %v1170
      %v1172 = vpop.f32.mrb[0].mxu0
      %v1173 = vadd.f32 0.0, %v1172
      %v1174 = vpop.f32.mrb[0].mxu0
      %v1175 = vadd.f32 0.0, %v1174
      %1176 = vdwg.mxu0
      %v1177 = vadd.f32 %v1100, %v1169
      %v1178 = vadd.f32 %v1101, %v1171
      %v1179 = vadd.f32 %v1102, %v1173
      %v1180 = vadd.f32 %v1103, %v1175
      %1181 = vrot.lane.b32.xlu0 %v705, 113
      %v1182 = vpop.permute.xlu0 %1181
      %1183 = vrot.lane.b32.xlu0 %v707, 113
      %v1184 = vpop.permute.xlu0 %1183
      %1185 = vrot.lane.b32.xlu0 %v706, 113
      %v1186 = vpop.permute.xlu0 %1185
      %1187 = vrot.lane.b32.xlu0 %v708, 113
      %v1188 = vpop.permute.xlu0 %1187
      %vm1189 = vcmp.lt.s32.totalorder %v718, 113
      %v1190 = vsel %vm1189, %v1182, %v1186
      %v1191 = vsel %vm1189, %v1184, %v1188
      %v1192 = vsel %vm1189, %v1186, %v1182
      %v1193 = vsel %vm1189, %v1188, %v1184
      %v1194 = vmul.f32 %v1190, %v738
      %v1195 = vmul.f32 %v1192, %v742
      %v1196 = vmul.f32 %v1191, %v738
      %v1197 = vmul.f32 %v1193, %v742
      %s1198 = scalar_lea.vmem %s3, 48
      %v1199 = vld [vmem:[%s1198] sm:$0xf]
      %v1200 = vld [vmem:[%s1198 + $0x4] sm:$0xf]
      %v1201 = vpack.c.bf16 %v1196, %v1194
      %v1202 = vpack.c.bf16 %v1197, %v1195
      %v1205 = vunpack.c.l.b16 %v1199
      %v1206 = vunpack.c.l.b16 %v1200
      %v1207 = vpack.c.b16 %v1206, %v1205
      %v1209 = vsel %vm774, %v1207, 0
      %1211 = vmatprep.subr.bf16.mxu0 %v1202
      %1212 = vmatpush1.bf16.msra.mxu0 %v1201
      %1213 = vmatprep.subr.bf16.mxu0 0
      %1214 = vmatpush1.bf16.msra.mxu0 0
      %1215 = vmatprep.subr.bf16.mxu0 0
      %1216 = vmatpush1.bf16.msra.mxu0 0
      %1217 = vmatprep.subr.bf16.mxu0 0
      %1218 = vmatpush1.bf16.msra.mxu0 0
      %1219 = vmatprep.subr.bf16.mxu0 0
      %1220 = vmatpush1.bf16.msra.mxu0 0
      %1221 = vmatprep.subr.bf16.mxu0 0
      %1222 = vmatpush1.bf16.msra.mxu0 0
      %1223 = vmatprep.subr.bf16.mxu0 0
      %1224 = vmatpush1.bf16.msra.mxu0 0
      %1225 = vmatprep.subr.bf16.mxu0 0
      %1226 = vmatpush1.bf16.msra.mxu0 0
      %1227 = vmatprep.subr.bf16.mxu0 0
      %1228 = vmatpush1.bf16.msra.mxu0 0
      %1229 = vmatprep.subr.bf16.mxu0 0
      %1230 = vmatpush1.bf16.msra.mxu0 0
      %1231 = vmatprep.subr.bf16.mxu0 0
      %1232 = vmatpush1.bf16.msra.mxu0 0
      %1233 = vmatprep.subr.bf16.mxu0 0
      %1234 = vmatpush1.bf16.msra.mxu0 0
      %1235 = vmatprep.subr.bf16.mxu0 0
      %1236 = vmatpush1.bf16.msra.mxu0 0
      %1237 = vmatprep.subr.bf16.mxu0 0
      %1238 = vmatpush1.bf16.msra.mxu0 0
      %1239 = vmatprep.subr.bf16.mxu0 0
      %1240 = vmatpush1.bf16.msra.mxu0 0
      %1241 = vmatprep.subr.bf16.mxu0 0
      %1242 = vmatpush1.bf16.msra.mxu0 0
      %1243 = vmatprep.mubr.bf16.mxu0 0
      %1244 = vmatmul.mubr.bf16.gmra.mrb[0].mxu0 %v1209
      %v1245 = vpop.f32.mrb[0].mxu0
      %v1246 = vadd.f32 0.0, %v1245
      %v1247 = vpop.f32.mrb[0].mxu0
      %v1248 = vadd.f32 0.0, %v1247
      %v1249 = vpop.f32.mrb[0].mxu0
      %v1250 = vadd.f32 0.0, %v1249
      %v1251 = vpop.f32.mrb[0].mxu0
      %v1252 = vadd.f32 0.0, %v1251
      %1253 = vdwg.mxu0
      %v1254 = vadd.f32 %v1177, %v1246
      %v1255 = vadd.f32 %v1178, %v1248
      %v1256 = vadd.f32 %v1179, %v1250
      %v1257 = vadd.f32 %v1180, %v1252
      %1258 = vrot.lane.b32.xlu0 %v705, 112
      %v1259 = vpop.permute.xlu0 %1258
      %1260 = vrot.lane.b32.xlu0 %v707, 112
      %v1261 = vpop.permute.xlu0 %1260
      %1262 = vrot.lane.b32.xlu0 %v706, 112
      %v1263 = vpop.permute.xlu0 %1262
      %1264 = vrot.lane.b32.xlu0 %v708, 112
      %v1265 = vpop.permute.xlu0 %1264
      %vm1266 = vcmp.lt.s32.totalorder %v718, 112
      %v1267 = vsel %vm1266, %v1259, %v1263
      %v1268 = vsel %vm1266, %v1261, %v1265
      %v1269 = vsel %vm1266, %v1263, %v1259
      %v1270 = vsel %vm1266, %v1265, %v1261
      %s1271 = scalar_lea.vmem %s3, 56
      %v1272 = vld [vmem:[%s1271] sm:$0xf]
      %v1273 = vld [vmem:[%s1271 + $0x4] sm:$0xf]
      %v1274 = vpack.c.bf16 %v1268, %v1267
      %v1275 = vpack.c.bf16 %v1270, %v1269
      %v1278 = vunpack.c.l.b16 %v1272
      %v1279 = vunpack.c.l.b16 %v1273
      %v1280 = vpack.c.b16 %v1279, %v1278
      %v1282 = vsel %vm774, %v1280, 0
      %1284 = vmatprep.subr.bf16.mxu0 %v1275
      %1285 = vmatpush1.bf16.msra.mxu0 %v1274
      %1286 = vmatprep.subr.bf16.mxu0 0
      %1287 = vmatpush1.bf16.msra.mxu0 0
      %1288 = vmatprep.subr.bf16.mxu0 0
      %1289 = vmatpush1.bf16.msra.mxu0 0
      %1290 = vmatprep.subr.bf16.mxu0 0
      %1291 = vmatpush1.bf16.msra.mxu0 0
      %1292 = vmatprep.subr.bf16.mxu0 0
      %1293 = vmatpush1.bf16.msra.mxu0 0
      %1294 = vmatprep.subr.bf16.mxu0 0
      %1295 = vmatpush1.bf16.msra.mxu0 0
      %1296 = vmatprep.subr.bf16.mxu0 0
      %1297 = vmatpush1.bf16.msra.mxu0 0
      %1298 = vmatprep.subr.bf16.mxu0 0
      %1299 = vmatpush1.bf16.msra.mxu0 0
      %1300 = vmatprep.subr.bf16.mxu0 0
      %1301 = vmatpush1.bf16.msra.mxu0 0
      %1302 = vmatprep.subr.bf16.mxu0 0
      %1303 = vmatpush1.bf16.msra.mxu0 0
      %1304 = vmatprep.subr.bf16.mxu0 0
      %1305 = vmatpush1.bf16.msra.mxu0 0
      %1306 = vmatprep.subr.bf16.mxu0 0
      %1307 = vmatpush1.bf16.msra.mxu0 0
      %1308 = vmatprep.subr.bf16.mxu0 0
      %1309 = vmatpush1.bf16.msra.mxu0 0
      %1310 = vmatprep.subr.bf16.mxu0 0
      %1311 = vmatpush1.bf16.msra.mxu0 0
      %1312 = vmatprep.subr.bf16.mxu0 0
      %1313 = vmatpush1.bf16.msra.mxu0 0
      %1314 = vmatprep.subr.bf16.mxu0 0
      %1315 = vmatpush1.bf16.msra.mxu0 0
      %1316 = vmatprep.mubr.bf16.mxu0 0
      %1317 = vmatmul.mubr.bf16.gmra.mrb[0].mxu0 %v1282
      %v1318 = vpop.f32.mrb[0].mxu0
      %v1319 = vadd.f32 0.0, %v1318
      %v1320 = vpop.f32.mrb[0].mxu0
      %v1321 = vadd.f32 0.0, %v1320
      %v1322 = vpop.f32.mrb[0].mxu0
      %v1323 = vadd.f32 0.0, %v1322
      %v1324 = vpop.f32.mrb[0].mxu0
      %v1325 = vadd.f32 0.0, %v1324
      %1326 = vdwg.mxu0
      %v1327 = vadd.f32 %v1254, %v1319
      %v1328 = vadd.f32 %v1255, %v1321
      %v1329 = vadd.f32 %v1256, %v1323
      %v1330 = vadd.f32 %v1257, %v1325
      %1331 = vrot.lane.b32.xlu0 %v705, 111
      %v1332 = vpop.permute.xlu0 %1331
      %1333 = vrot.lane.b32.xlu0 %v707, 111
      %v1334 = vpop.permute.xlu0 %1333
      %1335 = vrot.lane.b32.xlu0 %v706, 111
      %v1336 = vpop.permute.xlu0 %1335
      %1337 = vrot.lane.b32.xlu0 %v708, 111
      %v1338 = vpop.permute.xlu0 %1337
      %vm1339 = vcmp.lt.s32.totalorder %v718, 111
      %v1340 = vsel %vm1339, %v1332, %v1336
      %v1341 = vsel %vm1339, %v1334, %v1338
      %v1342 = vsel %vm1339, %v1336, %v1332
      %v1343 = vsel %vm1339, %v1338, %v1334
      %v1344 = vmul.f32 %v1340, %v898
      %v1345 = vmul.f32 %v1342, %v902
      %v1346 = vmul.f32 %v1341, %v898
      %v1347 = vmul.f32 %v1343, %v902
      %s1348 = scalar_lea.vmem %s3, 64
      %v1349 = vld [vmem:[%s1348] sm:$0xf]
      %v1350 = vld [vmem:[%s1348 + $0x4] sm:$0xf]
      %v1351 = vpack.c.bf16 %v1346, %v1344
      %v1352 = vpack.c.bf16 %v1347, %v1345
      %v1355 = vunpack.c.l.b16 %v1349
      %v1356 = vunpack.c.l.b16 %v1350
      %v1357 = vpack.c.b16 %v1356, %v1355
      %v1359 = vsel %vm774, %v1357, 0
      %1361 = vmatprep.subr.bf16.mxu0 %v1352
      %1362 = vmatpush1.bf16.msra.mxu0 %v1351
      %1363 = vmatprep.subr.bf16.mxu0 0
      %1364 = vmatpush1.bf16.msra.mxu0 0
      %1365 = vmatprep.subr.bf16.mxu0 0
      %1366 = vmatpush1.bf16.msra.mxu0 0
      %1367 = vmatprep.subr.bf16.mxu0 0
      %1368 = vmatpush1.bf16.msra.mxu0 0
      %1369 = vmatprep.subr.bf16.mxu0 0
      %1370 = vmatpush1.bf16.msra.mxu0 0
      %1371 = vmatprep.subr.bf16.mxu0 0
      %1372 = vmatpush1.bf16.msra.mxu0 0
      %1373 = vmatprep.subr.bf16.mxu0 0
      %1374 = vmatpush1.bf16.msra.mxu0 0
      %1375 = vmatprep.subr.bf16.mxu0 0
      %1376 = vmatpush1.bf16.msra.mxu0 0
      %1377 = vmatprep.subr.bf16.mxu0 0
      %1378 = vmatpush1.bf16.msra.mxu0 0
      %1379 = vmatprep.subr.bf16.mxu0 0
      %1380 = vmatpush1.bf16.msra.mxu0 0
      %1381 = vmatprep.subr.bf16.mxu0 0
      %1382 = vmatpush1.bf16.msra.mxu0 0
      %1383 = vmatprep.subr.bf16.mxu0 0
      %1384 = vmatpush1.bf16.msra.mxu0 0
      %1385 = vmatprep.subr.bf16.mxu0 0
      %1386 = vmatpush1.bf16.msra.mxu0 0
      %1387 = vmatprep.subr.bf16.mxu0 0
      %1388 = vmatpush1.bf16.msra.mxu0 0
      %1389 = vmatprep.subr.bf16.mxu0 0
      %1390 = vmatpush1.bf16.msra.mxu0 0
      %1391 = vmatprep.subr.bf16.mxu0 0
      %1392 = vmatpush1.bf16.msra.mxu0 0
      %1393 = vmatprep.mubr.bf16.mxu0 0
      %1394 = vmatmul.mubr.bf16.gmra.mrb[0].mxu0 %v1359
      %v1395 = vpop.f32.mrb[0].mxu0
      %v1396 = vadd.f32 0.0, %v1395
      %v1397 = vpop.f32.mrb[0].mxu0
      %v1398 = vadd.f32 0.0, %v1397
      %v1399 = vpop.f32.mrb[0].mxu0
      %v1400 = vadd.f32 0.0, %v1399
      %v1401 = vpop.f32.mrb[0].mxu0
      %v1402 = vadd.f32 0.0, %v1401
      %1403 = vdwg.mxu0
      %v1404 = vadd.f32 %v1327, %v1396
      %v1405 = vadd.f32 %v1328, %v1398
      %v1406 = vadd.f32 %v1329, %v1400
      %v1407 = vadd.f32 %v1330, %v1402
      %v1408 = vpack.c.bf16 %v1406, %v1404
      %v1409 = vpack.c.bf16 %v1407, %v1405
      %v1412 = vunpack.c.l.b16 %v1408
      %v1413 = vunpack.c.l.b16 %v1409
      %v1414 = vunpack.c.h.b16 %v1408
      %v1415 = vunpack.c.h.b16 %v1409
      %v1416 = vpack.c.b16 %v1413, %v1412
      %v1417 = vpack.c.b16 %v1415, %v1414
      %1420 = vst [vmem:[%s505] sm:$0xff] %v1416
      %1421 = vst [vmem:[%s505 + $0x8] sm:$0xff] %v1417
      %v1422 = vadd.f32 %v1404, %v1405
      %1423 = vadd.xlane.f32.xlu0 %v1422
      %v1424 = vpop.xlane.xlu0 %1423
      %v1425 = vadd.f32 %v1406, %v1407
      %1426 = vadd.xlane.f32.xlu0 %v1425
      %v1427 = vpop.xlane.xlu0 %1426
      %v1430 = vlaneseq
      %v1431 = vshrl.u32 %v1430, 7
      %v1432 = vsub.s32 %v718, %v1431
      %v1433 = vrot.slane %v1424, %v1432
      %v1434 = vadd.s32 %v718, 4294967288
      %v1435 = vlaneseq
      %v1436 = vshrl.u32 %v1435, 7
      %v1437 = vsub.s32 %v1434, %v1436
      %v1438 = vrot.slane %v1427, %v1437
      %vm1439 = vcmask 130112
      %v1440 = vsel %vm1439, %v1438, %v1433
      %vm1442 = vcmask 122880
      %1443 = vst.msk [vmem:[%s512] sm:$0x1] %vm1442, %v1440
      %v1444 = vmul.f32 %v1404, %v1404
      %v1445 = vmul.f32 %v1405, %v1405
      %v1446 = vmul.f32 %v1406, %v1406
      %v1447 = vmul.f32 %v1407, %v1407
      %v1448 = vadd.f32 %v1444, %v1445
      %1449 = vadd.xlane.f32.xlu0 %v1448
      %v1450 = vpop.xlane.xlu0 %1449
      %v1451 = vadd.f32 %v1446, %v1447
      %1452 = vadd.xlane.f32.xlu0 %v1451
      %v1453 = vpop.xlane.xlu0 %1452
      %v1456 = vlaneseq
      %v1457 = vshrl.u32 %v1456, 7
      %v1458 = vsub.s32 %v718, %v1457
      %v1459 = vrot.slane %v1450, %v1458
      %v1460 = vlaneseq
      %v1461 = vshrl.u32 %v1460, 7
      %v1462 = vsub.s32 %v1434, %v1461
      %v1463 = vrot.slane %v1453, %v1462
      %v1464 = vsel %vm1439, %v1463, %v1459
      %1466 = vst.msk [vmem:[%s518] sm:$0x1] %vm1442, %v1464
      %s1467 = smul.u32 2, %s26
      %p1468 = scmp.lt.s32.totalorder %s25, 1
      %s1469 = scalar_select %p1468, %s25, 1
      %p1470 = scmp.lt.s32.totalorder %s1467, 1
      %s1471 = scalar_select %p1470, %s1467, 1
      %s1472 = smul.addr %s1469, 4
      %s1473 = sadd.s32 %s1471, %s1472
      %s1474 = smul.addr %s1473, 4
      %s1475 = scalar_lea.vmem %s7, %s1474
      %p1476 = scmp.lt.s32.totalorder %s25, 1
      %s1477 = scalar_select %p1476, %s25, 1
      %p1478 = scmp.lt.s32.totalorder %s26, 0
      %s1479 = scalar_select %p1478, %s26, 0
      %s1480 = sadd.s32 %s1479, %s1477
      %s1481 = scalar_lea.vmem %s8, %s1480
      %p1482 = scmp.lt.s32.totalorder %s25, 1
      %s1483 = scalar_select %p1482, %s25, 1
      %p1484 = scmp.lt.s32.totalorder %s26, 0
      %s1485 = scalar_select %p1484, %s26, 0
      %s1486 = sadd.s32 %s1485, %s1483
      %s1487 = scalar_lea.vmem %s9, %s1486
      // Predicated region
      $region49: #{resblock2d_forward.5} parent=47 // pred_check
        %p1488 = pneg %p233
      $region50: #{resblock2d_forward.5} parent=47 // pred_check_branch
        %1490 = sbr.rel (%p1488) target = $region52
      $region51: #{resblock2d_forward.5} parent=47 // pred_region
        %s1491 = smul.u32 2, %s26
      $region52: #{resblock2d_forward.5} parent=47 // pred_fallthru
        _
      // Predicated region
      $region53: #{resblock2d_forward.5} parent=47 // pred_check
        %p1492 = pneg %p261
      $region54: #{resblock2d_forward.5} parent=47 // pred_check_branch
        %1494 = sbr.rel (%p1492) target = $region56
      $region55: #{resblock2d_forward.5} parent=47 // pred_region
        _
      $region56: #{resblock2d_forward.5} parent=47 // pred_fallthru
        _
      // Predicated region
      $region57: #{resblock2d_forward.5} parent=47 // pred_check
        %p1495 = pneg %p289
      $region58: #{resblock2d_forward.5} parent=47 // pred_check_branch
        %1497 = sbr.rel (%p1495) target = $region60
      $region59: #{resblock2d_forward.5} parent=47 // pred_region
        _
      $region60: #{resblock2d_forward.5} parent=47 // pred_fallthru
        _
    $region48: #{resblock2d_forward.5} parent=5 // pred_fallthru
      _
    %p1498 = scmp.le.s32.totalorder 2, %s16
    // Predicated region
    $region61: #{resblock2d_forward.5} parent=5 // pred_check
      %p1499 = pneg %p1498
    $region62: #{resblock2d_forward.5} parent=5 // pred_check_branch
      %1501 = sbr.rel (%p1499) target = $region64
    $region63: #{resblock2d_forward.5} parent=5 // pred_region
      %s1502 = ssub.s32 %s16, 2
      // Predicated region
      $region65: #{resblock2d_forward.5} parent=63 // pred_check
        %p1503 = pneg %p239
      $region66: #{resblock2d_forward.5} parent=63 // pred_check_branch
        %1505 = sbr.rel (%p1503) target = $region68
      $region67: #{resblock2d_forward.5} parent=63 // pred_region
        %s1506 = smul.u32 2, %s28
        %p1507 = scmp.lt.s32.totalorder %s27, 1
        %s1508 = scalar_select %p1507, %s27, 1
        %p1509 = scmp.lt.s32.totalorder %s1506, 1
        %s1510 = scalar_select %p1509, %s1506, 1
        %s1511 = smul.addr %s1508, 4
        %s1512 = sadd.s32 %s1510, %s1511
        %s1513 = smul.addr %s1512, 4
        %s1514 = scalar_lea.vmem %s7, %s1513
      $region68: #{resblock2d_forward.5} parent=63 // pred_fallthru
        _
      // Predicated region
      $region69: #{resblock2d_forward.5} parent=63 // pred_check
        %p1515 = pneg %p267
      $region70: #{resblock2d_forward.5} parent=63 // pred_check_branch
        %1517 = sbr.rel (%p1515) target = $region72
      $region71: #{resblock2d_forward.5} parent=63 // pred_region
        %p1518 = scmp.lt.s32.totalorder %s27, 1
        %s1519 = scalar_select %p1518, %s27, 1
        %p1520 = scmp.lt.s32.totalorder %s28, 0
        %s1521 = scalar_select %p1520, %s28, 0
        %s1522 = sadd.s32 %s1521, %s1519
        %s1523 = scalar_lea.vmem %s8, %s1522
      $region72: #{resblock2d_forward.5} parent=63 // pred_fallthru
        _
      // Predicated region
      $region73: #{resblock2d_forward.5} parent=63 // pred_check
        %p1524 = pneg %p295
      $region74: #{resblock2d_forward.5} parent=63 // pred_check_branch
        %1526 = sbr.rel (%p1524) target = $region76
      $region75: #{resblock2d_forward.5} parent=63 // pred_region
        %p1527 = scmp.lt.s32.totalorder %s27, 1
        %s1528 = scalar_select %p1527, %s27, 1
        %p1529 = scmp.lt.s32.totalorder %s28, 0
        %s1530 = scalar_select %p1529, %s28, 0
        %s1531 = sadd.s32 %s1530, %s1528
        %s1532 = scalar_lea.vmem %s9, %s1531
      $region76: #{resblock2d_forward.5} parent=63 // pred_fallthru
        _
    $region64: #{resblock2d_forward.5} parent=5 // pred_fallthru
      _
  $region6: #{resblock2d_forward.5} parent=0 // loop_footer
    %s20 = sadd.s32 1, %s16
  $region7: #{resblock2d_forward.5} parent=0 // loop_footer_branch
    %15 = sbr.rel target = $region3
  $region8: #{resblock2d_forward.5} parent=0 // loop_exit
    _

</llo_original>
